<compile_context>
chip_gen: v7x
topology: tpu7x:2x2x1
jax: 0.10.0
libtpu: 0.0.40
codegen_flags: <defaults>
</compile_context>

<pallas_src>
import jax
import jax.numpy as jnp
from jax import lax
from jax.experimental import pallas as pl
from jax.experimental.pallas import tpu as pltpu

LANE = 128
SUBLANE = 8


def _round_up(x, m):
    return ((x + m - 1) // m) * m


def _tpu_budgets():
    """Per-generation scoped-VMEM limit and row-tile target."""
    cap = None
    try:
        info = pltpu.get_tpu_info()
        cap = getattr(info, "vmem_capacity_bytes", None)
    except Exception:
        cap = None
    if not cap:
        cap = 64 * 1024 * 1024            # conservative (v7x per-TC VMEM)
    vmem_limit = min(int(cap * 3 // 4), 100 * 1024 * 1024)
    row_tile_tgt = 1024 if cap >= 100 * 1024 * 1024 else 512
    return int(vmem_limit), int(row_tile_tgt)


_VMEM_LIMIT, _ROW_TILE_TGT = _tpu_budgets()


def _row_tiling(n, tgt):
    """Return (row_tile, padded_rows); pads rows up instead of tiny tiles."""
    n8 = _round_up(n, SUBLANE)
    if n8 <= tgt:
        return n8, n8
    return tgt, _round_up(n8, tgt)


# ---------------------------------------------------------------------------
# Kernel 1: fused L1 + LSTM input projection  gates_x = [prob|inter] @ W_f + b
# ---------------------------------------------------------------------------
def _gates_x_kernel(pi_ref, w_ref, b_ref, o_ref):
    # pi: [tn, 2Ep] bf16   w: [2Ep, 4Hp] bf16   b: [1, 4Hp] f32   o: [tn, 4Hp] bf16
    acc = jnp.dot(pi_ref[...], w_ref[...], preferred_element_type=jnp.float32)
    o_ref[...] = (acc + b_ref[...]).astype(o_ref.dtype)


def gates_x_pallas(pi_flat, w_f, b_f, tn):
    n, e2 = pi_flat.shape
    g4 = w_f.shape[1]
    flops = 2 * n * e2 * g4
    bytes_acc = n * e2 * 2 + e2 * g4 * 2 + g4 * 4 + n * g4 * 2
    return pl.pallas_call(
        _gates_x_kernel,
        out_shape=jax.ShapeDtypeStruct((n, g4), jnp.bfloat16),
        grid=(n // tn,),
        in_specs=[
            pl.BlockSpec((tn, e2), lambda i: (i, 0)),
            pl.BlockSpec((e2, g4), lambda i: (0, 0)),
            pl.BlockSpec((1, g4), lambda i: (0, 0)),
        ],
        out_specs=pl.BlockSpec((tn, g4), lambda i: (i, 0)),
        compiler_params=pltpu.CompilerParams(
            dimension_semantics=("parallel",),
            vmem_limit_bytes=_VMEM_LIMIT),
        cost_estimate=pl.CostEstimate(flops=flops, transcendentals=0,
                                      bytes_accessed=bytes_acc),
    )(pi_flat, w_f, b_f.reshape(1, g4))


# ---------------------------------------------------------------------------
# Kernel 2: LSTM recurrence (gridded over batch blocks x time blocks)
# ---------------------------------------------------------------------------
def _lstm_kernel(gx_ref, whh_ref, o_ref, h_sc, c_sc):
    # gx: [TT, TB, 4Hp] bf16   whh: [Hp, 4Hp] bf16   o: [TT, TB, Hp] bf16
    tt = gx_ref.shape[0]
    hp = h_sc.shape[-1]

    @pl.when(pl.program_id(1) == 0)          # first time block of this batch block
    def _():
        h_sc[...] = jnp.zeros_like(h_sc)
        c_sc[...] = jnp.zeros_like(c_sc)

    def step(t, carry):
        h = h_sc[...]
        gates = gx_ref[t].astype(jnp.float32) + jnp.dot(
            h.astype(whh_ref.dtype), whh_ref[...],
            preferred_element_type=jnp.float32)
        # PyTorch gate order (i, f, g, o); each slice is lane-aligned (Hp=128k).
        i_g = jax.nn.sigmoid(gates[:, 0:hp])
        f_g = jax.nn.sigmoid(gates[:, hp:2 * hp])
        g_g = jnp.tanh(gates[:, 2 * hp:3 * hp])
        o_g = jax.nn.sigmoid(gates[:, 3 * hp:4 * hp])
        c_new = f_g * c_sc[...] + i_g * g_g
        h_new = o_g * jnp.tanh(c_new)
        c_sc[...] = c_new
        h_sc[...] = h_new
        o_ref[t] = h_new.astype(o_ref.dtype)
        return carry

    # TT is capped (<= 16) so a full unroll stays cheap and lets the LLO
    # scheduler interleave MXU / EUP / VPU work across adjacent steps.
    lax.fori_loop(0, tt, step, 0, unroll=True)


def lstm_pallas(gates_tm, w_hh, tb, tt):
    tp, bp, g4 = gates_tm.shape
    hp = g4 // 4
    flops = tp * 2 * bp * hp * g4
    bytes_acc = tp * bp * g4 * 2 + hp * g4 * 2 + tp * bp * hp * 2
    return pl.pallas_call(
        _lstm_kernel,
        out_shape=jax.ShapeDtypeStruct((tp, bp, hp), jnp.bfloat16),
        grid=(bp // tb, tp // tt),
        in_specs=[
            pl.BlockSpec((tt, tb, g4), lambda b, t: (t, b, 0)),
            pl.BlockSpec((hp, g4), lambda b, t: (0, 0)),
        ],
        out_specs=pl.BlockSpec((tt, tb, hp), lambda b, t: (t, b, 0)),
        scratch_shapes=[
            pltpu.VMEM((tb, hp), jnp.float32),   # h state (persists over time axis)
            pltpu.VMEM((tb, hp), jnp.float32),   # c state
        ],
        compiler_params=pltpu.CompilerParams(
            dimension_semantics=("parallel", "arbitrary"),
            vmem_limit_bytes=_VMEM_LIMIT),
        cost_estimate=pl.CostEstimate(flops=flops,
                                      transcendentals=tp * bp * hp * 5,
                                      bytes_accessed=bytes_acc),
    )(gates_tm, w_hh)


# ---------------------------------------------------------------------------
# Kernel 3: fused out head  pred = ((h@W1h + p@W1p + b1) . w2) + b2
# ---------------------------------------------------------------------------
def _out_head_kernel(h_ref, p_ref, w1h_ref, w1p_ref, b1_ref, w2_ref, b2_ref,
                     o_ref):
    z = jnp.dot(h_ref[...], w1h_ref[...], preferred_element_type=jnp.float32)
    z = z + jnp.dot(p_ref[...], w1p_ref[...], preferred_element_type=jnp.float32)
    z = z + b1_ref[...]
    # Linear(E -> 1) as VPU multiply + lane reduction (no 1-column MXU pass);
    # result emitted as a lane-dense (1, tn) row.
    pred = jnp.sum(z * w2_ref[...], axis=-1) + b2_ref[0]
    o_ref[...] = pred[None, :]


def out_head_pallas(h_flat, pi_flat, w1h, w1p, b1, w2_row, b2, tn):
    n, hp = h_flat.shape
    ep = w1h.shape[1]
    flops = 2 * n * hp * ep + 2 * n * ep * ep + 2 * n * ep
    bytes_acc = n * hp * 2 + n * ep * 2 + hp * ep * 2 + ep * ep * 2 + n * 4
    return pl.pallas_call(
        _out_head_kernel,
        out_shape=jax.ShapeDtypeStruct((1, n), jnp.float32),
        grid=(n // tn,),
        in_specs=[
            pl.BlockSpec((tn, hp), lambda i: (i, 0)),
            pl.BlockSpec((tn, ep), lambda i: (i, 0)),   # prob half of [prob|inter]
            pl.BlockSpec((hp, ep), lambda i: (0, 0)),
            pl.BlockSpec((ep, ep), lambda i: (0, 0)),
            pl.BlockSpec((1, ep), lambda i: (0, 0)),
            pl.BlockSpec((1, ep), lambda i: (0, 0)),
            pl.BlockSpec(memory_space=pltpu.MemorySpace.SMEM),   # b2 scalar
        ],
        out_specs=pl.BlockSpec((1, tn), lambda i: (0, i)),
        compiler_params=pltpu.CompilerParams(
            dimension_semantics=("parallel",),
            vmem_limit_bytes=_VMEM_LIMIT),
        cost_estimate=pl.CostEstimate(flops=flops, transcendentals=0,
                                      bytes_accessed=bytes_acc),
    )(h_flat, pi_flat, w1h, w1p, b1.reshape(1, ep), w2_row, b2)


# ---------------------------------------------------------------------------
# Model parameters (deterministic, synthetic) -- logical (PyTorch-shaped)
# ---------------------------------------------------------------------------
def init_params(key, problem_num, skill_num, embed_size, hidden_size):
    ks = jax.random.split(key, 10)
    scale = 0.1
    p = {}
    p["problem_emb"] = scale * jax.random.normal(
        ks[0], (problem_num + 1, embed_size), jnp.float32)
    inter = scale * jax.random.normal(
        ks[1], (skill_num * 2 + 1, embed_size), jnp.float32)
    p["inter_emb"] = inter.at[skill_num].set(0.0)          # padding_idx row = 0
    p["L1_w"] = scale * jax.random.normal(ks[2], (2 * embed_size, embed_size), jnp.float32)
    p["L1_b"] = scale * jax.random.normal(ks[3], (embed_size,), jnp.float32)
    # LSTM(E -> H) stored transposed: [E, 4H] / [H, 4H]; gate order i,f,g,o
    p["lstm_w_ih"] = scale * jax.random.normal(ks[4], (embed_size, 4 * hidden_size), jnp.float32)
    p["lstm_w_hh"] = scale * jax.random.normal(ks[5], (hidden_size, 4 * hidden_size), jnp.float32)
    p["lstm_b"] = scale * jax.random.normal(ks[6], (4 * hidden_size,), jnp.float32)  # b_ih + b_hh
    p["out1_w"] = scale * jax.random.normal(ks[7], (hidden_size + embed_size, embed_size), jnp.float32)
    p["out1_b"] = scale * jax.random.normal(ks[8], (embed_size,), jnp.float32)
    p["out2_w"] = scale * jax.random.normal(ks[9], (embed_size, 1), jnp.float32)
    p["out2_b"] = jnp.zeros((1,), jnp.float32)
    return p


# ---------------------------------------------------------------------------
# Weight fusion / padding to kernel-friendly (lane/sublane aligned) layout
# ---------------------------------------------------------------------------
def prepare_kernel_params(p):
    E = p["L1_b"].shape[0]
    H = p["lstm_w_hh"].shape[0]
    Hp = _round_up(H, LANE)
    Ep = _round_up(E, LANE)

    def pad_gate_cols(w):            # [..., 4H] -> [..., 4Hp], per-gate zero pad
        lead = w.shape[:-1]
        w4 = w.reshape(*lead, 4, H)
        w4 = jnp.pad(w4, [(0, 0)] * len(lead) + [(0, 0), (0, Hp - H)])
        return w4.reshape(*lead, 4 * Hp)

    w_ih_p = pad_gate_cols(p["lstm_w_ih"])                       # [E, 4Hp]
    w_hh_p = jnp.pad(pad_gate_cols(p["lstm_w_hh"]),
                     ((0, Hp - H), (0, 0)))                      # [Hp, 4Hp]
    b_p = pad_gate_cols(p["lstm_b"])                             # [4Hp]

    # Fold L1 (no nonlinearity) into the LSTM input projection and K-stack
    # the problem / interaction halves into one [2Ep, 4Hp] weight.
    L1_wp, L1_wi = p["L1_w"][:E], p["L1_w"][E:]
    Wp_f = jnp.pad(L1_wp @ w_ih_p, ((0, Ep - E), (0, 0)))        # [Ep, 4Hp]
    Wi_f = jnp.pad(L1_wi @ w_ih_p, ((0, Ep - E), (0, 0)))        # [Ep, 4Hp]
    W_f = jnp.concatenate([Wp_f, Wi_f], axis=0)                  # [2Ep, 4Hp]
    b_f = p["L1_b"] @ w_ih_p + b_p                               # [4Hp]

    # Out head: split out1_w so concat([output, problem_emb]) is never built.
    W1_h = jnp.pad(p["out1_w"][:H], ((0, Hp - H), (0, Ep - E)))  # [Hp, Ep]
    W1_p = jnp.pad(p["out1_w"][H:], ((0, Ep - E), (0, Ep - E)))  # [Ep, Ep]
    b1 = jnp.pad(p["out1_b"], (0, Ep - E))                       # [Ep]
    w2_row = jnp.pad(p["out2_w"][:, 0], (0, Ep - E)).reshape(1, Ep)

    return {
        "prob_tab": jnp.pad(p["problem_emb"], ((0, 0), (0, Ep - E))).astype(jnp.bfloat16),
        "inter_tab": jnp.pad(p["inter_emb"], ((0, 0), (0, Ep - E))).astype(jnp.bfloat16),
        "W_f": W_f.astype(jnp.bfloat16),
        "b_f": b_f.astype(jnp.float32),
        "w_hh": w_hh_p.astype(jnp.bfloat16),
        "W1_h": W1_h.astype(jnp.bfloat16),
        "W1_p": W1_p.astype(jnp.bfloat16),
        "b1": b1.astype(jnp.float32),
        "w2_row": w2_row.astype(jnp.float32),
        "b2": p["out2_b"].astype(jnp.float32),
    }


# ---------------------------------------------------------------------------
# Forward pass (mirrors dk.forward)
# ---------------------------------------------------------------------------
def _dense_forward_impl(kp, problem_seqs, skill_seqs, correct_seqs, skill_num):
    B, T = problem_seqs.shape
    Ep = kp["prob_tab"].shape[1]
    G4 = kp["W_f"].shape[1]
    Hp = G4 // 4

    # --- static tiling decisions (shapes are static under jit) ---
    TB = min(128, _round_up(B, SUBLANE))
    Bp = _round_up(B, TB)
    per_step = (TB * 4 * Hp * 2 + TB * Hp * 2) * 2        # gx + h blocks, 2 buffers
    fixed = Hp * 4 * Hp * 2 * 2 + 2 * TB * Hp * 4          # whh + h/c scratch
    TT = int(max(1, min(T, max(1, (_VMEM_LIMIT // 2 - fixed) // per_step), 16)))
    Tp = _round_up(T, TT)
    n = Tp * Bp
    tn, n_pad = _row_tiling(n, _ROW_TILE_TGT)

    # --- embeddings, time-major, K-stacked [prob | inter] ---
    mask_labels = correct_seqs * (correct_seqs > -1).astype(correct_seqs.dtype)
    inter_idx = skill_seqs + skill_num * mask_labels             # matches PyTorch
    prob_tm = kp["prob_tab"][problem_seqs.T]                     # [T, B, Ep] bf16
    inter_tm = kp["inter_tab"][inter_idx.T]                      # [T, B, Ep] bf16
    pi_tm = jnp.concatenate([prob_tm, inter_tm], axis=-1)        # [T, B, 2Ep]
    pi_tm = jnp.pad(pi_tm, ((0, Tp - T), (0, Bp - B), (0, 0)))   # pad time/batch
    pi_flat = pi_tm.reshape(n, 2 * Ep)
    if n_pad > n:
        pi_flat = jnp.pad(pi_flat, ((0, n_pad - n), (0, 0)))
    # TODO(synk): gathers could be fused into gates_x via PrefetchScalarGridSpec
    # + pl.Element row-gather to skip this HBM intermediate at large B*T.

    # L1 + LSTM input projection as ONE K=2Ep matmul, stored bf16.
    gates = gates_x_pallas(pi_flat, kp["W_f"], kp["b_f"], tn)    # [n_pad, 4Hp] bf16
    gates_tm = gates[:n].reshape(Tp, Bp, G4)

    # Recurrence: gridded over (batch blocks, time blocks).
    h_tm = lstm_pallas(gates_tm, kp["w_hh"], TB, TT)             # [Tp, Bp, Hp] bf16

    h_flat = h_tm.reshape(n, Hp)
    if n_pad > n:
        h_flat = jnp.pad(h_flat, ((0, n_pad - n), (0, 0)))

    # Fused out head (both linears, concat replaced by split weights),
    # lane-dense output.
    preds = out_head_pallas(h_flat, pi_flat,
                            kp["W1_h"], kp["W1_p"], kp["b1"],
                            kp["w2_row"], kp["b2"], tn)          # [1, n_pad] f32

    pred_bt = preds.reshape(n_pad)[:n].reshape(Tp, Bp)[:T, :B].T  # [B, T] logits
    return pred_bt


_dense_forward = jax.jit(_dense_forward_impl)


def dk_forward(kernel_params, log_dict, skill_num):
    problem_seqs = log_dict["problem_seqs_tensor"]
    skill_seqs = log_dict["skill_seqs_tensor"]
    correct_seqs = log_dict["correct_seqs_tensor"]

    pred_logits = _dense_forward(kernel_params, problem_seqs, skill_seqs,
                                 correct_seqs, jnp.int32(skill_num))

    # TODO(synk): nn.Dropout(p=0.25) treated as identity (inference mode).
    target = correct_seqs[:, 1:]
    labels = target.reshape(-1)
    preds = pred_logits[:, :-1].reshape(-1)

    # Boolean masking produces dynamic shapes -> done eagerly outside jit.
    mask = labels > -1
    masked_labels = labels[mask].astype(jnp.float32)
    masked_preds = jax.nn.sigmoid(preds[mask])
    return {"predictions": masked_preds, "labels": masked_labels}


# ---------------------------------------------------------------------------
if __name__ == "__main__":
    problem_num = 20
    skill_num = 10
    embed_size = 32
    hidden_size = 32
    B, T = 2, 8

    key = jax.random.PRNGKey(0)
    pkey, k1, k2, k3 = jax.random.split(key, 4)

    raw_params = init_params(pkey, problem_num, skill_num, embed_size, hidden_size)
    kernel_params = prepare_kernel_params(raw_params)

    problem_seqs = jax.random.randint(k1, (B, T), 0, problem_num + 1, jnp.int32)
    skill_seqs = jax.random.randint(k2, (B, T), 0, skill_num, jnp.int32)
    correct_seqs = jax.random.randint(k3, (B, T), 0, 3, jnp.int32) - 1  # {-1,0,1}

    log_dict = {
        "seqs_length": jnp.full((B,), T, jnp.int32),
        "problem_seqs_tensor": problem_seqs,
        "skill_seqs_tensor": skill_seqs,
        "correct_seqs_tensor": correct_seqs,
    }

    out = dk_forward(kernel_params, log_dict, skill_num)
    jax.block_until_ready(out["predictions"])
    jax.block_until_ready(out["labels"])

    assert out["predictions"].shape == out["labels"].shape
    assert out["predictions"].dtype == jnp.float32
    print("KERNEL_OK")
</pallas_src>

<mosaic_0001>
module attributes {stable_mosaic.version = 11 : i64} {
  func.func @_gates_x_kernel(%arg0: i32, %arg1: memref<64x256xbf16, #tpu.memory_space<vmem>>, %arg2: memref<256x512xbf16, #tpu.memory_space<vmem>>, %arg3: memref<1x512xf32, #tpu.memory_space<vmem>>, %arg4: memref<64x512xbf16, #tpu.memory_space<vmem>>) attributes {dimension_semantics = [#tpu.dimension_semantics<parallel>], iteration_bounds = array<i64: 1>, scalar_prefetch = 0 : i64, scratch_operands = 0 : i64, tpu.core_type = #tpu.core_type<tc>, window_params = [{transform_indices = @transform_0, window_bounds = array<i64: 64, 256>}, {pipeline_mode = #tpu.pipeline_mode<synchronous>, transform_indices = @transform_1, window_bounds = array<i64: 256, 512>}, {pipeline_mode = #tpu.pipeline_mode<synchronous>, transform_indices = @transform_2, window_bounds = array<i64: 1, 512>}, {transform_indices = @transform_3, window_bounds = array<i64: 64, 512>}]} {
    %c0 = arith.constant 0 : index
    %c0_0 = arith.constant 0 : index
    %0 = vector.load %arg1[%c0, %c0_0] : memref<64x256xbf16, #tpu.memory_space<vmem>>, vector<64x256xbf16>
    %c0_1 = arith.constant 0 : index
    %c0_2 = arith.constant 0 : index
    %1 = vector.load %arg2[%c0_1, %c0_2] : memref<256x512xbf16, #tpu.memory_space<vmem>>, vector<256x512xbf16>
    %cst = arith.constant dense<0.000000e+00> : vector<64x512xf32>
    %2 = tpu.matmul %0, %1, %cst {dimension_numbers = #tpu.dot_dimension_numbers<[1], [0], [0], [1], [0, 0, 1, 1], [], []>} : vector<64x256xbf16>, vector<256x512xbf16>, vector<64x512xf32> -> vector<64x512xf32>
    %c0_3 = arith.constant 0 : index
    %c0_4 = arith.constant 0 : index
    %3 = vector.load %arg3[%c0_3, %c0_4] : memref<1x512xf32, #tpu.memory_space<vmem>>, vector<1x512xf32>
    %4 = vector.broadcast %3 : vector<1x512xf32> to vector<64x512xf32>
    %5 = arith.addf %2, %4 : vector<64x512xf32>
    %6 = arith.truncf %5 : vector<64x512xf32> to vector<64x512xbf16>
    %c0_5 = arith.constant 0 : index
    %c0_6 = arith.constant 0 : index
    %7 = vector.load %arg4[%c0_5, %c0_6] : memref<64x512xbf16, #tpu.memory_space<vmem>>, vector<64x512xbf16>
    tpu.vector_store %arg4[%c0_5, %c0_6], %6 {strides = array<i32>} : memref<64x512xbf16, #tpu.memory_space<vmem>>, vector<64x512xbf16>,
    return
  }
  func.func @transform_0(%arg0: i32) -> (i32, i32) {
    %c0_i32 = arith.constant 0 : i32
    %c0_i32_0 = arith.constant 0 : i32
    return %arg0, %c0_i32 : i32, i32
  }
  func.func @transform_1(%arg0: i32) -> (i32, i32) {
    %c0_i32 = arith.constant 0 : i32
    %c0_i32_0 = arith.constant 0 : i32
    %c0_i32_1 = arith.constant 0 : i32
    return %c0_i32, %c0_i32_0 : i32, i32
  }
  func.func @transform_2(%arg0: i32) -> (i32, i32) {
    %c0_i32 = arith.constant 0 : i32
    %c0_i32_0 = arith.constant 0 : i32
    %c0_i32_1 = arith.constant 0 : i32
    return %c0_i32, %c0_i32_0 : i32, i32
  }
  func.func @transform_3(%arg0: i32) -> (i32, i32) {
    %c0_i32 = arith.constant 0 : i32
    %c0_i32_0 = arith.constant 0 : i32
    return %arg0, %c0_i32 : i32, i32
  }
}

module attributes {stable_mosaic.version = 11 : i64} {
  func.func @_out_head_kernel(%arg0: i32, %arg1: memref<64x128xbf16, #tpu.memory_space<vmem>>, %arg2: memref<64x128xbf16, #tpu.memory_space<vmem>>, %arg3: memref<128x128xbf16, #tpu.memory_space<vmem>>, %arg4: memref<128x128xbf16, #tpu.memory_space<vmem>>, %arg5: memref<1x128xf32, #tpu.memory_space<vmem>>, %arg6: memref<1x128xf32, #tpu.memory_space<vmem>>, %arg7: memref<1xf32, #tpu.memory_space<smem>>, %arg8: memref<1x64xf32, #tpu.memory_space<vmem>>) attributes {dimension_semantics = [#tpu.dimension_semantics<parallel>], iteration_bounds = array<i64: 1>, scalar_prefetch = 0 : i64, scratch_operands = 0 : i64, tpu.core_type = #tpu.core_type<tc>, window_params = [{transform_indices = @transform_0, window_bounds = array<i64: 64, 128>}, {transform_indices = @transform_1, window_bounds = array<i64: 64, 128>}, {pipeline_mode = #tpu.pipeline_mode<synchronous>, transform_indices = @transform_2, window_bounds = array<i64: 128, 128>}, {pipeline_mode = #tpu.pipeline_mode<synchronous>, transform_indices = @transform_3, window_bounds = array<i64: 128, 128>}, {pipeline_mode = #tpu.pipeline_mode<synchronous>, transform_indices = @transform_4, window_bounds = array<i64: 1, 128>}, {pipeline_mode = #tpu.pipeline_mode<synchronous>, transform_indices = @transform_5, window_bounds = array<i64: 1, 128>}, {transform_indices = @transform_6, window_bounds = array<i64: 1>}, {transform_indices = @transform_7, window_bounds = array<i64: 1, 64>}]} {
    %c0 = arith.constant 0 : index
    %c0_0 = arith.constant 0 : index
    %0 = vector.load %arg1[%c0, %c0_0] : memref<64x128xbf16, #tpu.memory_space<vmem>>, vector<64x128xbf16>
    %c0_1 = arith.constant 0 : index
    %c0_2 = arith.constant 0 : index
    %1 = vector.load %arg3[%c0_1, %c0_2] : memref<128x128xbf16, #tpu.memory_space<vmem>>, vector<128x128xbf16>
    %cst = arith.constant dense<0.000000e+00> : vector<64x128xf32>
    %2 = tpu.matmul %0, %1, %cst {dimension_numbers = #tpu.dot_dimension_numbers<[1], [0], [0], [1], [0, 0, 1, 1], [], []>} : vector<64x128xbf16>, vector<128x128xbf16>, vector<64x128xf32> -> vector<64x128xf32>
    %c0_3 = arith.constant 0 : index
    %c0_4 = arith.constant 0 : index
    %3 = vector.load %arg2[%c0_3, %c0_4] : memref<64x128xbf16, #tpu.memory_space<vmem>>, vector<64x128xbf16>
    %c0_5 = arith.constant 0 : index
    %c0_6 = arith.constant 0 : index
    %4 = vector.load %arg4[%c0_5, %c0_6] : memref<128x128xbf16, #tpu.memory_space<vmem>>, vector<128x128xbf16>
    %cst_7 = arith.constant dense<0.000000e+00> : vector<64x128xf32>
    %5 = tpu.matmul %3, %4, %cst_7 {dimension_numbers = #tpu.dot_dimension_numbers<[1], [0], [0], [1], [0, 0, 1, 1], [], []>} : vector<64x128xbf16>, vector<128x128xbf16>, vector<64x128xf32> -> vector<64x128xf32>
    %6 = arith.addf %2, %5 : vector<64x128xf32>
    %c0_8 = arith.constant 0 : index
    %c0_9 = arith.constant 0 : index
    %7 = vector.load %arg5[%c0_8, %c0_9] : memref<1x128xf32, #tpu.memory_space<vmem>>, vector<1x128xf32>
    %8 = vector.broadcast %7 : vector<1x128xf32> to vector<64x128xf32>
    %9 = arith.addf %6, %8 : vector<64x128xf32>
    %c0_10 = arith.constant 0 : index
    %c0_11 = arith.constant 0 : index
    %10 = vector.load %arg6[%c0_10, %c0_11] : memref<1x128xf32, #tpu.memory_space<vmem>>, vector<1x128xf32>
    %11 = vector.broadcast %10 : vector<1x128xf32> to vector<64x128xf32>
    %12 = arith.mulf %9, %11 : vector<64x128xf32>
    %cst_12 = arith.constant dense<0.000000e+00> : vector<64xf32>
    %13 = vector.multi_reduction <add>, %12, %cst_12 [1] : vector<64x128xf32> to vector<64xf32>
    %c0_13 = arith.constant 0 : index
    %14 = memref.load %arg7[%c0_13] : memref<1xf32, #tpu.memory_space<smem>>
    %15 = vector.broadcast %14 : f32 to vector<64xf32>
    %16 = arith.addf %13, %15 : vector<64xf32>
    %17 = vector.shape_cast %16 : vector<64xf32> to vector<1x64xf32>
    %c0_14 = arith.constant 0 : index
    %c0_15 = arith.constant 0 : index
    %18 = vector.load %arg8[%c0_14, %c0_15] : memref<1x64xf32, #tpu.memory_space<vmem>>, vector<1x64xf32>
    tpu.vector_store %arg8[%c0_14, %c0_15], %17 {strides = array<i32>} : memref<1x64xf32, #tpu.memory_space<vmem>>, vector<1x64xf32>,
    return
  }
  func.func @transform_0(%arg0: i32) -> (i32, i32) {
    %c0_i32 = arith.constant 0 : i32
    %c0_i32_0 = arith.constant 0 : i32
    return %arg0, %c0_i32 : i32, i32
  }
  func.func @transform_1(%arg0: i32) -> (i32, i32) {
    %c0_i32 = arith.constant 0 : i32
    %c0_i32_0 = arith.constant 0 : i32
    return %arg0, %c0_i32 : i32, i32
  }
  func.func @transform_2(%arg0: i32) -> (i32, i32) {
    %c0_i32 = arith.constant 0 : i32
    %c0_i32_0 = arith.constant 0 : i32
    %c0_i32_1 = arith.constant 0 : i32
    return %c0_i32, %c0_i32_0 : i32, i32
  }
  func.func @transform_3(%arg0: i32) -> (i32, i32) {
    %c0_i32 = arith.constant 0 : i32
    %c0_i32_0 = arith.constant 0 : i32
    %c0_i32_1 = arith.constant 0 : i32
    return %c0_i32, %c0_i32_0 : i32, i32
  }
  func.func @transform_4(%arg0: i32) -> (i32, i32) {
    %c0_i32 = arith.constant 0 : i32
    %c0_i32_0 = arith.constant 0 : i32
    %c0_i32_1 = arith.constant 0 : i32
    return %c0_i32, %c0_i32_0 : i32, i32
  }
  func.func @transform_5(%arg0: i32) -> (i32, i32) {
    %c0_i32 = arith.constant 0 : i32
    %c0_i32_0 = arith.constant 0 : i32
    %c0_i32_1 = arith.constant 0 : i32
    return %c0_i32, %c0_i32_0 : i32, i32
  }
  func.func @transform_6(%arg0: i32) -> i32 {
    %c0_i32 = arith.constant 0 : i32
    %c0_i32_0 = arith.constant 0 : i32
    return %c0_i32 : i32
  }
  func.func @transform_7(%arg0: i32) -> (i32, i32) {
    %c0_i32 = arith.constant 0 : i32
    %c0_i32_0 = arith.constant 0 : i32
    return %c0_i32, %arg0 : i32, i32
  }
}

module attributes {stable_mosaic.version = 11 : i64} {
  func.func @_lstm_kernel(%arg0: i32, %arg1: i32, %arg2: memref<8x8x512xbf16, #tpu.memory_space<vmem>>, %arg3: memref<128x512xbf16, #tpu.memory_space<vmem>>, %arg4: memref<8x8x128xbf16, #tpu.memory_space<vmem>>, %arg5: memref<8x128xf32, #tpu.memory_space<vmem>>, %arg6: memref<8x128xf32, #tpu.memory_space<vmem>>) attributes {dimension_semantics = [#tpu.dimension_semantics<parallel>, #tpu.dimension_semantics<arbitrary>], iteration_bounds = array<i64: 1, 1>, scalar_prefetch = 0 : i64, scratch_operands = 2 : i64, tpu.core_type = #tpu.core_type<tc>, window_params = [{transform_indices = @transform_0, window_bounds = array<i64: 8, 8, 512>}, {pipeline_mode = #tpu.pipeline_mode<synchronous>, transform_indices = @transform_1, window_bounds = array<i64: 128, 512>}, {transform_indices = @transform_2, window_bounds = array<i64: 8, 8, 128>}]} {
    %c0_i32 = arith.constant 0 : i32
    %0 = arith.cmpi eq, %arg1, %c0_i32 : i32
    %1 = arith.extui %0 : i1 to i32
    %c0_i32_0 = arith.constant 0 : i32
    %2 = arith.cmpi ne, %1, %c0_i32_0 : i32
    scf.if %2 {
      %cst_144 = arith.constant 0.000000e+00 : f32
      %339 = vector.broadcast %cst_144 : f32 to vector<8x128xf32>
      %c0_145 = arith.constant 0 : index
      %c0_146 = arith.constant 0 : index
      %340 = vector.load %arg5[%c0_145, %c0_146] : memref<8x128xf32, #tpu.memory_space<vmem>>, vector<8x128xf32>
      tpu.vector_store %arg5[%c0_145, %c0_146], %339 {strides = array<i32>} : memref<8x128xf32, #tpu.memory_space<vmem>>, vector<8x128xf32>,
      %cst_147 = arith.constant 0.000000e+00 : f32
      %341 = vector.broadcast %cst_147 : f32 to vector<8x128xf32>
      %c0_148 = arith.constant 0 : index
      %c0_149 = arith.constant 0 : index
      %342 = vector.load %arg6[%c0_148, %c0_149] : memref<8x128xf32, #tpu.memory_space<vmem>>, vector<8x128xf32>
      tpu.vector_store %arg6[%c0_148, %c0_149], %341 {strides = array<i32>} : memref<8x128xf32, #tpu.memory_space<vmem>>, vector<8x128xf32>,
    } else {
    }
    %c0_i32_1 = arith.constant 0 : i32
    %c0 = arith.constant 0 : index
    %c0_2 = arith.constant 0 : index
    %3 = vector.load %arg5[%c0, %c0_2] : memref<8x128xf32, #tpu.memory_space<vmem>>, vector<8x128xf32>
    %4 = arith.index_cast %c0_i32_1 : i32 to index
    %c0_3 = arith.constant 0 : index
    %c0_4 = arith.constant 0 : index
    %5 = vector.load %arg2[%4, %c0_3, %c0_4] : memref<8x8x512xbf16, #tpu.memory_space<vmem>>, vector<1x8x512xbf16>
    %6 = vector.shape_cast %5 : vector<1x8x512xbf16> to vector<8x512xbf16>
    %7 = arith.extf %6 : vector<8x512xbf16> to vector<8x512xf32>
    %8 = arith.truncf %3 : vector<8x128xf32> to vector<8x128xbf16>
    %c0_5 = arith.constant 0 : index
    %c0_6 = arith.constant 0 : index
    %9 = vector.load %arg3[%c0_5, %c0_6] : memref<128x512xbf16, #tpu.memory_space<vmem>>, vector<128x512xbf16>
    %cst = arith.constant dense<0.000000e+00> : vector<8x512xf32>
    %10 = tpu.matmul %8, %9, %cst {dimension_numbers = #tpu.dot_dimension_numbers<[1], [0], [0], [1], [0, 0, 1, 1], [], []>} : vector<8x128xbf16>, vector<128x512xbf16>, vector<8x512xf32> -> vector<8x512xf32>
    %11 = arith.addf %7, %10 : vector<8x512xf32>
    %12 = vector.extract_strided_slice %11 {offsets = [0, 0], sizes = [8, 128], strides = [1, 1]} : vector<8x512xf32> to vector<8x128xf32>
    %13 = arith.negf %12 : vector<8x128xf32>
    %14 = math.exp %13 : vector<8x128xf32>
    %cst_7 = arith.constant 1.000000e+00 : f32
    %15 = vector.broadcast %cst_7 : f32 to vector<8x128xf32>
    %16 = arith.addf %15, %14 : vector<8x128xf32>
    %17 = arith.divf %15, %16 : vector<8x128xf32>
    %18 = vector.extract_strided_slice %11 {offsets = [0, 128], sizes = [8, 128], strides = [1, 1]} : vector<8x512xf32> to vector<8x128xf32>
    %19 = arith.negf %18 : vector<8x128xf32>
    %20 = math.exp %19 : vector<8x128xf32>
    %cst_8 = arith.constant 1.000000e+00 : f32
    %21 = vector.broadcast %cst_8 : f32 to vector<8x128xf32>
    %22 = arith.addf %21, %20 : vector<8x128xf32>
    %23 = arith.divf %21, %22 : vector<8x128xf32>
    %24 = vector.extract_strided_slice %11 {offsets = [0, 256], sizes = [8, 128], strides = [1, 1]} : vector<8x512xf32> to vector<8x128xf32>
    %25 = math.tanh %24 : vector<8x128xf32>
    %26 = vector.extract_strided_slice %11 {offsets = [0, 384], sizes = [8, 128], strides = [1, 1]} : vector<8x512xf32> to vector<8x128xf32>
    %27 = arith.negf %26 : vector<8x128xf32>
    %28 = math.exp %27 : vector<8x128xf32>
    %cst_9 = arith.constant 1.000000e+00 : f32
    %29 = vector.broadcast %cst_9 : f32 to vector<8x128xf32>
    %30 = arith.addf %29, %28 : vector<8x128xf32>
    %31 = arith.divf %29, %30 : vector<8x128xf32>
    %c0_10 = arith.constant 0 : index
    %c0_11 = arith.constant 0 : index
    %32 = vector.load %arg6[%c0_10, %c0_11] : memref<8x128xf32, #tpu.memory_space<vmem>>, vector<8x128xf32>
    %33 = arith.mulf %23, %32 : vector<8x128xf32>
    %34 = arith.mulf %17, %25 : vector<8x128xf32>
    %35 = arith.addf %33, %34 : vector<8x128xf32>
    %36 = math.tanh %35 : vector<8x128xf32>
    %37 = arith.mulf %31, %36 : vector<8x128xf32>
    %c0_12 = arith.constant 0 : index
    %c0_13 = arith.constant 0 : index
    %38 = vector.load %arg6[%c0_12, %c0_13] : memref<8x128xf32, #tpu.memory_space<vmem>>, vector<8x128xf32>
    tpu.vector_store %arg6[%c0_12, %c0_13], %35 {strides = array<i32>} : memref<8x128xf32, #tpu.memory_space<vmem>>, vector<8x128xf32>,
    %c0_14 = arith.constant 0 : index
    %c0_15 = arith.constant 0 : index
    %39 = vector.load %arg5[%c0_14, %c0_15] : memref<8x128xf32, #tpu.memory_space<vmem>>, vector<8x128xf32>
    tpu.vector_store %arg5[%c0_14, %c0_15], %37 {strides = array<i32>} : memref<8x128xf32, #tpu.memory_space<vmem>>, vector<8x128xf32>,
    %40 = arith.truncf %37 : vector<8x128xf32> to vector<8x128xbf16>
    %41 = arith.index_cast %c0_i32_1 : i32 to index
    %c0_16 = arith.constant 0 : index
    %c0_17 = arith.constant 0 : index
    %42 = vector.load %arg4[%41, %c0_16, %c0_17] : memref<8x8x128xbf16, #tpu.memory_space<vmem>>, vector<1x8x128xbf16>
    %43 = vector.shape_cast %42 : vector<1x8x128xbf16> to vector<8x128xbf16>
    %44 = vector.shape_cast %40 : vector<8x128xbf16> to vector<1x8x128xbf16>
    tpu.vector_store %arg4[%41, %c0_16, %c0_17], %44 {strides = array<i32>} : memref<8x8x128xbf16, #tpu.memory_space<vmem>>, vector<1x8x128xbf16>,
    %c1_i32 = arith.constant 1 : i32
    %c0_18 = arith.constant 0 : index
    %c0_19 = arith.constant 0 : index
    %45 = vector.load %arg5[%c0_18, %c0_19] : memref<8x128xf32, #tpu.memory_space<vmem>>, vector<8x128xf32>
    %46 = arith.index_cast %c1_i32 : i32 to index
    %c0_20 = arith.constant 0 : index
    %c0_21 = arith.constant 0 : index
    %47 = vector.load %arg2[%46, %c0_20, %c0_21] : memref<8x8x512xbf16, #tpu.memory_space<vmem>>, vector<1x8x512xbf16>
    %48 = vector.shape_cast %47 : vector<1x8x512xbf16> to vector<8x512xbf16>
    %49 = arith.extf %48 : vector<8x512xbf16> to vector<8x512xf32>
    %50 = arith.truncf %45 : vector<8x128xf32> to vector<8x128xbf16>
    %c0_22 = arith.constant 0 : index
    %c0_23 = arith.constant 0 : index
    %51 = vector.load %arg3[%c0_22, %c0_23] : memref<128x512xbf16, #tpu.memory_space<vmem>>, vector<128x512xbf16>
    %cst_24 = arith.constant dense<0.000000e+00> : vector<8x512xf32>
    %52 = tpu.matmul %50, %51, %cst_24 {dimension_numbers = #tpu.dot_dimension_numbers<[1], [0], [0], [1], [0, 0, 1, 1], [], []>} : vector<8x128xbf16>, vector<128x512xbf16>, vector<8x512xf32> -> vector<8x512xf32>
    %53 = arith.addf %49, %52 : vector<8x512xf32>
    %54 = vector.extract_strided_slice %53 {offsets = [0, 0], sizes = [8, 128], strides = [1, 1]} : vector<8x512xf32> to vector<8x128xf32>
    %55 = arith.negf %54 : vector<8x128xf32>
    %56 = math.exp %55 : vector<8x128xf32>
    %cst_25 = arith.constant 1.000000e+00 : f32
    %57 = vector.broadcast %cst_25 : f32 to vector<8x128xf32>
    %58 = arith.addf %57, %56 : vector<8x128xf32>
    %59 = arith.divf %57, %58 : vector<8x128xf32>
    %60 = vector.extract_strided_slice %53 {offsets = [0, 128], sizes = [8, 128], strides = [1, 1]} : vector<8x512xf32> to vector<8x128xf32>
    %61 = arith.negf %60 : vector<8x128xf32>
    %62 = math.exp %61 : vector<8x128xf32>
    %cst_26 = arith.constant 1.000000e+00 : f32
    %63 = vector.broadcast %cst_26 : f32 to vector<8x128xf32>
    %64 = arith.addf %63, %62 : vector<8x128xf32>
    %65 = arith.divf %63, %64 : vector<8x128xf32>
    %66 = vector.extract_strided_slice %53 {offsets = [0, 256], sizes = [8, 128], strides = [1, 1]} : vector<8x512xf32> to vector<8x128xf32>
    %67 = math.tanh %66 : vector<8x128xf32>
    %68 = vector.extract_strided_slice %53 {offsets = [0, 384], sizes = [8, 128], strides = [1, 1]} : vector<8x512xf32> to vector<8x128xf32>
    %69 = arith.negf %68 : vector<8x128xf32>
    %70 = math.exp %69 : vector<8x128xf32>
    %cst_27 = arith.constant 1.000000e+00 : f32
    %71 = vector.broadcast %cst_27 : f32 to vector<8x128xf32>
    %72 = arith.addf %71, %70 : vector<8x128xf32>
    %73 = arith.divf %71, %72 : vector<8x128xf32>
    %c0_28 = arith.constant 0 : index
    %c0_29 = arith.constant 0 : index
    %74 = vector.load %arg6[%c0_28, %c0_29] : memref<8x128xf32, #tpu.memory_space<vmem>>, vector<8x128xf32>
    %75 = arith.mulf %65, %74 : vector<8x128xf32>
    %76 = arith.mulf %59, %67 : vector<8x128xf32>
    %77 = arith.addf %75, %76 : vector<8x128xf32>
    %78 = math.tanh %77 : vector<8x128xf32>
    %79 = arith.mulf %73, %78 : vector<8x128xf32>
    %c0_30 = arith.constant 0 : index
    %c0_31 = arith.constant 0 : index
    %80 = vector.load %arg6[%c0_30, %c0_31] : memref<8x128xf32, #tpu.memory_space<vmem>>, vector<8x128xf32>
    tpu.vector_store %arg6[%c0_30, %c0_31], %77 {strides = array<i32>} : memref<8x128xf32, #tpu.memory_space<vmem>>, vector<8x128xf32>,
    %c0_32 = arith.constant 0 : index
    %c0_33 = arith.constant 0 : index
    %81 = vector.load %arg5[%c0_32, %c0_33] : memref<8x128xf32, #tpu.memory_space<vmem>>, vector<8x128xf32>
    tpu.vector_store %arg5[%c0_32, %c0_33], %79 {strides = array<i32>} : memref<8x128xf32, #tpu.memory_space<vmem>>, vector<8x128xf32>,
    %82 = arith.truncf %79 : vector<8x128xf32> to vector<8x128xbf16>
    %83 = arith.index_cast %c1_i32 : i32 to index
    %c0_34 = arith.constant 0 : index
    %c0_35 = arith.constant 0 : index
    %84 = vector.load %arg4[%83, %c0_34, %c0_35] : memref<8x8x128xbf16, #tpu.memory_space<vmem>>, vector<1x8x128xbf16>
    %85 = vector.shape_cast %84 : vector<1x8x128xbf16> to vector<8x128xbf16>
    %86 = vector.shape_cast %82 : vector<8x128xbf16> to vector<1x8x128xbf16>
    tpu.vector_store %arg4[%83, %c0_34, %c0_35], %86 {strides = array<i32>} : memref<8x8x128xbf16, #tpu.memory_space<vmem>>, vector<1x8x128xbf16>,
    %c2_i32 = arith.constant 2 : i32
    %c0_36 = arith.constant 0 : index
    %c0_37 = arith.constant 0 : index
    %87 = vector.load %arg5[%c0_36, %c0_37] : memref<8x128xf32, #tpu.memory_space<vmem>>, vector<8x128xf32>
    %88 = arith.index_cast %c2_i32 : i32 to index
    %c0_38 = arith.constant 0 : index
    %c0_39 = arith.constant 0 : index
    %89 = vector.load %arg2[%88, %c0_38, %c0_39] : memref<8x8x512xbf16, #tpu.memory_space<vmem>>, vector<1x8x512xbf16>
    %90 = vector.shape_cast %89 : vector<1x8x512xbf16> to vector<8x512xbf16>
    %91 = arith.extf %90 : vector<8x512xbf16> to vector<8x512xf32>
    %92 = arith.truncf %87 : vector<8x128xf32> to vector<8x128xbf16>
    %c0_40 = arith.constant 0 : index
    %c0_41 = arith.constant 0 : index
    %93 = vector.load %arg3[%c0_40, %c0_41] : memref<128x512xbf16, #tpu.memory_space<vmem>>, vector<128x512xbf16>
    %cst_42 = arith.constant dense<0.000000e+00> : vector<8x512xf32>
    %94 = tpu.matmul %92, %93, %cst_42 {dimension_numbers = #tpu.dot_dimension_numbers<[1], [0], [0], [1], [0, 0, 1, 1], [], []>} : vector<8x128xbf16>, vector<128x512xbf16>, vector<8x512xf32> -> vector<8x512xf32>
    %95 = arith.addf %91, %94 : vector<8x512xf32>
    %96 = vector.extract_strided_slice %95 {offsets = [0, 0], sizes = [8, 128], strides = [1, 1]} : vector<8x512xf32> to vector<8x128xf32>
    %97 = arith.negf %96 : vector<8x128xf32>
    %98 = math.exp %97 : vector<8x128xf32>
    %cst_43 = arith.constant 1.000000e+00 : f32
    %99 = vector.broadcast %cst_43 : f32 to vector<8x128xf32>
    %100 = arith.addf %99, %98 : vector<8x128xf32>
    %101 = arith.divf %99, %100 : vector<8x128xf32>
    %102 = vector.extract_strided_slice %95 {offsets = [0, 128], sizes = [8, 128], strides = [1, 1]} : vector<8x512xf32> to vector<8x128xf32>
    %103 = arith.negf %102 : vector<8x128xf32>
    %104 = math.exp %103 : vector<8x128xf32>
    %cst_44 = arith.constant 1.000000e+00 : f32
    %105 = vector.broadcast %cst_44 : f32 to vector<8x128xf32>
    %106 = arith.addf %105, %104 : vector<8x128xf32>
    %107 = arith.divf %105, %106 : vector<8x128xf32>
    %108 = vector.extract_strided_slice %95 {offsets = [0, 256], sizes = [8, 128], strides = [1, 1]} : vector<8x512xf32> to vector<8x128xf32>
    %109 = math.tanh %108 : vector<8x128xf32>
    %110 = vector.extract_strided_slice %95 {offsets = [0, 384], sizes = [8, 128], strides = [1, 1]} : vector<8x512xf32> to vector<8x128xf32>
    %111 = arith.negf %110 : vector<8x128xf32>
    %112 = math.exp %111 : vector<8x128xf32>
    %cst_45 = arith.constant 1.000000e+00 : f32
    %113 = vector.broadcast %cst_45 : f32 to vector<8x128xf32>
    %114 = arith.addf %113, %112 : vector<8x128xf32>
    %115 = arith.divf %113, %114 : vector<8x128xf32>
    %c0_46 = arith.constant 0 : index
    %c0_47 = arith.constant 0 : index
    %116 = vector.load %arg6[%c0_46, %c0_47] : memref<8x128xf32, #tpu.memory_space<vmem>>, vector<8x128xf32>
    %117 = arith.mulf %107, %116 : vector<8x128xf32>
    %118 = arith.mulf %101, %109 : vector<8x128xf32>
    %119 = arith.addf %117, %118 : vector<8x128xf32>
    %120 = math.tanh %119 : vector<8x128xf32>
    %121 = arith.mulf %115, %120 : vector<8x128xf32>
    %c0_48 = arith.constant 0 : index
    %c0_49 = arith.constant 0 : index
    %122 = vector.load %arg6[%c0_48, %c0_49] : memref<8x128xf32, #tpu.memory_space<vmem>>, vector<8x128xf32>
    tpu.vector_store %arg6[%c0_48, %c0_49], %119 {strides = array<i32>} : memref<8x128xf32, #tpu.memory_space<vmem>>, vector<8x128xf32>,
    %c0_50 = arith.constant 0 : index
    %c0_51 = arith.constant 0 : index
    %123 = vector.load %arg5[%c0_50, %c0_51] : memref<8x128xf32, #tpu.memory_space<vmem>>, vector<8x128xf32>
    tpu.vector_store %arg5[%c0_50, %c0_51], %121 {strides = array<i32>} : memref<8x128xf32, #tpu.memory_space<vmem>>, vector<8x128xf32>,
    %124 = arith.truncf %121 : vector<8x128xf32> to vector<8x128xbf16>
    %125 = arith.index_cast %c2_i32 : i32 to index
    %c0_52 = arith.constant 0 : index
    %c0_53 = arith.constant 0 : index
    %126 = vector.load %arg4[%125, %c0_52, %c0_53] : memref<8x8x128xbf16, #tpu.memory_space<vmem>>, vector<1x8x128xbf16>
    %127 = vector.shape_cast %126 : vector<1x8x128xbf16> to vector<8x128xbf16>
    %128 = vector.shape_cast %124 : vector<8x128xbf16> to vector<1x8x128xbf16>
    tpu.vector_store %arg4[%125, %c0_52, %c0_53], %128 {strides = array<i32>} : memref<8x8x128xbf16, #tpu.memory_space<vmem>>, vector<1x8x128xbf16>,
    %c3_i32 = arith.constant 3 : i32
    %c0_54 = arith.constant 0 : index
    %c0_55 = arith.constant 0 : index
    %129 = vector.load %arg5[%c0_54, %c0_55] : memref<8x128xf32, #tpu.memory_space<vmem>>, vector<8x128xf32>
    %130 = arith.index_cast %c3_i32 : i32 to index
    %c0_56 = arith.constant 0 : index
    %c0_57 = arith.constant 0 : index
    %131 = vector.load %arg2[%130, %c0_56, %c0_57] : memref<8x8x512xbf16, #tpu.memory_space<vmem>>, vector<1x8x512xbf16>
    %132 = vector.shape_cast %131 : vector<1x8x512xbf16> to vector<8x512xbf16>
    %133 = arith.extf %132 : vector<8x512xbf16> to vector<8x512xf32>
    %134 = arith.truncf %129 : vector<8x128xf32> to vector<8x128xbf16>
    %c0_58 = arith.constant 0 : index
    %c0_59 = arith.constant 0 : index
    %135 = vector.load %arg3[%c0_58, %c0_59] : memref<128x512xbf16, #tpu.memory_space<vmem>>, vector<128x512xbf16>
    %cst_60 = arith.constant dense<0.000000e+00> : vector<8x512xf32>
    %136 = tpu.matmul %134, %135, %cst_60 {dimension_numbers = #tpu.dot_dimension_numbers<[1], [0], [0], [1], [0, 0, 1, 1], [], []>} : vector<8x128xbf16>, vector<128x512xbf16>, vector<8x512xf32> -> vector<8x512xf32>
    %137 = arith.addf %133, %136 : vector<8x512xf32>
    %138 = vector.extract_strided_slice %137 {offsets = [0, 0], sizes = [8, 128], strides = [1, 1]} : vector<8x512xf32> to vector<8x128xf32>
    %139 = arith.negf %138 : vector<8x128xf32>
    %140 = math.exp %139 : vector<8x128xf32>
    %cst_61 = arith.constant 1.000000e+00 : f32
    %141 = vector.broadcast %cst_61 : f32 to vector<8x128xf32>
    %142 = arith.addf %141, %140 : vector<8x128xf32>
    %143 = arith.divf %141, %142 : vector<8x128xf32>
    %144 = vector.extract_strided_slice %137 {offsets = [0, 128], sizes = [8, 128], strides = [1, 1]} : vector<8x512xf32> to vector<8x128xf32>
    %145 = arith.negf %144 : vector<8x128xf32>
    %146 = math.exp %145 : vector<8x128xf32>
    %cst_62 = arith.constant 1.000000e+00 : f32
    %147 = vector.broadcast %cst_62 : f32 to vector<8x128xf32>
    %148 = arith.addf %147, %146 : vector<8x128xf32>
    %149 = arith.divf %147, %148 : vector<8x128xf32>
    %150 = vector.extract_strided_slice %137 {offsets = [0, 256], sizes = [8, 128], strides = [1, 1]} : vector<8x512xf32> to vector<8x128xf32>
    %151 = math.tanh %150 : vector<8x128xf32>
    %152 = vector.extract_strided_slice %137 {offsets = [0, 384], sizes = [8, 128], strides = [1, 1]} : vector<8x512xf32> to vector<8x128xf32>
    %153 = arith.negf %152 : vector<8x128xf32>
    %154 = math.exp %153 : vector<8x128xf32>
    %cst_63 = arith.constant 1.000000e+00 : f32
    %155 = vector.broadcast %cst_63 : f32 to vector<8x128xf32>
    %156 = arith.addf %155, %154 : vector<8x128xf32>
    %157 = arith.divf %155, %156 : vector<8x128xf32>
    %c0_64 = arith.constant 0 : index
    %c0_65 = arith.constant 0 : index
    %158 = vector.load %arg6[%c0_64, %c0_65] : memref<8x128xf32, #tpu.memory_space<vmem>>, vector<8x128xf32>
    %159 = arith.mulf %149, %158 : vector<8x128xf32>
    %160 = arith.mulf %143, %151 : vector<8x128xf32>
    %161 = arith.addf %159, %160 : vector<8x128xf32>
    %162 = math.tanh %161 : vector<8x128xf32>
    %163 = arith.mulf %157, %162 : vector<8x128xf32>
    %c0_66 = arith.constant 0 : index
    %c0_67 = arith.constant 0 : index
    %164 = vector.load %arg6[%c0_66, %c0_67] : memref<8x128xf32, #tpu.memory_space<vmem>>, vector<8x128xf32>
    tpu.vector_store %arg6[%c0_66, %c0_67], %161 {strides = array<i32>} : memref<8x128xf32, #tpu.memory_space<vmem>>, vector<8x128xf32>,
    %c0_68 = arith.constant 0 : index
    %c0_69 = arith.constant 0 : index
    %165 = vector.load %arg5[%c0_68, %c0_69] : memref<8x128xf32, #tpu.memory_space<vmem>>, vector<8x128xf32>
    tpu.vector_store %arg5[%c0_68, %c0_69], %163 {strides = array<i32>} : memref<8x128xf32, #tpu.memory_space<vmem>>, vector<8x128xf32>,
    %166 = arith.truncf %163 : vector<8x128xf32> to vector<8x128xbf16>
    %167 = arith.index_cast %c3_i32 : i32 to index
    %c0_70 = arith.constant 0 : index
    %c0_71 = arith.constant 0 : index
    %168 = vector.load %arg4[%167, %c0_70, %c0_71] : memref<8x8x128xbf16, #tpu.memory_space<vmem>>, vector<1x8x128xbf16>
    %169 = vector.shape_cast %168 : vector<1x8x128xbf16> to vector<8x128xbf16>
    %170 = vector.shape_cast %166 : vector<8x128xbf16> to vector<1x8x128xbf16>
    tpu.vector_store %arg4[%167, %c0_70, %c0_71], %170 {strides = array<i32>} : memref<8x8x128xbf16, #tpu.memory_space<vmem>>, vector<1x8x128xbf16>,
    %c4_i32 = arith.constant 4 : i32
    %c0_72 = arith.constant 0 : index
    %c0_73 = arith.constant 0 : index
    %171 = vector.load %arg5[%c0_72, %c0_73] : memref<8x128xf32, #tpu.memory_space<vmem>>, vector<8x128xf32>
    %172 = arith.index_cast %c4_i32 : i32 to index
    %c0_74 = arith.constant 0 : index
    %c0_75 = arith.constant 0 : index
    %173 = vector.load %arg2[%172, %c0_74, %c0_75] : memref<8x8x512xbf16, #tpu.memory_space<vmem>>, vector<1x8x512xbf16>
    %174 = vector.shape_cast %173 : vector<1x8x512xbf16> to vector<8x512xbf16>
    %175 = arith.extf %174 : vector<8x512xbf16> to vector<8x512xf32>
    %176 = arith.truncf %171 : vector<8x128xf32> to vector<8x128xbf16>
    %c0_76 = arith.constant 0 : index
    %c0_77 = arith.constant 0 : index
    %177 = vector.load %arg3[%c0_76, %c0_77] : memref<128x512xbf16, #tpu.memory_space<vmem>>, vector<128x512xbf16>
    %cst_78 = arith.constant dense<0.000000e+00> : vector<8x512xf32>
    %178 = tpu.matmul %176, %177, %cst_78 {dimension_numbers = #tpu.dot_dimension_numbers<[1], [0], [0], [1], [0, 0, 1, 1], [], []>} : vector<8x128xbf16>, vector<128x512xbf16>, vector<8x512xf32> -> vector<8x512xf32>
    %179 = arith.addf %175, %178 : vector<8x512xf32>
    %180 = vector.extract_strided_slice %179 {offsets = [0, 0], sizes = [8, 128], strides = [1, 1]} : vector<8x512xf32> to vector<8x128xf32>
    %181 = arith.negf %180 : vector<8x128xf32>
    %182 = math.exp %181 : vector<8x128xf32>
    %cst_79 = arith.constant 1.000000e+00 : f32
    %183 = vector.broadcast %cst_79 : f32 to vector<8x128xf32>
    %184 = arith.addf %183, %182 : vector<8x128xf32>
    %185 = arith.divf %183, %184 : vector<8x128xf32>
    %186 = vector.extract_strided_slice %179 {offsets = [0, 128], sizes = [8, 128], strides = [1, 1]} : vector<8x512xf32> to vector<8x128xf32>
    %187 = arith.negf %186 : vector<8x128xf32>
    %188 = math.exp %187 : vector<8x128xf32>
    %cst_80 = arith.constant 1.000000e+00 : f32
    %189 = vector.broadcast %cst_80 : f32 to vector<8x128xf32>
    %190 = arith.addf %189, %188 : vector<8x128xf32>
    %191 = arith.divf %189, %190 : vector<8x128xf32>
    %192 = vector.extract_strided_slice %179 {offsets = [0, 256], sizes = [8, 128], strides = [1, 1]} : vector<8x512xf32> to vector<8x128xf32>
    %193 = math.tanh %192 : vector<8x128xf32>
    %194 = vector.extract_strided_slice %179 {offsets = [0, 384], sizes = [8, 128], strides = [1, 1]} : vector<8x512xf32> to vector<8x128xf32>
    %195 = arith.negf %194 : vector<8x128xf32>
    %196 = math.exp %195 : vector<8x128xf32>
    %cst_81 = arith.constant 1.000000e+00 : f32
    %197 = vector.broadcast %cst_81 : f32 to vector<8x128xf32>
    %198 = arith.addf %197, %196 : vector<8x128xf32>
    %199 = arith.divf %197, %198 : vector<8x128xf32>
    %c0_82 = arith.constant 0 : index
    %c0_83 = arith.constant 0 : index
    %200 = vector.load %arg6[%c0_82, %c0_83] : memref<8x128xf32, #tpu.memory_space<vmem>>, vector<8x128xf32>
    %201 = arith.mulf %191, %200 : vector<8x128xf32>
    %202 = arith.mulf %185, %193 : vector<8x128xf32>
    %203 = arith.addf %201, %202 : vector<8x128xf32>
    %204 = math.tanh %203 : vector<8x128xf32>
    %205 = arith.mulf %199, %204 : vector<8x128xf32>
    %c0_84 = arith.constant 0 : index
    %c0_85 = arith.constant 0 : index
    %206 = vector.load %arg6[%c0_84, %c0_85] : memref<8x128xf32, #tpu.memory_space<vmem>>, vector<8x128xf32>
    tpu.vector_store %arg6[%c0_84, %c0_85], %203 {strides = array<i32>} : memref<8x128xf32, #tpu.memory_space<vmem>>, vector<8x128xf32>,
    %c0_86 = arith.constant 0 : index
    %c0_87 = arith.constant 0 : index
    %207 = vector.load %arg5[%c0_86, %c0_87] : memref<8x128xf32, #tpu.memory_space<vmem>>, vector<8x128xf32>
    tpu.vector_store %arg5[%c0_86, %c0_87], %205 {strides = array<i32>} : memref<8x128xf32, #tpu.memory_space<vmem>>, vector<8x128xf32>,
    %208 = arith.truncf %205 : vector<8x128xf32> to vector<8x128xbf16>
    %209 = arith.index_cast %c4_i32 : i32 to index
    %c0_88 = arith.constant 0 : index
    %c0_89 = arith.constant 0 : index
    %210 = vector.load %arg4[%209, %c0_88, %c0_89] : memref<8x8x128xbf16, #tpu.memory_space<vmem>>, vector<1x8x128xbf16>
    %211 = vector.shape_cast %210 : vector<1x8x128xbf16> to vector<8x128xbf16>
    %212 = vector.shape_cast %208 : vector<8x128xbf16> to vector<1x8x128xbf16>
    tpu.vector_store %arg4[%209, %c0_88, %c0_89], %212 {strides = array<i32>} : memref<8x8x128xbf16, #tpu.memory_space<vmem>>, vector<1x8x128xbf16>,
    %c5_i32 = arith.constant 5 : i32
    %c0_90 = arith.constant 0 : index
    %c0_91 = arith.constant 0 : index
    %213 = vector.load %arg5[%c0_90, %c0_91] : memref<8x128xf32, #tpu.memory_space<vmem>>, vector<8x128xf32>
    %214 = arith.index_cast %c5_i32 : i32 to index
    %c0_92 = arith.constant 0 : index
    %c0_93 = arith.constant 0 : index
    %215 = vector.load %arg2[%214, %c0_92, %c0_93] : memref<8x8x512xbf16, #tpu.memory_space<vmem>>, vector<1x8x512xbf16>
    %216 = vector.shape_cast %215 : vector<1x8x512xbf16> to vector<8x512xbf16>
    %217 = arith.extf %216 : vector<8x512xbf16> to vector<8x512xf32>
    %218 = arith.truncf %213 : vector<8x128xf32> to vector<8x128xbf16>
    %c0_94 = arith.constant 0 : index
    %c0_95 = arith.constant 0 : index
    %219 = vector.load %arg3[%c0_94, %c0_95] : memref<128x512xbf16, #tpu.memory_space<vmem>>, vector<128x512xbf16>
    %cst_96 = arith.constant dense<0.000000e+00> : vector<8x512xf32>
    %220 = tpu.matmul %218, %219, %cst_96 {dimension_numbers = #tpu.dot_dimension_numbers<[1], [0], [0], [1], [0, 0, 1, 1], [], []>} : vector<8x128xbf16>, vector<128x512xbf16>, vector<8x512xf32> -> vector<8x512xf32>
    %221 = arith.addf %217, %220 : vector<8x512xf32>
    %222 = vector.extract_strided_slice %221 {offsets = [0, 0], sizes = [8, 128], strides = [1, 1]} : vector<8x512xf32> to vector<8x128xf32>
    %223 = arith.negf %222 : vector<8x128xf32>
    %224 = math.exp %223 : vector<8x128xf32>
    %cst_97 = arith.constant 1.000000e+00 : f32
    %225 = vector.broadcast %cst_97 : f32 to vector<8x128xf32>
    %226 = arith.addf %225, %224 : vector<8x128xf32>
    %227 = arith.divf %225, %226 : vector<8x128xf32>
    %228 = vector.extract_strided_slice %221 {offsets = [0, 128], sizes = [8, 128], strides = [1, 1]} : vector<8x512xf32> to vector<8x128xf32>
    %229 = arith.negf %228 : vector<8x128xf32>
    %230 = math.exp %229 : vector<8x128xf32>
    %cst_98 = arith.constant 1.000000e+00 : f32
    %231 = vector.broadcast %cst_98 : f32 to vector<8x128xf32>
    %232 = arith.addf %231, %230 : vector<8x128xf32>
    %233 = arith.divf %231, %232 : vector<8x128xf32>
    %234 = vector.extract_strided_slice %221 {offsets = [0, 256], sizes = [8, 128], strides = [1, 1]} : vector<8x512xf32> to vector<8x128xf32>
    %235 = math.tanh %234 : vector<8x128xf32>
    %236 = vector.extract_strided_slice %221 {offsets = [0, 384], sizes = [8, 128], strides = [1, 1]} : vector<8x512xf32> to vector<8x128xf32>
    %237 = arith.negf %236 : vector<8x128xf32>
    %238 = math.exp %237 : vector<8x128xf32>
    %cst_99 = arith.constant 1.000000e+00 : f32
    %239 = vector.broadcast %cst_99 : f32 to vector<8x128xf32>
    %240 = arith.addf %239, %238 : vector<8x128xf32>
    %241 = arith.divf %239, %240 : vector<8x128xf32>
    %c0_100 = arith.constant 0 : index
    %c0_101 = arith.constant 0 : index
    %242 = vector.load %arg6[%c0_100, %c0_101] : memref<8x128xf32, #tpu.memory_space<vmem>>, vector<8x128xf32>
    %243 = arith.mulf %233, %242 : vector<8x128xf32>
    %244 = arith.mulf %227, %235 : vector<8x128xf32>
    %245 = arith.addf %243, %244 : vector<8x128xf32>
    %246 = math.tanh %245 : vector<8x128xf32>
    %247 = arith.mulf %241, %246 : vector<8x128xf32>
    %c0_102 = arith.constant 0 : index
    %c0_103 = arith.constant 0 : index
    %248 = vector.load %arg6[%c0_102, %c0_103] : memref<8x128xf32, #tpu.memory_space<vmem>>, vector<8x128xf32>
    tpu.vector_store %arg6[%c0_102, %c0_103], %245 {strides = array<i32>} : memref<8x128xf32, #tpu.memory_space<vmem>>, vector<8x128xf32>,
    %c0_104 = arith.constant 0 : index
    %c0_105 = arith.constant 0 : index
    %249 = vector.load %arg5[%c0_104, %c0_105] : memref<8x128xf32, #tpu.memory_space<vmem>>, vector<8x128xf32>
    tpu.vector_store %arg5[%c0_104, %c0_105], %247 {strides = array<i32>} : memref<8x128xf32, #tpu.memory_space<vmem>>, vector<8x128xf32>,
    %250 = arith.truncf %247 : vector<8x128xf32> to vector<8x128xbf16>
    %251 = arith.index_cast %c5_i32 : i32 to index
    %c0_106 = arith.constant 0 : index
    %c0_107 = arith.constant 0 : index
    %252 = vector.load %arg4[%251, %c0_106, %c0_107] : memref<8x8x128xbf16, #tpu.memory_space<vmem>>, vector<1x8x128xbf16>
    %253 = vector.shape_cast %252 : vector<1x8x128xbf16> to vector<8x128xbf16>
    %254 = vector.shape_cast %250 : vector<8x128xbf16> to vector<1x8x128xbf16>
    tpu.vector_store %arg4[%251, %c0_106, %c0_107], %254 {strides = array<i32>} : memref<8x8x128xbf16, #tpu.memory_space<vmem>>, vector<1x8x128xbf16>,
    %c6_i32 = arith.constant 6 : i32
    %c0_108 = arith.constant 0 : index
    %c0_109 = arith.constant 0 : index
    %255 = vector.load %arg5[%c0_108, %c0_109] : memref<8x128xf32, #tpu.memory_space<vmem>>, vector<8x128xf32>
    %256 = arith.index_cast %c6_i32 : i32 to index
    %c0_110 = arith.constant 0 : index
    %c0_111 = arith.constant 0 : index
    %257 = vector.load %arg2[%256, %c0_110, %c0_111] : memref<8x8x512xbf16, #tpu.memory_space<vmem>>, vector<1x8x512xbf16>
    %258 = vector.shape_cast %257 : vector<1x8x512xbf16> to vector<8x512xbf16>
    %259 = arith.extf %258 : vector<8x512xbf16> to vector<8x512xf32>
    %260 = arith.truncf %255 : vector<8x128xf32> to vector<8x128xbf16>
    %c0_112 = arith.constant 0 : index
    %c0_113 = arith.constant 0 : index
    %261 = vector.load %arg3[%c0_112, %c0_113] : memref<128x512xbf16, #tpu.memory_space<vmem>>, vector<128x512xbf16>
    %cst_114 = arith.constant dense<0.000000e+00> : vector<8x512xf32>
    %262 = tpu.matmul %260, %261, %cst_114 {dimension_numbers = #tpu.dot_dimension_numbers<[1], [0], [0], [1], [0, 0, 1, 1], [], []>} : vector<8x128xbf16>, vector<128x512xbf16>, vector<8x512xf32> -> vector<8x512xf32>
    %263 = arith.addf %259, %262 : vector<8x512xf32>
    %264 = vector.extract_strided_slice %263 {offsets = [0, 0], sizes = [8, 128], strides = [1, 1]} : vector<8x512xf32> to vector<8x128xf32>
    %265 = arith.negf %264 : vector<8x128xf32>
    %266 = math.exp %265 : vector<8x128xf32>
    %cst_115 = arith.constant 1.000000e+00 : f32
    %267 = vector.broadcast %cst_115 : f32 to vector<8x128xf32>
    %268 = arith.addf %267, %266 : vector<8x128xf32>
    %269 = arith.divf %267, %268 : vector<8x128xf32>
    %270 = vector.extract_strided_slice %263 {offsets = [0, 128], sizes = [8, 128], strides = [1, 1]} : vector<8x512xf32> to vector<8x128xf32>
    %271 = arith.negf %270 : vector<8x128xf32>
    %272 = math.exp %271 : vector<8x128xf32>
    %cst_116 = arith.constant 1.000000e+00 : f32
    %273 = vector.broadcast %cst_116 : f32 to vector<8x128xf32>
    %274 = arith.addf %273, %272 : vector<8x128xf32>
    %275 = arith.divf %273, %274 : vector<8x128xf32>
    %276 = vector.extract_strided_slice %263 {offsets = [0, 256], sizes = [8, 128], strides = [1, 1]} : vector<8x512xf32> to vector<8x128xf32>
    %277 = math.tanh %276 : vector<8x128xf32>
    %278 = vector.extract_strided_slice %263 {offsets = [0, 384], sizes = [8, 128], strides = [1, 1]} : vector<8x512xf32> to vector<8x128xf32>
    %279 = arith.negf %278 : vector<8x128xf32>
    %280 = math.exp %279 : vector<8x128xf32>
    %cst_117 = arith.constant 1.000000e+00 : f32
    %281 = vector.broadcast %cst_117 : f32 to vector<8x128xf32>
    %282 = arith.addf %281, %280 : vector<8x128xf32>
    %283 = arith.divf %281, %282 : vector<8x128xf32>
    %c0_118 = arith.constant 0 : index
    %c0_119 = arith.constant 0 : index
    %284 = vector.load %arg6[%c0_118, %c0_119] : memref<8x128xf32, #tpu.memory_space<vmem>>, vector<8x128xf32>
    %285 = arith.mulf %275, %284 : vector<8x128xf32>
    %286 = arith.mulf %269, %277 : vector<8x128xf32>
    %287 = arith.addf %285, %286 : vector<8x128xf32>
    %288 = math.tanh %287 : vector<8x128xf32>
    %289 = arith.mulf %283, %288 : vector<8x128xf32>
    %c0_120 = arith.constant 0 : index
    %c0_121 = arith.constant 0 : index
    %290 = vector.load %arg6[%c0_120, %c0_121] : memref<8x128xf32, #tpu.memory_space<vmem>>, vector<8x128xf32>
    tpu.vector_store %arg6[%c0_120, %c0_121], %287 {strides = array<i32>} : memref<8x128xf32, #tpu.memory_space<vmem>>, vector<8x128xf32>,
    %c0_122 = arith.constant 0 : index
    %c0_123 = arith.constant 0 : index
    %291 = vector.load %arg5[%c0_122, %c0_123] : memref<8x128xf32, #tpu.memory_space<vmem>>, vector<8x128xf32>
    tpu.vector_store %arg5[%c0_122, %c0_123], %289 {strides = array<i32>} : memref<8x128xf32, #tpu.memory_space<vmem>>, vector<8x128xf32>,
    %292 = arith.truncf %289 : vector<8x128xf32> to vector<8x128xbf16>
    %293 = arith.index_cast %c6_i32 : i32 to index
    %c0_124 = arith.constant 0 : index
    %c0_125 = arith.constant 0 : index
    %294 = vector.load %arg4[%293, %c0_124, %c0_125] : memref<8x8x128xbf16, #tpu.memory_space<vmem>>, vector<1x8x128xbf16>
    %295 = vector.shape_cast %294 : vector<1x8x128xbf16> to vector<8x128xbf16>
    %296 = vector.shape_cast %292 : vector<8x128xbf16> to vector<1x8x128xbf16>
    tpu.vector_store %arg4[%293, %c0_124, %c0_125], %296 {strides = array<i32>} : memref<8x8x128xbf16, #tpu.memory_space<vmem>>, vector<1x8x128xbf16>,
    %c7_i32 = arith.constant 7 : i32
    %c0_126 = arith.constant 0 : index
    %c0_127 = arith.constant 0 : index
    %297 = vector.load %arg5[%c0_126, %c0_127] : memref<8x128xf32, #tpu.memory_space<vmem>>, vector<8x128xf32>
    %298 = arith.index_cast %c7_i32 : i32 to index
    %c0_128 = arith.constant 0 : index
    %c0_129 = arith.constant 0 : index
    %299 = vector.load %arg2[%298, %c0_128, %c0_129] : memref<8x8x512xbf16, #tpu.memory_space<vmem>>, vector<1x8x512xbf16>
    %300 = vector.shape_cast %299 : vector<1x8x512xbf16> to vector<8x512xbf16>
    %301 = arith.extf %300 : vector<8x512xbf16> to vector<8x512xf32>
    %302 = arith.truncf %297 : vector<8x128xf32> to vector<8x128xbf16>
    %c0_130 = arith.constant 0 : index
    %c0_131 = arith.constant 0 : index
    %303 = vector.load %arg3[%c0_130, %c0_131] : memref<128x512xbf16, #tpu.memory_space<vmem>>, vector<128x512xbf16>
    %cst_132 = arith.constant dense<0.000000e+00> : vector<8x512xf32>
    %304 = tpu.matmul %302, %303, %cst_132 {dimension_numbers = #tpu.dot_dimension_numbers<[1], [0], [0], [1], [0, 0, 1, 1], [], []>} : vector<8x128xbf16>, vector<128x512xbf16>, vector<8x512xf32> -> vector<8x512xf32>
    %305 = arith.addf %301, %304 : vector<8x512xf32>
    %306 = vector.extract_strided_slice %305 {offsets = [0, 0], sizes = [8, 128], strides = [1, 1]} : vector<8x512xf32> to vector<8x128xf32>
    %307 = arith.negf %306 : vector<8x128xf32>
    %308 = math.exp %307 : vector<8x128xf32>
    %cst_133 = arith.constant 1.000000e+00 : f32
    %309 = vector.broadcast %cst_133 : f32 to vector<8x128xf32>
    %310 = arith.addf %309, %308 : vector<8x128xf32>
    %311 = arith.divf %309, %310 : vector<8x128xf32>
    %312 = vector.extract_strided_slice %305 {offsets = [0, 128], sizes = [8, 128], strides = [1, 1]} : vector<8x512xf32> to vector<8x128xf32>
    %313 = arith.negf %312 : vector<8x128xf32>
    %314 = math.exp %313 : vector<8x128xf32>
    %cst_134 = arith.constant 1.000000e+00 : f32
    %315 = vector.broadcast %cst_134 : f32 to vector<8x128xf32>
    %316 = arith.addf %315, %314 : vector<8x128xf32>
    %317 = arith.divf %315, %316 : vector<8x128xf32>
    %318 = vector.extract_strided_slice %305 {offsets = [0, 256], sizes = [8, 128], strides = [1, 1]} : vector<8x512xf32> to vector<8x128xf32>
    %319 = math.tanh %318 : vector<8x128xf32>
    %320 = vector.extract_strided_slice %305 {offsets = [0, 384], sizes = [8, 128], strides = [1, 1]} : vector<8x512xf32> to vector<8x128xf32>
    %321 = arith.negf %320 : vector<8x128xf32>
    %322 = math.exp %321 : vector<8x128xf32>
    %cst_135 = arith.constant 1.000000e+00 : f32
    %323 = vector.broadcast %cst_135 : f32 to vector<8x128xf32>
    %324 = arith.addf %323, %322 : vector<8x128xf32>
    %325 = arith.divf %323, %324 : vector<8x128xf32>
    %c0_136 = arith.constant 0 : index
    %c0_137 = arith.constant 0 : index
    %326 = vector.load %arg6[%c0_136, %c0_137] : memref<8x128xf32, #tpu.memory_space<vmem>>, vector<8x128xf32>
    %327 = arith.mulf %317, %326 : vector<8x128xf32>
    %328 = arith.mulf %311, %319 : vector<8x128xf32>
    %329 = arith.addf %327, %328 : vector<8x128xf32>
    %330 = math.tanh %329 : vector<8x128xf32>
    %331 = arith.mulf %325, %330 : vector<8x128xf32>
    %c0_138 = arith.constant 0 : index
    %c0_139 = arith.constant 0 : index
    %332 = vector.load %arg6[%c0_138, %c0_139] : memref<8x128xf32, #tpu.memory_space<vmem>>, vector<8x128xf32>
    tpu.vector_store %arg6[%c0_138, %c0_139], %329 {strides = array<i32>} : memref<8x128xf32, #tpu.memory_space<vmem>>, vector<8x128xf32>,
    %c0_140 = arith.constant 0 : index
    %c0_141 = arith.constant 0 : index
    %333 = vector.load %arg5[%c0_140, %c0_141] : memref<8x128xf32, #tpu.memory_space<vmem>>, vector<8x128xf32>
    tpu.vector_store %arg5[%c0_140, %c0_141], %331 {strides = array<i32>} : memref<8x128xf32, #tpu.memory_space<vmem>>, vector<8x128xf32>,
    %334 = arith.truncf %331 : vector<8x128xf32> to vector<8x128xbf16>
    %335 = arith.index_cast %c7_i32 : i32 to index
    %c0_142 = arith.constant 0 : index
    %c0_143 = arith.constant 0 : index
    %336 = vector.load %arg4[%335, %c0_142, %c0_143] : memref<8x8x128xbf16, #tpu.memory_space<vmem>>, vector<1x8x128xbf16>
    %337 = vector.shape_cast %336 : vector<1x8x128xbf16> to vector<8x128xbf16>
    %338 = vector.shape_cast %334 : vector<8x128xbf16> to vector<1x8x128xbf16>
    tpu.vector_store %arg4[%335, %c0_142, %c0_143], %338 {strides = array<i32>} : memref<8x8x128xbf16, #tpu.memory_space<vmem>>, vector<1x8x128xbf16>,
    %c8_i32 = arith.constant 8 : i32
    return
  }
  func.func @transform_0(%arg0: i32, %arg1: i32) -> (i32, i32, i32) {
    %c0_i32 = arith.constant 0 : i32
    %c0_i32_0 = arith.constant 0 : i32
    return %arg1, %arg0, %c0_i32 : i32, i32, i32
  }
  func.func @transform_1(%arg0: i32, %arg1: i32) -> (i32, i32) {
    %c0_i32 = arith.constant 0 : i32
    %c0_i32_0 = arith.constant 0 : i32
    %c0_i32_1 = arith.constant 0 : i32
    return %c0_i32, %c0_i32_0 : i32, i32
  }
  func.func @transform_2(%arg0: i32, %arg1: i32) -> (i32, i32, i32) {
    %c0_i32 = arith.constant 0 : i32
    %c0_i32_0 = arith.constant 0 : i32
    return %arg1, %arg0, %c0_i32 : i32, i32, i32
  }
}

</mosaic_0001>

<llo_original>
// kernel: _dense_forward_impl.5
$region0: #{_dense_forward_impl.5}
  #allocation0 [shape = 'u32[]', space=smem, size = 0x4, offset = 0x4, fixed_abs, tag = 'smem constant byte address 0x4 - core index']
  #allocation1 [shape = 'u32[144,128]{1,0:T(1,128)}', space=vmem, size = 0x12000, scoped, tag = 'internal scratch']
  #allocation2 [shape = 'f32[1]{0:T(128)S(6)}', space=smem, size = 0x200, scoped, tag = 'scoped memory for _dense_forward_impl.5']
  %s0 = inlined_call_operand.vmem [shape: bf16[64,128], index: 0, kind: input, shape index: {}]
  %s1 = inlined_call_operand.vmem [shape: bf16[64,256], index: 1, kind: input, shape index: {}]
  %s2 = inlined_call_operand.vmem [shape: bf16[128,128], index: 2, kind: input, shape index: {}]
  %s3 = inlined_call_operand.vmem [shape: bf16[128,128], index: 3, kind: input, shape index: {}]
  %s4 = inlined_call_operand.vmem [shape: f32[1,128], index: 4, kind: input, shape index: {}]
  %s5 = inlined_call_operand.vmem [shape: f32[1,128], index: 5, kind: input, shape index: {}]
  %s6 = inlined_call_operand.<no memory space> [shape: f32[1], index: 6, kind: input, shape index: {}]
  %s7 = inlined_call_operand.vmem [shape: f32[1,64], index: 7, kind: output, shape index: {}]
  %s8 = sld [smem:[#allocation0]]
  $region79: #{_dense_forward_impl.5} parent=0
    _
  %s10 = ssub.s32 1, %s8
  %s11 = scalar_select 0, %s10, %s8
  %12 = sst [smem:[#allocation2]] %s6
  $region1: #{_dense_forward_impl.5} parent=0
    #allocation3 [shape = 'u8[16384]{0}', space=vmem, size = 0x4000, scoped, tag = 'input window, operand 1, single buffered']
    // Predicated region
    $region2: #{_dense_forward_impl.5} parent=1 // pred_check
      _
    $region3: #{_dense_forward_impl.5} parent=1 // pred_check_branch
      %14 = sbr.rel (0) target = $region5
    $region4: #{_dense_forward_impl.5} parent=1 // pred_region
      _
    $region5: #{_dense_forward_impl.5} parent=1 // pred_fallthru
      _
    // Predicated region
    $region6: #{_dense_forward_impl.5} parent=1 // pred_check
      _
    $region7: #{_dense_forward_impl.5} parent=1 // pred_check_branch
      %16 = sbr.rel (0) target = $region9
    $region8: #{_dense_forward_impl.5} parent=1 // pred_region
      // Predicated region
      $region10: #{_dense_forward_impl.5} parent=8 // pred_check
        _
      $region11: #{_dense_forward_impl.5} parent=8 // pred_check_branch
        %18 = sbr.rel (0) target = $region13
      $region12: #{_dense_forward_impl.5} parent=8 // pred_region
        // Predicated region
        $region14: #{_dense_forward_impl.5} parent=12 // pred_check
          _
        $region15: #{_dense_forward_impl.5} parent=12 // pred_check_branch
          %20 = sbr.rel target = $region17
        $region16: #{_dense_forward_impl.5} parent=12 // pred_region
          // Predicated region
          $region29: #{_dense_forward_impl.5} parent=16 // pred_check
            _
          $region30: #{_dense_forward_impl.5} parent=16 // pred_check_branch
            %49 = sbr.rel (0) target = $region32
          $region31: #{_dense_forward_impl.5} parent=16 // pred_region
            loop: start=0, step=1, limit=1
            $region33: #{_dense_forward_impl.5} parent=31 // loop_pre_header
              _
            $region34: #{_dense_forward_impl.5} parent=31 // loop_header
              %s51 = sphi 0, %s55
              %p52 = scmp.ge.s32.totalorder %s51, 1
              %s56 = sphi %s1, %s1
              %s57 = sphi [#allocation3], [#allocation3]
            $region35: #{_dense_forward_impl.5} parent=31 // loop_header_branch
              %54 = sbr.rel (%p52) target = $region39
            $region36: #{_dense_forward_impl.5} parent=31 // loop_body
              _
            $region37: #{_dense_forward_impl.5} parent=31 // loop_footer
              %s55 = sadd.s32 1, %s51
            $region38: #{_dense_forward_impl.5} parent=31 // loop_footer_branch
              %50 = sbr.rel target = $region34
            $region39: #{_dense_forward_impl.5} parent=31 // loop_exit
              _
            loop: start=0, step=1, limit=1
            $region40: #{_dense_forward_impl.5} parent=31 // loop_pre_header
              _
            $region41: #{_dense_forward_impl.5} parent=31 // loop_header
              %s60 = sphi 0, %s64
              %p61 = scmp.ge.s32.totalorder %s60, 1
              %s65 = sphi %s1, %s1
              %s66 = sphi [#allocation3], [#allocation3]
            $region42: #{_dense_forward_impl.5} parent=31 // loop_header_branch
              %63 = sbr.rel (%p61) target = $region46
            $region43: #{_dense_forward_impl.5} parent=31 // loop_body
              %v67 = vld [vmem:[%s65] sm:$0xf]
              %68 = vst [vmem:[%s66] sm:$0xf] %v67
              %v69 = vld [vmem:[%s65 + $0x8] sm:$0xf]
              %70 = vst [vmem:[%s66 + $0x4] sm:$0xf] %v69
              %v71 = vld [vmem:[%s65 + $0x10] sm:$0xf]
              %72 = vst [vmem:[%s66 + $0x8] sm:$0xf] %v71
              %v73 = vld [vmem:[%s65 + $0x18] sm:$0xf]
              %74 = vst [vmem:[%s66 + $0xc] sm:$0xf] %v73
              %v75 = vld [vmem:[%s65 + $0x20] sm:$0xf]
              %76 = vst [vmem:[%s66 + $0x10] sm:$0xf] %v75
              %v77 = vld [vmem:[%s65 + $0x28] sm:$0xf]
              %78 = vst [vmem:[%s66 + $0x14] sm:$0xf] %v77
              %v79 = vld [vmem:[%s65 + $0x30] sm:$0xf]
              %80 = vst [vmem:[%s66 + $0x18] sm:$0xf] %v79
              %v81 = vld [vmem:[%s65 + $0x38] sm:$0xf]
              %82 = vst [vmem:[%s66 + $0x1c] sm:$0xf] %v81
            $region44: #{_dense_forward_impl.5} parent=31 // loop_footer
              %s64 = sadd.s32 1, %s60
            $region45: #{_dense_forward_impl.5} parent=31 // loop_footer_branch
              %59 = sbr.rel target = $region41
            $region46: #{_dense_forward_impl.5} parent=31 // loop_exit
              _
          $region32: #{_dense_forward_impl.5} parent=16 // pred_fallthru
            _
        $region17: #{_dense_forward_impl.5} parent=12 // pred_fallthru
          _
        // Predicated region
        $region18: #{_dense_forward_impl.5} parent=12 // pred_check
          _
        $region19: #{_dense_forward_impl.5} parent=12 // pred_check_branch
          %22 = sbr.rel (0) target = $region21
        $region20: #{_dense_forward_impl.5} parent=12 // pred_region
          loop: start=0, step=1, limit=1
          $region22: #{_dense_forward_impl.5} parent=20 // loop_pre_header
            _
          $region23: #{_dense_forward_impl.5} parent=20 // loop_header
            %s25 = sphi 0, %s29
            %p26 = scmp.ge.s32.totalorder %s25, 1
            %s30 = sphi %s1, %s1
            %s31 = sphi [#allocation3], [#allocation3]
          $region24: #{_dense_forward_impl.5} parent=20 // loop_header_branch
            %28 = sbr.rel (%p26) target = $region28
          $region25: #{_dense_forward_impl.5} parent=20 // loop_body
            %v32 = vld [vmem:[%s30] sm:$0xf]
            %33 = vst [vmem:[%s31] sm:$0xf] %v32
            %v34 = vld [vmem:[%s30 + $0x8] sm:$0xf]
            %35 = vst [vmem:[%s31 + $0x4] sm:$0xf] %v34
            %v36 = vld [vmem:[%s30 + $0x10] sm:$0xf]
            %37 = vst [vmem:[%s31 + $0x8] sm:$0xf] %v36
            %v38 = vld [vmem:[%s30 + $0x18] sm:$0xf]
            %39 = vst [vmem:[%s31 + $0xc] sm:$0xf] %v38
            %v40 = vld [vmem:[%s30 + $0x20] sm:$0xf]
            %41 = vst [vmem:[%s31 + $0x10] sm:$0xf] %v40
            %v42 = vld [vmem:[%s30 + $0x28] sm:$0xf]
            %43 = vst [vmem:[%s31 + $0x14] sm:$0xf] %v42
            %v44 = vld [vmem:[%s30 + $0x30] sm:$0xf]
            %45 = vst [vmem:[%s31 + $0x18] sm:$0xf] %v44
            %v46 = vld [vmem:[%s30 + $0x38] sm:$0xf]
            %47 = vst [vmem:[%s31 + $0x1c] sm:$0xf] %v46
          $region26: #{_dense_forward_impl.5} parent=20 // loop_footer
            %s29 = sadd.s32 1, %s25
          $region27: #{_dense_forward_impl.5} parent=20 // loop_footer_branch
            %24 = sbr.rel target = $region23
          $region28: #{_dense_forward_impl.5} parent=20 // loop_exit
            _
        $region21: #{_dense_forward_impl.5} parent=12 // pred_fallthru
          _
      $region13: #{_dense_forward_impl.5} parent=8 // pred_fallthru
        _
      %83 = vnop
    $region9: #{_dense_forward_impl.5} parent=1 // pred_fallthru
      _
    // Predicated region
    $region47: #{_dense_forward_impl.5} parent=1 // pred_check
      _
    $region48: #{_dense_forward_impl.5} parent=1 // pred_check_branch
      %85 = sbr.rel (0) target = $region50
    $region49: #{_dense_forward_impl.5} parent=1 // pred_region
      _
    $region50: #{_dense_forward_impl.5} parent=1 // pred_fallthru
      _
    // Predicated region
    $region51: #{_dense_forward_impl.5} parent=1 // pred_check
      _
    $region52: #{_dense_forward_impl.5} parent=1 // pred_check_branch
      %87 = sbr.rel (0) target = $region54
    $region53: #{_dense_forward_impl.5} parent=1 // pred_region
      _
    $region54: #{_dense_forward_impl.5} parent=1 // pred_fallthru
      _
    // Predicated region
    $region55: #{_dense_forward_impl.5} parent=1 // pred_check
      _
    $region56: #{_dense_forward_impl.5} parent=1 // pred_check_branch
      %89 = sbr.rel (0) target = $region58
    $region57: #{_dense_forward_impl.5} parent=1 // pred_region
      _
    $region58: #{_dense_forward_impl.5} parent=1 // pred_fallthru
      _
    // Predicated region
    $region59: #{_dense_forward_impl.5} parent=1 // pred_check
      _
    $region60: #{_dense_forward_impl.5} parent=1 // pred_check_branch
      %91 = sbr.rel (0) target = $region62
    $region61: #{_dense_forward_impl.5} parent=1 // pred_region
      _
    $region62: #{_dense_forward_impl.5} parent=1 // pred_fallthru
      _
    // Predicated region
    $region63: #{_dense_forward_impl.5} parent=1 // pred_check
      _
    $region64: #{_dense_forward_impl.5} parent=1 // pred_check_branch
      %93 = sbr.rel (0) target = $region66
    $region65: #{_dense_forward_impl.5} parent=1 // pred_region
      _
    $region66: #{_dense_forward_impl.5} parent=1 // pred_fallthru
      _
    // Predicated region
    $region67: #{_dense_forward_impl.5} parent=1 // pred_check
      _
    $region68: #{_dense_forward_impl.5} parent=1 // pred_check_branch
      %95 = sbr.rel (0) target = $region70
    $region69: #{_dense_forward_impl.5} parent=1 // pred_region
      _
    $region70: #{_dense_forward_impl.5} parent=1 // pred_fallthru
      _
    %v97 = vld [vmem:[%s0] sm:$0xf]
    %v98 = vld [vmem:[%s0 + $0x4] sm:$0xf]
    %v99 = vld [vmem:[%s0 + $0x8] sm:$0xf]
    %v100 = vld [vmem:[%s0 + $0xc] sm:$0xf]
    %v101 = vld [vmem:[%s0 + $0x10] sm:$0xf]
    %v102 = vld [vmem:[%s0 + $0x14] sm:$0xf]
    %v103 = vld [vmem:[%s0 + $0x18] sm:$0xf]
    %v104 = vld [vmem:[%s0 + $0x1c] sm:$0xf]
    %v105 = vld [vmem:[%s2] sm:$0xf]
    %v106 = vld [vmem:[%s2 + $0x4] sm:$0xf]
    %v107 = vld [vmem:[%s2 + $0x8] sm:$0xf]
    %v108 = vld [vmem:[%s2 + $0xc] sm:$0xf]
    %v109 = vld [vmem:[%s2 + $0x10] sm:$0xf]
    %v110 = vld [vmem:[%s2 + $0x14] sm:$0xf]
    %v111 = vld [vmem:[%s2 + $0x18] sm:$0xf]
    %v112 = vld [vmem:[%s2 + $0x1c] sm:$0xf]
    %v113 = vld [vmem:[%s2 + $0x20] sm:$0xf]
    %v114 = vld [vmem:[%s2 + $0x24] sm:$0xf]
    %v115 = vld [vmem:[%s2 + $0x28] sm:$0xf]
    %v116 = vld [vmem:[%s2 + $0x2c] sm:$0xf]
    %v117 = vld [vmem:[%s2 + $0x30] sm:$0xf]
    %v118 = vld [vmem:[%s2 + $0x34] sm:$0xf]
    %v119 = vld [vmem:[%s2 + $0x38] sm:$0xf]
    %v120 = vld [vmem:[%s2 + $0x3c] sm:$0xf]
    %v121 = vld [vmem:[#allocation3] sm:$0xf]
    %v122 = vld [vmem:[#allocation3 + $0x4] sm:$0xf]
    %v123 = vld [vmem:[#allocation3 + $0x8] sm:$0xf]
    %v124 = vld [vmem:[#allocation3 + $0xc] sm:$0xf]
    %v125 = vld [vmem:[#allocation3 + $0x10] sm:$0xf]
    %v126 = vld [vmem:[#allocation3 + $0x14] sm:$0xf]
    %v127 = vld [vmem:[#allocation3 + $0x18] sm:$0xf]
    %v128 = vld [vmem:[#allocation3 + $0x1c] sm:$0xf]
    %v129 = vld [vmem:[%s3] sm:$0xf]
    %v130 = vld [vmem:[%s3 + $0x4] sm:$0xf]
    %v131 = vld [vmem:[%s3 + $0x8] sm:$0xf]
    %v132 = vld [vmem:[%s3 + $0xc] sm:$0xf]
    %v133 = vld [vmem:[%s3 + $0x10] sm:$0xf]
    %v134 = vld [vmem:[%s3 + $0x14] sm:$0xf]
    %v135 = vld [vmem:[%s3 + $0x18] sm:$0xf]
    %v136 = vld [vmem:[%s3 + $0x1c] sm:$0xf]
    %v137 = vld [vmem:[%s3 + $0x20] sm:$0xf]
    %v138 = vld [vmem:[%s3 + $0x24] sm:$0xf]
    %v139 = vld [vmem:[%s3 + $0x28] sm:$0xf]
    %v140 = vld [vmem:[%s3 + $0x2c] sm:$0xf]
    %v141 = vld [vmem:[%s3 + $0x30] sm:$0xf]
    %v142 = vld [vmem:[%s3 + $0x34] sm:$0xf]
    %v143 = vld [vmem:[%s3 + $0x38] sm:$0xf]
    %v144 = vld [vmem:[%s3 + $0x3c] sm:$0xf]
    %v153 = vunpack.c.l.b16 %v121
    %v154 = vunpack.c.l.b16 %v122
    %v155 = vunpack.c.l.b16 %v123
    %v156 = vunpack.c.l.b16 %v124
    %v157 = vunpack.c.l.b16 %v125
    %v158 = vunpack.c.l.b16 %v126
    %v159 = vunpack.c.l.b16 %v127
    %v160 = vunpack.c.l.b16 %v128
    %v161 = vpack.c.b16 %v154, %v153
    %v162 = vpack.c.b16 %v156, %v155
    %v163 = vpack.c.b16 %v158, %v157
    %v164 = vpack.c.b16 %v160, %v159
    %v185 = vunpack.c.l.b16 %v129
    %v186 = vunpack.c.l.b16 %v130
    %v187 = vunpack.c.l.b16 %v131
    %v188 = vunpack.c.l.b16 %v132
    %v189 = vunpack.c.l.b16 %v133
    %v190 = vunpack.c.l.b16 %v134
    %v191 = vunpack.c.l.b16 %v135
    %v192 = vunpack.c.l.b16 %v136
    %v193 = vunpack.c.l.b16 %v137
    %v194 = vunpack.c.l.b16 %v138
    %v195 = vunpack.c.l.b16 %v139
    %v196 = vunpack.c.l.b16 %v140
    %v197 = vunpack.c.l.b16 %v141
    %v198 = vunpack.c.l.b16 %v142
    %v199 = vunpack.c.l.b16 %v143
    %v200 = vunpack.c.l.b16 %v144
    %v201 = vpack.c.b16 %v186, %v185
    %v202 = vpack.c.b16 %v188, %v187
    %v203 = vpack.c.b16 %v190, %v189
    %v204 = vpack.c.b16 %v192, %v191
    %v205 = vpack.c.b16 %v194, %v193
    %v206 = vpack.c.b16 %v196, %v195
    %v207 = vpack.c.b16 %v198, %v197
    %v208 = vpack.c.b16 %v200, %v199
    %217 = vmatprep.subr.bf16.mxu0 0
    %218 = vmatpush1.bf16.msra.mxu0 %v201
    %219 = vmatprep.subr.bf16.mxu0 0
    %220 = vmatpush1.bf16.msra.mxu0 %v202
    %221 = vmatprep.subr.bf16.mxu0 0
    %222 = vmatpush1.bf16.msra.mxu0 %v203
    %223 = vmatprep.subr.bf16.mxu0 0
    %224 = vmatpush1.bf16.msra.mxu0 %v204
    %225 = vmatprep.subr.bf16.mxu0 0
    %226 = vmatpush1.bf16.msra.mxu0 %v205
    %227 = vmatprep.subr.bf16.mxu0 0
    %228 = vmatpush1.bf16.msra.mxu0 %v206
    %229 = vmatprep.subr.bf16.mxu0 0
    %230 = vmatpush1.bf16.msra.mxu0 %v207
    %231 = vmatprep.subr.bf16.mxu0 0
    %232 = vmatpush1.bf16.msra.mxu0 %v208
    %233 = vmatprep.subr.bf16.mxu0 0
    %234 = vmatpush1.bf16.msra.mxu0 0
    %235 = vmatprep.subr.bf16.mxu0 0
    %236 = vmatpush1.bf16.msra.mxu0 0
    %237 = vmatprep.subr.bf16.mxu0 0
    %238 = vmatpush1.bf16.msra.mxu0 0
    %239 = vmatprep.subr.bf16.mxu0 0
    %240 = vmatpush1.bf16.msra.mxu0 0
    %241 = vmatprep.subr.bf16.mxu0 0
    %242 = vmatpush1.bf16.msra.mxu0 0
    %243 = vmatprep.subr.bf16.mxu0 0
    %244 = vmatpush1.bf16.msra.mxu0 0
    %245 = vmatprep.subr.bf16.mxu0 0
    %246 = vmatpush1.bf16.msra.mxu0 0
    %247 = vmatprep.subr.bf16.mxu0 0
    %248 = vmatpush1.bf16.msra.mxu0 0
    %249 = vmatprep.mubr.bf16.mxu0 0
    %250 = vmatmul.mubr.bf16.gmra.mrb[0].mxu0 %v161
    %v251 = vpop.f32.mrb[0].mxu0
    %v252 = vadd.f32 0.0, %v251
    %v253 = vpop.f32.mrb[0].mxu0
    %v254 = vpop.f32.mrb[0].mxu0
    %v255 = vadd.f32 0.0, %v254
    %v256 = vpop.f32.mrb[0].mxu0
    %257 = vmatprep.mubr.bf16.mxu0 0
    %258 = vmatmul.mubr.bf16.gmra.mrb[0].mxu0 %v162
    %v259 = vpop.f32.mrb[0].mxu0
    %v260 = vadd.f32 0.0, %v259
    %v261 = vpop.f32.mrb[0].mxu0
    %v262 = vpop.f32.mrb[0].mxu0
    %v263 = vadd.f32 0.0, %v262
    %v264 = vpop.f32.mrb[0].mxu0
    %265 = vmatprep.mubr.bf16.mxu0 0
    %266 = vmatmul.mubr.bf16.gmra.mrb[0].mxu0 %v163
    %v267 = vpop.f32.mrb[0].mxu0
    %v268 = vadd.f32 0.0, %v267
    %v269 = vpop.f32.mrb[0].mxu0
    %v270 = vpop.f32.mrb[0].mxu0
    %v271 = vadd.f32 0.0, %v270
    %v272 = vpop.f32.mrb[0].mxu0
    %273 = vmatprep.mubr.bf16.mxu0 0
    %274 = vmatmul.mubr.bf16.gmra.mrb[0].mxu0 %v164
    %v275 = vpop.f32.mrb[0].mxu0
    %v276 = vadd.f32 0.0, %v275
    %v277 = vpop.f32.mrb[0].mxu0
    %v278 = vpop.f32.mrb[0].mxu0
    %v279 = vadd.f32 0.0, %v278
    %v280 = vpop.f32.mrb[0].mxu0
    %281 = vdwg.mxu0
    %v290 = vunpack.c.l.b16 %v97
    %v291 = vunpack.c.l.b16 %v98
    %v292 = vunpack.c.l.b16 %v99
    %v293 = vunpack.c.l.b16 %v100
    %v294 = vunpack.c.l.b16 %v101
    %v295 = vunpack.c.l.b16 %v102
    %v296 = vunpack.c.l.b16 %v103
    %v297 = vunpack.c.l.b16 %v104
    %v298 = vpack.c.b16 %v291, %v290
    %v299 = vpack.c.b16 %v293, %v292
    %v300 = vpack.c.b16 %v295, %v294
    %v301 = vpack.c.b16 %v297, %v296
    %v322 = vunpack.c.l.b16 %v105
    %v323 = vunpack.c.l.b16 %v106
    %v324 = vunpack.c.l.b16 %v107
    %v325 = vunpack.c.l.b16 %v108
    %v326 = vunpack.c.l.b16 %v109
    %v327 = vunpack.c.l.b16 %v110
    %v328 = vunpack.c.l.b16 %v111
    %v329 = vunpack.c.l.b16 %v112
    %v330 = vunpack.c.l.b16 %v113
    %v331 = vunpack.c.l.b16 %v114
    %v332 = vunpack.c.l.b16 %v115
    %v333 = vunpack.c.l.b16 %v116
    %v334 = vunpack.c.l.b16 %v117
    %v335 = vunpack.c.l.b16 %v118
    %v336 = vunpack.c.l.b16 %v119
    %v337 = vunpack.c.l.b16 %v120
    %v338 = vpack.c.b16 %v323, %v322
    %v339 = vpack.c.b16 %v325, %v324
    %v340 = vpack.c.b16 %v327, %v326
    %v341 = vpack.c.b16 %v329, %v328
    %v342 = vpack.c.b16 %v331, %v330
    %v343 = vpack.c.b16 %v333, %v332
    %v344 = vpack.c.b16 %v335, %v334
    %v345 = vpack.c.b16 %v337, %v336
    %354 = vmatprep.subr.bf16.mxu0 0
    %355 = vmatpush1.bf16.msra.mxu0 %v338
    %356 = vmatprep.subr.bf16.mxu0 0
    %357 = vmatpush1.bf16.msra.mxu0 %v339
    %358 = vmatprep.subr.bf16.mxu0 0
    %359 = vmatpush1.bf16.msra.mxu0 %v340
    %360 = vmatprep.subr.bf16.mxu0 0
    %361 = vmatpush1.bf16.msra.mxu0 %v341
    %362 = vmatprep.subr.bf16.mxu0 0
    %363 = vmatpush1.bf16.msra.mxu0 %v342
    %364 = vmatprep.subr.bf16.mxu0 0
    %365 = vmatpush1.bf16.msra.mxu0 %v343
    %366 = vmatprep.subr.bf16.mxu0 0
    %367 = vmatpush1.bf16.msra.mxu0 %v344
    %368 = vmatprep.subr.bf16.mxu0 0
    %369 = vmatpush1.bf16.msra.mxu0 %v345
    %370 = vmatprep.subr.bf16.mxu0 0
    %371 = vmatpush1.bf16.msra.mxu0 0
    %372 = vmatprep.subr.bf16.mxu0 0
    %373 = vmatpush1.bf16.msra.mxu0 0
    %374 = vmatprep.subr.bf16.mxu0 0
    %375 = vmatpush1.bf16.msra.mxu0 0
    %376 = vmatprep.subr.bf16.mxu0 0
    %377 = vmatpush1.bf16.msra.mxu0 0
    %378 = vmatprep.subr.bf16.mxu0 0
    %379 = vmatpush1.bf16.msra.mxu0 0
    %380 = vmatprep.subr.bf16.mxu0 0
    %381 = vmatpush1.bf16.msra.mxu0 0
    %382 = vmatprep.subr.bf16.mxu0 0
    %383 = vmatpush1.bf16.msra.mxu0 0
    %384 = vmatprep.subr.bf16.mxu0 0
    %385 = vmatpush1.bf16.msra.mxu0 0
    %386 = vmatprep.mubr.bf16.mxu0 0
    %387 = vmatmul.mubr.bf16.gmra.mrb[0].mxu0 %v298
    %v388 = vpop.f32.mrb[0].mxu0
    %v389 = vadd.f32 %v252, %v388
    %v390 = vpop.f32.mrb[0].mxu0
    %v391 = vpop.f32.mrb[0].mxu0
    %v392 = vadd.f32 %v255, %v391
    %v393 = vpop.f32.mrb[0].mxu0
    %394 = vmatprep.mubr.bf16.mxu0 0
    %395 = vmatmul.mubr.bf16.gmra.mrb[0].mxu0 %v299
    %v396 = vpop.f32.mrb[0].mxu0
    %v397 = vadd.f32 %v260, %v396
    %v398 = vpop.f32.mrb[0].mxu0
    %v399 = vpop.f32.mrb[0].mxu0
    %v400 = vadd.f32 %v263, %v399
    %v401 = vpop.f32.mrb[0].mxu0
    %402 = vmatprep.mubr.bf16.mxu0 0
    %403 = vmatmul.mubr.bf16.gmra.mrb[0].mxu0 %v300
    %v404 = vpop.f32.mrb[0].mxu0
    %v405 = vadd.f32 %v268, %v404
    %v406 = vpop.f32.mrb[0].mxu0
    %v407 = vpop.f32.mrb[0].mxu0
    %v408 = vadd.f32 %v271, %v407
    %v409 = vpop.f32.mrb[0].mxu0
    %410 = vmatprep.mubr.bf16.mxu0 0
    %411 = vmatmul.mubr.bf16.gmra.mrb[0].mxu0 %v301
    %v412 = vpop.f32.mrb[0].mxu0
    %v413 = vadd.f32 %v276, %v412
    %v414 = vpop.f32.mrb[0].mxu0
    %v415 = vpop.f32.mrb[0].mxu0
    %v416 = vadd.f32 %v279, %v415
    %v417 = vpop.f32.mrb[0].mxu0
    %418 = vdwg.mxu0
    %v419 = vld [vmem:[%s4] sm:$0x1]
    %v421 = vlaneseq
    %v422 = vshrl.u32 %v421, 7
    %v423 = vsub.s32 0, %v422
    %v424 = vrot.slane %v419, %v423
    %v426 = vadd.f32 %v389, %v424
    %v427 = vadd.f32 %v392, %v424
    %v428 = vadd.f32 %v397, %v424
    %v429 = vadd.f32 %v400, %v424
    %v430 = vadd.f32 %v405, %v424
    %v431 = vadd.f32 %v408, %v424
    %v432 = vadd.f32 %v413, %v424
    %v433 = vadd.f32 %v416, %v424
    %v434 = vld [vmem:[%s5] sm:$0x1]
    %v436 = vlaneseq
    %v437 = vshrl.u32 %v436, 7
    %v438 = vsub.s32 0, %v437
    %v439 = vrot.slane %v434, %v438
    %v441 = vmul.f32 %v426, %v439
    %v442 = vmul.f32 %v427, %v439
    %v443 = vmul.f32 %v428, %v439
    %v444 = vmul.f32 %v429, %v439
    %v445 = vmul.f32 %v430, %v439
    %v446 = vmul.f32 %v431, %v439
    %v447 = vmul.f32 %v432, %v439
    %v448 = vmul.f32 %v433, %v439
    %449 = vadd.xlane.f32.xlu0 %v441
    %v450 = vpop.xlane.xlu0 %449
    %451 = vadd.xlane.f32.xlu0 %v442
    %v452 = vpop.xlane.xlu0 %451
    %453 = vadd.xlane.f32.xlu0 %v443
    %v454 = vpop.xlane.xlu0 %453
    %455 = vadd.xlane.f32.xlu0 %v444
    %v456 = vpop.xlane.xlu0 %455
    %457 = vadd.xlane.f32.xlu0 %v445
    %v458 = vpop.xlane.xlu0 %457
    %459 = vadd.xlane.f32.xlu0 %v446
    %v460 = vpop.xlane.xlu0 %459
    %461 = vadd.xlane.f32.xlu0 %v447
    %v462 = vpop.xlane.xlu0 %461
    %463 = vadd.xlane.f32.xlu0 %v448
    %v464 = vpop.xlane.xlu0 %463
    %s465 = sld [smem:[#allocation2]]
    %v466 = vstv %s465
    %v467 = vadd.f32 %v450, %v466
    %v468 = vadd.f32 %v452, %v466
    %v469 = vadd.f32 %v454, %v466
    %v470 = vadd.f32 %v456, %v466
    %v471 = vadd.f32 %v458, %v466
    %v472 = vadd.f32 %v460, %v466
    %v473 = vadd.f32 %v462, %v466
    %v474 = vadd.f32 %v464, %v466
    %v483 = vlaneseq
    %v484 = vand.u32 %v483, 127
    %v485 = vlaneseq
    %v486 = vshrl.u32 %v485, 7
    %v487 = vsub.s32 %v484, %v486
    %v488 = vrot.slane %v467, %v487
    %v489 = vadd.s32 %v484, 4294967288
    %v490 = vlaneseq
    %v491 = vshrl.u32 %v490, 7
    %v492 = vsub.s32 %v489, %v491
    %v493 = vrot.slane %v468, %v492
    %vm494 = vcmask 130112
    %v495 = vsel %vm494, %v493, %v488
    %v496 = vadd.s32 %v484, 4294967280
    %v497 = vlaneseq
    %v498 = vshrl.u32 %v497, 7
    %v499 = vsub.s32 %v496, %v498
    %v500 = vrot.slane %v469, %v499
    %vm501 = vcmask 195712
    %v502 = vsel %vm501, %v500, %v495
    %v503 = vadd.s32 %v484, 4294967272
    %v504 = vlaneseq
    %v505 = vshrl.u32 %v504, 7
    %v506 = vsub.s32 %v503, %v505
    %v507 = vrot.slane %v470, %v506
    %vm508 = vcmask 261312
    %v509 = vsel %vm508, %v507, %v502
    %v510 = vadd.s32 %v484, 4294967264
    %v511 = vlaneseq
    %v512 = vshrl.u32 %v511, 7
    %v513 = vsub.s32 %v510, %v512
    %v514 = vrot.slane %v471, %v513
    %vm515 = vcmask 326912
    %v516 = vsel %vm515, %v514, %v509
    %v517 = vadd.s32 %v484, 4294967256
    %v518 = vlaneseq
    %v519 = vshrl.u32 %v518, 7
    %v520 = vsub.s32 %v517, %v519
    %v521 = vrot.slane %v472, %v520
    %vm522 = vcmask 392512
    %v523 = vsel %vm522, %v521, %v516
    %v524 = vadd.s32 %v484, 4294967248
    %v525 = vlaneseq
    %v526 = vshrl.u32 %v525, 7
    %v527 = vsub.s32 %v524, %v526
    %v528 = vrot.slane %v473, %v527
    %vm529 = vcmask 458112
    %v530 = vsel %vm529, %v528, %v523
    %v531 = vadd.s32 %v484, 4294967240
    %v532 = vlaneseq
    %v533 = vshrl.u32 %v532, 7
    %v534 = vsub.s32 %v531, %v533
    %v535 = vrot.slane %v474, %v534
    %vm536 = vcmask 523712
    %v537 = vsel %vm536, %v535, %v530
    %vm539 = vcmask 516096
    %540 = vst.msk [vmem:[%s7] sm:$0x1] %vm539, %v537
    // Predicated region
    $region71: #{_dense_forward_impl.5} parent=1 // pred_check
      _
    $region72: #{_dense_forward_impl.5} parent=1 // pred_check_branch
      %542 = sbr.rel (0) target = $region74
    $region73: #{_dense_forward_impl.5} parent=1 // pred_region
      _
    $region74: #{_dense_forward_impl.5} parent=1 // pred_fallthru
      _
    // Predicated region
    $region75: #{_dense_forward_impl.5} parent=1 // pred_check
      _
    $region76: #{_dense_forward_impl.5} parent=1 // pred_check_branch
      %544 = sbr.rel (0) target = $region78
    $region77: #{_dense_forward_impl.5} parent=1 // pred_region
      _
    $region78: #{_dense_forward_impl.5} parent=1 // pred_fallthru
      _

// kernel: _dense_forward_impl.3
$region0: #{_dense_forward_impl.3}
  #allocation0 [shape = 'u32[]', space=smem, size = 0x4, offset = 0x4, fixed_abs, tag = 'smem constant byte address 0x4 - core index']
  #allocation1 [shape = 'u32[144,128]{1,0:T(1,128)}', space=vmem, size = 0x12000, scoped, tag = 'internal scratch']
  %s0 = inlined_call_operand.vmem [shape: bf16[64,256], index: 0, kind: input, shape index: {}]
  %s1 = inlined_call_operand.hbm [shape: bf16[256,512], index: 1, kind: input, shape index: {}]
  %s2 = inlined_call_operand.vmem [shape: f32[1,512], index: 2, kind: input, shape index: {}]
  %s3 = inlined_call_operand.vmem [shape: bf16[64,512], index: 3, kind: output, shape index: {}]
  %s4 = sld [smem:[#allocation0]]
  $region26: #{_dense_forward_impl.3} parent=0
    _
  %s6 = ssub.s32 1, %s4
  %s7 = scalar_select 0, %s6, %s4
  $region1: #{_dense_forward_impl.3} parent=0
    #allocation2 [shape = 'u8[262144]{0}', space=vmem, size = 0x40000, scoped, tag = 'input window, operand 1, single buffered']
    #allocation3 [shape = 's32[1]{0}', space=sflag, size = 0x4, scoped, tag = 'scoped memory for _dense_forward_impl.3']
    %8 = vsyncpa [#allocation3], 0
    // Predicated region
    $region2: #{_dense_forward_impl.3} parent=1 // pred_check
      _
    $region3: #{_dense_forward_impl.3} parent=1 // pred_check_branch
      %10 = sbr.rel (0) target = $region5
    $region4: #{_dense_forward_impl.3} parent=1 // pred_region
      _
    $region5: #{_dense_forward_impl.3} parent=1 // pred_fallthru
      _
    // Predicated region
    $region6: #{_dense_forward_impl.3} parent=1 // pred_check
      _
    $region7: #{_dense_forward_impl.3} parent=1 // pred_check_branch
      %12 = sbr.rel (0) target = $region9
    $region8: #{_dense_forward_impl.3} parent=1 // pred_region
      %s14 = ssub.s32 8192, 8192
      %15 = vsyncadd [#allocation3], %s14
      %s16 = sshll.u32 [#allocation2], 4
      %s17 = int_to_ptr.vmem [resolvable:$true] %s16
      %22 = dma.hbm_to_vmem [thread:$0]  %s1, 8192, %s17, [#allocation3], 256, 256, 16
    $region9: #{_dense_forward_impl.3} parent=1 // pred_fallthru
      _
    // Predicated region
    $region10: #{_dense_forward_impl.3} parent=1 // pred_check
      _
    $region11: #{_dense_forward_impl.3} parent=1 // pred_check_branch
      %24 = sbr.rel (0) target = $region13
    $region12: #{_dense_forward_impl.3} parent=1 // pred_region
      _
    $region13: #{_dense_forward_impl.3} parent=1 // pred_fallthru
      _
    // Predicated region
    $region14: #{_dense_forward_impl.3} parent=1 // pred_check
      _
    $region15: #{_dense_forward_impl.3} parent=1 // pred_check_branch
      %26 = sbr.rel (0) target = $region17
    $region16: #{_dense_forward_impl.3} parent=1 // pred_region
      %27 = dma.done [#allocation3], 8192
    $region17: #{_dense_forward_impl.3} parent=1 // pred_fallthru
      _
    %v28 = vld [vmem:[%s0] sm:$0xff]
    %v29 = vld [vmem:[%s0 + $0x8] sm:$0xff]
    %v30 = vld [vmem:[%s0 + $0x10] sm:$0xff]
    %v31 = vld [vmem:[%s0 + $0x18] sm:$0xff]
    %v32 = vld [vmem:[%s0 + $0x20] sm:$0xff]
    %v33 = vld [vmem:[%s0 + $0x28] sm:$0xff]
    %v34 = vld [vmem:[%s0 + $0x30] sm:$0xff]
    %v35 = vld [vmem:[%s0 + $0x38] sm:$0xff]
    %v36 = vld [vmem:[#allocation2] sm:$0xff]
    %v37 = vld [vmem:[#allocation2 + $0x8] sm:$0xff]
    %v38 = vld [vmem:[#allocation2 + $0x10] sm:$0xff]
    %v39 = vld [vmem:[#allocation2 + $0x18] sm:$0xff]
    %v40 = vld [vmem:[#allocation2 + $0x20] sm:$0xff]
    %v41 = vld [vmem:[#allocation2 + $0x28] sm:$0xff]
    %v42 = vld [vmem:[#allocation2 + $0x30] sm:$0xff]
    %v43 = vld [vmem:[#allocation2 + $0x38] sm:$0xff]
    %v44 = vld [vmem:[#allocation2 + $0x40] sm:$0xff]
    %v45 = vld [vmem:[#allocation2 + $0x48] sm:$0xff]
    %v46 = vld [vmem:[#allocation2 + $0x50] sm:$0xff]
    %v47 = vld [vmem:[#allocation2 + $0x58] sm:$0xff]
    %v48 = vld [vmem:[#allocation2 + $0x60] sm:$0xff]
    %v49 = vld [vmem:[#allocation2 + $0x68] sm:$0xff]
    %v50 = vld [vmem:[#allocation2 + $0x70] sm:$0xff]
    %v51 = vld [vmem:[#allocation2 + $0x78] sm:$0xff]
    %v52 = vld [vmem:[#allocation2 + $0x80] sm:$0xff]
    %v53 = vld [vmem:[#allocation2 + $0x88] sm:$0xff]
    %v54 = vld [vmem:[#allocation2 + $0x90] sm:$0xff]
    %v55 = vld [vmem:[#allocation2 + $0x98] sm:$0xff]
    %v56 = vld [vmem:[#allocation2 + $0xa0] sm:$0xff]
    %v57 = vld [vmem:[#allocation2 + $0xa8] sm:$0xff]
    %v58 = vld [vmem:[#allocation2 + $0xb0] sm:$0xff]
    %v59 = vld [vmem:[#allocation2 + $0xb8] sm:$0xff]
    %v60 = vld [vmem:[#allocation2 + $0xc0] sm:$0xff]
    %v61 = vld [vmem:[#allocation2 + $0xc8] sm:$0xff]
    %v62 = vld [vmem:[#allocation2 + $0xd0] sm:$0xff]
    %v63 = vld [vmem:[#allocation2 + $0xd8] sm:$0xff]
    %v64 = vld [vmem:[#allocation2 + $0xe0] sm:$0xff]
    %v65 = vld [vmem:[#allocation2 + $0xe8] sm:$0xff]
    %v66 = vld [vmem:[#allocation2 + $0xf0] sm:$0xff]
    %v67 = vld [vmem:[#allocation2 + $0xf8] sm:$0xff]
    %v68 = vld [vmem:[#allocation2 + $0x100] sm:$0xff]
    %v69 = vld [vmem:[#allocation2 + $0x108] sm:$0xff]
    %v70 = vld [vmem:[#allocation2 + $0x110] sm:$0xff]
    %v71 = vld [vmem:[#allocation2 + $0x118] sm:$0xff]
    %v72 = vld [vmem:[#allocation2 + $0x120] sm:$0xff]
    %v73 = vld [vmem:[#allocation2 + $0x128] sm:$0xff]
    %v74 = vld [vmem:[#allocation2 + $0x130] sm:$0xff]
    %v75 = vld [vmem:[#allocation2 + $0x138] sm:$0xff]
    %v76 = vld [vmem:[#allocation2 + $0x140] sm:$0xff]
    %v77 = vld [vmem:[#allocation2 + $0x148] sm:$0xff]
    %v78 = vld [vmem:[#allocation2 + $0x150] sm:$0xff]
    %v79 = vld [vmem:[#allocation2 + $0x158] sm:$0xff]
    %v80 = vld [vmem:[#allocation2 + $0x160] sm:$0xff]
    %v81 = vld [vmem:[#allocation2 + $0x168] sm:$0xff]
    %v82 = vld [vmem:[#allocation2 + $0x170] sm:$0xff]
    %v83 = vld [vmem:[#allocation2 + $0x178] sm:$0xff]
    %v84 = vld [vmem:[#allocation2 + $0x180] sm:$0xff]
    %v85 = vld [vmem:[#allocation2 + $0x188] sm:$0xff]
    %v86 = vld [vmem:[#allocation2 + $0x190] sm:$0xff]
    %v87 = vld [vmem:[#allocation2 + $0x198] sm:$0xff]
    %v88 = vld [vmem:[#allocation2 + $0x1a0] sm:$0xff]
    %v89 = vld [vmem:[#allocation2 + $0x1a8] sm:$0xff]
    %v90 = vld [vmem:[#allocation2 + $0x1b0] sm:$0xff]
    %v91 = vld [vmem:[#allocation2 + $0x1b8] sm:$0xff]
    %v92 = vld [vmem:[#allocation2 + $0x1c0] sm:$0xff]
    %v93 = vld [vmem:[#allocation2 + $0x1c8] sm:$0xff]
    %v94 = vld [vmem:[#allocation2 + $0x1d0] sm:$0xff]
    %v95 = vld [vmem:[#allocation2 + $0x1d8] sm:$0xff]
    %v96 = vld [vmem:[#allocation2 + $0x1e0] sm:$0xff]
    %v97 = vld [vmem:[#allocation2 + $0x1e8] sm:$0xff]
    %v98 = vld [vmem:[#allocation2 + $0x1f0] sm:$0xff]
    %v99 = vld [vmem:[#allocation2 + $0x1f8] sm:$0xff]
    %v100 = vld [vmem:[%s2] sm:$0xf]
    %v102 = vlaneseq
    %v103 = vshrl.u32 %v102, 7
    %v104 = vsub.s32 0, %v103
    %v105 = vrot.slane %v100, %v104
    %v106 = vlaneseq
    %v107 = vshrl.u32 %v106, 7
    %v108 = vsub.s32 1, %v107
    %v109 = vrot.slane %v100, %v108
    %v110 = vlaneseq
    %v111 = vshrl.u32 %v110, 7
    %v112 = vsub.s32 2, %v111
    %v113 = vrot.slane %v100, %v112
    %v114 = vlaneseq
    %v115 = vshrl.u32 %v114, 7
    %v116 = vsub.s32 3, %v115
    %v117 = vrot.slane %v100, %v116
    %v130 = vunpack.c.l.b16 %v28
    %v131 = vunpack.c.h.b16 %v28
    %v132 = vunpack.c.l.b16 %v29
    %v133 = vunpack.c.h.b16 %v29
    %v134 = vunpack.c.l.b16 %v30
    %v135 = vunpack.c.h.b16 %v30
    %v136 = vunpack.c.l.b16 %v31
    %v137 = vunpack.c.h.b16 %v31
    %v138 = vunpack.c.l.b16 %v32
    %v139 = vunpack.c.h.b16 %v32
    %v140 = vunpack.c.l.b16 %v33
    %v141 = vunpack.c.h.b16 %v33
    %v142 = vunpack.c.l.b16 %v34
    %v143 = vunpack.c.h.b16 %v34
    %v144 = vunpack.c.l.b16 %v35
    %v145 = vunpack.c.h.b16 %v35
    %v146 = vpack.c.b16 %v132, %v130
    %v147 = vpack.c.b16 %v133, %v131
    %v148 = vpack.c.b16 %v136, %v134
    %v149 = vpack.c.b16 %v137, %v135
    %v150 = vpack.c.b16 %v140, %v138
    %v151 = vpack.c.b16 %v141, %v139
    %v152 = vpack.c.b16 %v144, %v142
    %v153 = vpack.c.b16 %v145, %v143
    %v226 = vunpack.c.l.b16 %v36
    %v227 = vunpack.c.h.b16 %v36
    %v228 = vunpack.c.l.b16 %v37
    %v229 = vunpack.c.h.b16 %v37
    %v230 = vunpack.c.l.b16 %v38
    %v231 = vunpack.c.h.b16 %v38
    %v232 = vunpack.c.l.b16 %v39
    %v233 = vunpack.c.h.b16 %v39
    %v234 = vunpack.c.l.b16 %v40
    %v235 = vunpack.c.h.b16 %v40
    %v236 = vunpack.c.l.b16 %v41
    %v237 = vunpack.c.h.b16 %v41
    %v238 = vunpack.c.l.b16 %v42
    %v239 = vunpack.c.h.b16 %v42
    %v240 = vunpack.c.l.b16 %v43
    %v241 = vunpack.c.h.b16 %v43
    %v242 = vunpack.c.l.b16 %v44
    %v243 = vunpack.c.h.b16 %v44
    %v244 = vunpack.c.l.b16 %v45
    %v245 = vunpack.c.h.b16 %v45
    %v246 = vunpack.c.l.b16 %v46
    %v247 = vunpack.c.h.b16 %v46
    %v248 = vunpack.c.l.b16 %v47
    %v249 = vunpack.c.h.b16 %v47
    %v250 = vunpack.c.l.b16 %v48
    %v251 = vunpack.c.h.b16 %v48
    %v252 = vunpack.c.l.b16 %v49
    %v253 = vunpack.c.h.b16 %v49
    %v254 = vunpack.c.l.b16 %v50
    %v255 = vunpack.c.h.b16 %v50
    %v256 = vunpack.c.l.b16 %v51
    %v257 = vunpack.c.h.b16 %v51
    %v258 = vunpack.c.l.b16 %v52
    %v259 = vunpack.c.h.b16 %v52
    %v260 = vunpack.c.l.b16 %v53
    %v261 = vunpack.c.h.b16 %v53
    %v262 = vunpack.c.l.b16 %v54
    %v263 = vunpack.c.h.b16 %v54
    %v264 = vunpack.c.l.b16 %v55
    %v265 = vunpack.c.h.b16 %v55
    %v266 = vunpack.c.l.b16 %v56
    %v267 = vunpack.c.h.b16 %v56
    %v268 = vunpack.c.l.b16 %v57
    %v269 = vunpack.c.h.b16 %v57
    %v270 = vunpack.c.l.b16 %v58
    %v271 = vunpack.c.h.b16 %v58
    %v272 = vunpack.c.l.b16 %v59
    %v273 = vunpack.c.h.b16 %v59
    %v274 = vunpack.c.l.b16 %v60
    %v275 = vunpack.c.h.b16 %v60
    %v276 = vunpack.c.l.b16 %v61
    %v277 = vunpack.c.h.b16 %v61
    %v278 = vunpack.c.l.b16 %v62
    %v279 = vunpack.c.h.b16 %v62
    %v280 = vunpack.c.l.b16 %v63
    %v281 = vunpack.c.h.b16 %v63
    %v282 = vunpack.c.l.b16 %v64
    %v283 = vunpack.c.h.b16 %v64
    %v284 = vunpack.c.l.b16 %v65
    %v285 = vunpack.c.h.b16 %v65
    %v286 = vunpack.c.l.b16 %v66
    %v287 = vunpack.c.h.b16 %v66
    %v288 = vunpack.c.l.b16 %v67
    %v289 = vunpack.c.h.b16 %v67
    %v290 = vunpack.c.l.b16 %v68
    %v291 = vunpack.c.h.b16 %v68
    %v292 = vunpack.c.l.b16 %v69
    %v293 = vunpack.c.h.b16 %v69
    %v294 = vunpack.c.l.b16 %v70
    %v295 = vunpack.c.h.b16 %v70
    %v296 = vunpack.c.l.b16 %v71
    %v297 = vunpack.c.h.b16 %v71
    %v298 = vunpack.c.l.b16 %v72
    %v299 = vunpack.c.h.b16 %v72
    %v300 = vunpack.c.l.b16 %v73
    %v301 = vunpack.c.h.b16 %v73
    %v302 = vunpack.c.l.b16 %v74
    %v303 = vunpack.c.h.b16 %v74
    %v304 = vunpack.c.l.b16 %v75
    %v305 = vunpack.c.h.b16 %v75
    %v306 = vunpack.c.l.b16 %v76
    %v307 = vunpack.c.h.b16 %v76
    %v308 = vunpack.c.l.b16 %v77
    %v309 = vunpack.c.h.b16 %v77
    %v310 = vunpack.c.l.b16 %v78
    %v311 = vunpack.c.h.b16 %v78
    %v312 = vunpack.c.l.b16 %v79
    %v313 = vunpack.c.h.b16 %v79
    %v314 = vunpack.c.l.b16 %v80
    %v315 = vunpack.c.h.b16 %v80
    %v316 = vunpack.c.l.b16 %v81
    %v317 = vunpack.c.h.b16 %v81
    %v318 = vunpack.c.l.b16 %v82
    %v319 = vunpack.c.h.b16 %v82
    %v320 = vunpack.c.l.b16 %v83
    %v321 = vunpack.c.h.b16 %v83
    %v322 = vunpack.c.l.b16 %v84
    %v323 = vunpack.c.h.b16 %v84
    %v324 = vunpack.c.l.b16 %v85
    %v325 = vunpack.c.h.b16 %v85
    %v326 = vunpack.c.l.b16 %v86
    %v327 = vunpack.c.h.b16 %v86
    %v328 = vunpack.c.l.b16 %v87
    %v329 = vunpack.c.h.b16 %v87
    %v330 = vunpack.c.l.b16 %v88
    %v331 = vunpack.c.h.b16 %v88
    %v332 = vunpack.c.l.b16 %v89
    %v333 = vunpack.c.h.b16 %v89
    %v334 = vunpack.c.l.b16 %v90
    %v335 = vunpack.c.h.b16 %v90
    %v336 = vunpack.c.l.b16 %v91
    %v337 = vunpack.c.h.b16 %v91
    %v338 = vunpack.c.l.b16 %v92
    %v339 = vunpack.c.h.b16 %v92
    %v340 = vunpack.c.l.b16 %v93
    %v341 = vunpack.c.h.b16 %v93
    %v342 = vunpack.c.l.b16 %v94
    %v343 = vunpack.c.h.b16 %v94
    %v344 = vunpack.c.l.b16 %v95
    %v345 = vunpack.c.h.b16 %v95
    %v346 = vunpack.c.l.b16 %v96
    %v347 = vunpack.c.h.b16 %v96
    %v348 = vunpack.c.l.b16 %v97
    %v349 = vunpack.c.h.b16 %v97
    %v350 = vunpack.c.l.b16 %v98
    %v351 = vunpack.c.h.b16 %v98
    %v352 = vunpack.c.l.b16 %v99
    %v353 = vunpack.c.h.b16 %v99
    %v354 = vpack.c.b16 %v230, %v226
    %v355 = vpack.c.b16 %v231, %v227
    %v356 = vpack.c.b16 %v232, %v228
    %v357 = vpack.c.b16 %v233, %v229
    %v358 = vpack.c.b16 %v238, %v234
    %v359 = vpack.c.b16 %v239, %v235
    %v360 = vpack.c.b16 %v240, %v236
    %v361 = vpack.c.b16 %v241, %v237
    %v362 = vpack.c.b16 %v246, %v242
    %v363 = vpack.c.b16 %v247, %v243
    %v364 = vpack.c.b16 %v248, %v244
    %v365 = vpack.c.b16 %v249, %v245
    %v366 = vpack.c.b16 %v254, %v250
    %v367 = vpack.c.b16 %v255, %v251
    %v368 = vpack.c.b16 %v256, %v252
    %v369 = vpack.c.b16 %v257, %v253
    %v370 = vpack.c.b16 %v262, %v258
    %v371 = vpack.c.b16 %v263, %v259
    %v372 = vpack.c.b16 %v264, %v260
    %v373 = vpack.c.b16 %v265, %v261
    %v374 = vpack.c.b16 %v270, %v266
    %v375 = vpack.c.b16 %v271, %v267
    %v376 = vpack.c.b16 %v272, %v268
    %v377 = vpack.c.b16 %v273, %v269
    %v378 = vpack.c.b16 %v278, %v274
    %v379 = vpack.c.b16 %v279, %v275
    %v380 = vpack.c.b16 %v280, %v276
    %v381 = vpack.c.b16 %v281, %v277
    %v382 = vpack.c.b16 %v286, %v282
    %v383 = vpack.c.b16 %v287, %v283
    %v384 = vpack.c.b16 %v288, %v284
    %v385 = vpack.c.b16 %v289, %v285
    %v386 = vpack.c.b16 %v294, %v290
    %v387 = vpack.c.b16 %v295, %v291
    %v388 = vpack.c.b16 %v296, %v292
    %v389 = vpack.c.b16 %v297, %v293
    %v390 = vpack.c.b16 %v302, %v298
    %v391 = vpack.c.b16 %v303, %v299
    %v392 = vpack.c.b16 %v304, %v300
    %v393 = vpack.c.b16 %v305, %v301
    %v394 = vpack.c.b16 %v310, %v306
    %v395 = vpack.c.b16 %v311, %v307
    %v396 = vpack.c.b16 %v312, %v308
    %v397 = vpack.c.b16 %v313, %v309
    %v398 = vpack.c.b16 %v318, %v314
    %v399 = vpack.c.b16 %v319, %v315
    %v400 = vpack.c.b16 %v320, %v316
    %v401 = vpack.c.b16 %v321, %v317
    %v402 = vpack.c.b16 %v326, %v322
    %v403 = vpack.c.b16 %v327, %v323
    %v404 = vpack.c.b16 %v328, %v324
    %v405 = vpack.c.b16 %v329, %v325
    %v406 = vpack.c.b16 %v334, %v330
    %v407 = vpack.c.b16 %v335, %v331
    %v408 = vpack.c.b16 %v336, %v332
    %v409 = vpack.c.b16 %v337, %v333
    %v410 = vpack.c.b16 %v342, %v338
    %v411 = vpack.c.b16 %v343, %v339
    %v412 = vpack.c.b16 %v344, %v340
    %v413 = vpack.c.b16 %v345, %v341
    %v414 = vpack.c.b16 %v350, %v346
    %v415 = vpack.c.b16 %v351, %v347
    %v416 = vpack.c.b16 %v352, %v348
    %v417 = vpack.c.b16 %v353, %v349
    %482 = vmatprep.subr.bf16.mxu0 %v355
    %483 = vmatpush1.bf16.msra.mxu0 %v354
    %484 = vmatprep.subr.bf16.mxu0 %v359
    %485 = vmatpush1.bf16.msra.mxu0 %v358
    %486 = vmatprep.subr.bf16.mxu0 %v363
    %487 = vmatpush1.bf16.msra.mxu0 %v362
    %488 = vmatprep.subr.bf16.mxu0 %v367
    %489 = vmatpush1.bf16.msra.mxu0 %v366
    %490 = vmatprep.subr.bf16.mxu0 %v371
    %491 = vmatpush1.bf16.msra.mxu0 %v370
    %492 = vmatprep.subr.bf16.mxu0 %v375
    %493 = vmatpush1.bf16.msra.mxu0 %v374
    %494 = vmatprep.subr.bf16.mxu0 %v379
    %495 = vmatpush1.bf16.msra.mxu0 %v378
    %496 = vmatprep.subr.bf16.mxu0 %v383
    %497 = vmatpush1.bf16.msra.mxu0 %v382
    %498 = vmatprep.subr.bf16.mxu0 %v387
    %499 = vmatpush1.bf16.msra.mxu0 %v386
    %500 = vmatprep.subr.bf16.mxu0 %v391
    %501 = vmatpush1.bf16.msra.mxu0 %v390
    %502 = vmatprep.subr.bf16.mxu0 %v395
    %503 = vmatpush1.bf16.msra.mxu0 %v394
    %504 = vmatprep.subr.bf16.mxu0 %v399
    %505 = vmatpush1.bf16.msra.mxu0 %v398
    %506 = vmatprep.subr.bf16.mxu0 %v403
    %507 = vmatpush1.bf16.msra.mxu0 %v402
    %508 = vmatprep.subr.bf16.mxu0 %v407
    %509 = vmatpush1.bf16.msra.mxu0 %v406
    %510 = vmatprep.subr.bf16.mxu0 %v411
    %511 = vmatpush1.bf16.msra.mxu0 %v410
    %512 = vmatprep.subr.bf16.mxu0 %v415
    %513 = vmatpush1.bf16.msra.mxu0 %v414
    %514 = vmatprep.mubr.bf16.mxu0 %v147
    %515 = vmatmul.mubr.bf16.gmra.mrb[0].mxu0 %v146
    %v516 = vpop.f32.mrb[0].mxu0
    %v517 = vadd.f32 %v105, %v516
    %v518 = vpop.f32.mrb[0].mxu0
    %v519 = vadd.f32 %v109, %v518
    %v520 = vpop.f32.mrb[0].mxu0
    %v521 = vadd.f32 %v105, %v520
    %v522 = vpop.f32.mrb[0].mxu0
    %v523 = vadd.f32 %v109, %v522
    %524 = vmatprep.mubr.bf16.mxu0 %v149
    %525 = vmatmul.mubr.bf16.gmra.mrb[0].mxu0 %v148
    %v526 = vpop.f32.mrb[0].mxu0
    %v527 = vadd.f32 %v105, %v526
    %v528 = vpop.f32.mrb[0].mxu0
    %v529 = vadd.f32 %v109, %v528
    %v530 = vpop.f32.mrb[0].mxu0
    %v531 = vadd.f32 %v105, %v530
    %v532 = vpop.f32.mrb[0].mxu0
    %v533 = vadd.f32 %v109, %v532
    %534 = vmatprep.mubr.bf16.mxu0 %v151
    %535 = vmatmul.mubr.bf16.gmra.mrb[0].mxu0 %v150
    %v536 = vpop.f32.mrb[0].mxu0
    %v537 = vadd.f32 %v105, %v536
    %v538 = vpop.f32.mrb[0].mxu0
    %v539 = vadd.f32 %v109, %v538
    %v540 = vpop.f32.mrb[0].mxu0
    %v541 = vadd.f32 %v105, %v540
    %v542 = vpop.f32.mrb[0].mxu0
    %v543 = vadd.f32 %v109, %v542
    %544 = vmatprep.mubr.bf16.mxu0 %v153
    %545 = vmatmul.mubr.bf16.gmra.mrb[0].mxu0 %v152
    %v546 = vpop.f32.mrb[0].mxu0
    %v547 = vadd.f32 %v105, %v546
    %v548 = vpop.f32.mrb[0].mxu0
    %v549 = vadd.f32 %v109, %v548
    %v550 = vpop.f32.mrb[0].mxu0
    %v551 = vadd.f32 %v105, %v550
    %v552 = vpop.f32.mrb[0].mxu0
    %v553 = vadd.f32 %v109, %v552
    %554 = vdwg.mxu0
    %555 = vmatprep.subr.bf16.mxu0 %v357
    %556 = vmatpush1.bf16.msra.mxu0 %v356
    %557 = vmatprep.subr.bf16.mxu0 %v361
    %558 = vmatpush1.bf16.msra.mxu0 %v360
    %559 = vmatprep.subr.bf16.mxu0 %v365
    %560 = vmatpush1.bf16.msra.mxu0 %v364
    %561 = vmatprep.subr.bf16.mxu0 %v369
    %562 = vmatpush1.bf16.msra.mxu0 %v368
    %563 = vmatprep.subr.bf16.mxu0 %v373
    %564 = vmatpush1.bf16.msra.mxu0 %v372
    %565 = vmatprep.subr.bf16.mxu0 %v377
    %566 = vmatpush1.bf16.msra.mxu0 %v376
    %567 = vmatprep.subr.bf16.mxu0 %v381
    %568 = vmatpush1.bf16.msra.mxu0 %v380
    %569 = vmatprep.subr.bf16.mxu0 %v385
    %570 = vmatpush1.bf16.msra.mxu0 %v384
    %571 = vmatprep.subr.bf16.mxu0 %v389
    %572 = vmatpush1.bf16.msra.mxu0 %v388
    %573 = vmatprep.subr.bf16.mxu0 %v393
    %574 = vmatpush1.bf16.msra.mxu0 %v392
    %575 = vmatprep.subr.bf16.mxu0 %v397
    %576 = vmatpush1.bf16.msra.mxu0 %v396
    %577 = vmatprep.subr.bf16.mxu0 %v401
    %578 = vmatpush1.bf16.msra.mxu0 %v400
    %579 = vmatprep.subr.bf16.mxu0 %v405
    %580 = vmatpush1.bf16.msra.mxu0 %v404
    %581 = vmatprep.subr.bf16.mxu0 %v409
    %582 = vmatpush1.bf16.msra.mxu0 %v408
    %583 = vmatprep.subr.bf16.mxu0 %v413
    %584 = vmatpush1.bf16.msra.mxu0 %v412
    %585 = vmatprep.subr.bf16.mxu0 %v417
    %586 = vmatpush1.bf16.msra.mxu0 %v416
    %587 = vmatprep.mubr.bf16.mxu0 %v147
    %588 = vmatmul.mubr.bf16.gmra.mrb[0].mxu0 %v146
    %v589 = vpop.f32.mrb[0].mxu0
    %v590 = vadd.f32 %v113, %v589
    %v591 = vpop.f32.mrb[0].mxu0
    %v592 = vadd.f32 %v117, %v591
    %v593 = vpop.f32.mrb[0].mxu0
    %v594 = vadd.f32 %v113, %v593
    %v595 = vpop.f32.mrb[0].mxu0
    %v596 = vadd.f32 %v117, %v595
    %597 = vmatprep.mubr.bf16.mxu0 %v149
    %598 = vmatmul.mubr.bf16.gmra.mrb[0].mxu0 %v148
    %v599 = vpop.f32.mrb[0].mxu0
    %v600 = vadd.f32 %v113, %v599
    %v601 = vpop.f32.mrb[0].mxu0
    %v602 = vadd.f32 %v117, %v601
    %v603 = vpop.f32.mrb[0].mxu0
    %v604 = vadd.f32 %v113, %v603
    %v605 = vpop.f32.mrb[0].mxu0
    %v606 = vadd.f32 %v117, %v605
    %607 = vmatprep.mubr.bf16.mxu0 %v151
    %608 = vmatmul.mubr.bf16.gmra.mrb[0].mxu0 %v150
    %v609 = vpop.f32.mrb[0].mxu0
    %v610 = vadd.f32 %v113, %v609
    %v611 = vpop.f32.mrb[0].mxu0
    %v612 = vadd.f32 %v117, %v611
    %v613 = vpop.f32.mrb[0].mxu0
    %v614 = vadd.f32 %v113, %v613
    %v615 = vpop.f32.mrb[0].mxu0
    %v616 = vadd.f32 %v117, %v615
    %617 = vmatprep.mubr.bf16.mxu0 %v153
    %618 = vmatmul.mubr.bf16.gmra.mrb[0].mxu0 %v152
    %v619 = vpop.f32.mrb[0].mxu0
    %v620 = vadd.f32 %v113, %v619
    %v621 = vpop.f32.mrb[0].mxu0
    %v622 = vadd.f32 %v117, %v621
    %v623 = vpop.f32.mrb[0].mxu0
    %v624 = vadd.f32 %v113, %v623
    %v625 = vpop.f32.mrb[0].mxu0
    %v626 = vadd.f32 %v117, %v625
    %627 = vdwg.mxu0
    %v628 = vpack.c.bf16 %v521, %v517
    %v629 = vpack.c.bf16 %v523, %v519
    %v630 = vpack.c.bf16 %v594, %v590
    %v631 = vpack.c.bf16 %v596, %v592
    %v632 = vpack.c.bf16 %v531, %v527
    %v633 = vpack.c.bf16 %v533, %v529
    %v634 = vpack.c.bf16 %v604, %v600
    %v635 = vpack.c.bf16 %v606, %v602
    %v636 = vpack.c.bf16 %v541, %v537
    %v637 = vpack.c.bf16 %v543, %v539
    %v638 = vpack.c.bf16 %v614, %v610
    %v639 = vpack.c.bf16 %v616, %v612
    %v640 = vpack.c.bf16 %v551, %v547
    %v641 = vpack.c.bf16 %v553, %v549
    %v642 = vpack.c.bf16 %v624, %v620
    %v643 = vpack.c.bf16 %v626, %v622
    %v660 = vunpack.c.l.b16 %v628
    %v661 = vunpack.c.l.b16 %v629
    %v662 = vunpack.c.l.b16 %v630
    %v663 = vunpack.c.l.b16 %v631
    %v664 = vunpack.c.h.b16 %v628
    %v665 = vunpack.c.h.b16 %v629
    %v666 = vunpack.c.h.b16 %v630
    %v667 = vunpack.c.h.b16 %v631
    %v668 = vunpack.c.l.b16 %v632
    %v669 = vunpack.c.l.b16 %v633
    %v670 = vunpack.c.l.b16 %v634
    %v671 = vunpack.c.l.b16 %v635
    %v672 = vunpack.c.h.b16 %v632
    %v673 = vunpack.c.h.b16 %v633
    %v674 = vunpack.c.h.b16 %v634
    %v675 = vunpack.c.h.b16 %v635
    %v676 = vunpack.c.l.b16 %v636
    %v677 = vunpack.c.l.b16 %v637
    %v678 = vunpack.c.l.b16 %v638
    %v679 = vunpack.c.l.b16 %v639
    %v680 = vunpack.c.h.b16 %v636
    %v681 = vunpack.c.h.b16 %v637
    %v682 = vunpack.c.h.b16 %v638
    %v683 = vunpack.c.h.b16 %v639
    %v684 = vunpack.c.l.b16 %v640
    %v685 = vunpack.c.l.b16 %v641
    %v686 = vunpack.c.l.b16 %v642
    %v687 = vunpack.c.l.b16 %v643
    %v688 = vunpack.c.h.b16 %v640
    %v689 = vunpack.c.h.b16 %v641
    %v690 = vunpack.c.h.b16 %v642
    %v691 = vunpack.c.h.b16 %v643
    %v692 = vpack.c.b16 %v661, %v660
    %v693 = vpack.c.b16 %v663, %v662
    %v694 = vpack.c.b16 %v665, %v664
    %v695 = vpack.c.b16 %v667, %v666
    %v696 = vpack.c.b16 %v669, %v668
    %v697 = vpack.c.b16 %v671, %v670
    %v698 = vpack.c.b16 %v673, %v672
    %v699 = vpack.c.b16 %v675, %v674
    %v700 = vpack.c.b16 %v677, %v676
    %v701 = vpack.c.b16 %v679, %v678
    %v702 = vpack.c.b16 %v681, %v680
    %v703 = vpack.c.b16 %v683, %v682
    %v704 = vpack.c.b16 %v685, %v684
    %v705 = vpack.c.b16 %v687, %v686
    %v706 = vpack.c.b16 %v689, %v688
    %v707 = vpack.c.b16 %v691, %v690
    %724 = vst [vmem:[%s3] sm:$0xff] %v692
    %725 = vst [vmem:[%s3 + $0x8] sm:$0xff] %v693
    %726 = vst [vmem:[%s3 + $0x10] sm:$0xff] %v694
    %727 = vst [vmem:[%s3 + $0x18] sm:$0xff] %v695
    %728 = vst [vmem:[%s3 + $0x20] sm:$0xff] %v696
    %729 = vst [vmem:[%s3 + $0x28] sm:$0xff] %v697
    %730 = vst [vmem:[%s3 + $0x30] sm:$0xff] %v698
    %731 = vst [vmem:[%s3 + $0x38] sm:$0xff] %v699
    %732 = vst [vmem:[%s3 + $0x40] sm:$0xff] %v700
    %733 = vst [vmem:[%s3 + $0x48] sm:$0xff] %v701
    %734 = vst [vmem:[%s3 + $0x50] sm:$0xff] %v702
    %735 = vst [vmem:[%s3 + $0x58] sm:$0xff] %v703
    %736 = vst [vmem:[%s3 + $0x60] sm:$0xff] %v704
    %737 = vst [vmem:[%s3 + $0x68] sm:$0xff] %v705
    %738 = vst [vmem:[%s3 + $0x70] sm:$0xff] %v706
    %739 = vst [vmem:[%s3 + $0x78] sm:$0xff] %v707
    // Predicated region
    $region18: #{_dense_forward_impl.3} parent=1 // pred_check
      _
    $region19: #{_dense_forward_impl.3} parent=1 // pred_check_branch
      %741 = sbr.rel (0) target = $region21
    $region20: #{_dense_forward_impl.3} parent=1 // pred_region
      _
    $region21: #{_dense_forward_impl.3} parent=1 // pred_fallthru
      _
    // Predicated region
    $region22: #{_dense_forward_impl.3} parent=1 // pred_check
      _
    $region23: #{_dense_forward_impl.3} parent=1 // pred_check_branch
      %743 = sbr.rel (0) target = $region25
    $region24: #{_dense_forward_impl.3} parent=1 // pred_region
      _
    $region25: #{_dense_forward_impl.3} parent=1 // pred_fallthru
      _
    %744 = vsyncpa [#allocation3], 1

// kernel: _dense_forward_impl.4
$region0: #{_dense_forward_impl.4}
  #allocation0 [shape = 'u32[]', space=smem, size = 0x4, offset = 0x4, fixed_abs, tag = 'smem constant byte address 0x4 - core index']
  #allocation1 [shape = 'u32[144,128]{1,0:T(1,128)}', space=vmem, size = 0x12000, scoped, tag = 'internal scratch']
  #allocation2 [shape = 'f32[8,128]{1,0:T(8,128)}', space=vmem, size = 0x1000, scoped, tag = 'scratch operand']
  #allocation3 [shape = 'f32[8,128]{1,0:T(8,128)}', space=vmem, size = 0x1000, scoped, tag = 'scratch operand']
  %s0 = inlined_call_operand.vmem [shape: bf16[8,8,512], index: 0, kind: input, shape index: {}]
  %s1 = inlined_call_operand.vmem [shape: bf16[128,512], index: 1, kind: input, shape index: {}]
  %s2 = inlined_call_operand.vmem [shape: bf16[8,8,128], index: 2, kind: output, shape index: {}]
  %s3 = sld [smem:[#allocation0]]
  $region22: #{_dense_forward_impl.4} parent=0
    _
  %s5 = ssub.s32 1, %s3
  %s6 = scalar_select 0, %s5, %s3
  // Predicated region
  $region2: #{_dense_forward_impl.4} parent=0 // pred_check
    _
  $region3: #{_dense_forward_impl.4} parent=0 // pred_check_branch
    %8 = sbr.rel (0) target = $region5
  $region4: #{_dense_forward_impl.4} parent=0 // pred_region
    _
  $region5: #{_dense_forward_impl.4} parent=0 // pred_fallthru
    _
  // Predicated region
  $region6: #{_dense_forward_impl.4} parent=0 // pred_check
    _
  $region7: #{_dense_forward_impl.4} parent=0 // pred_check_branch
    %10 = sbr.rel (0) target = $region9
  $region8: #{_dense_forward_impl.4} parent=0 // pred_region
    _
  $region9: #{_dense_forward_impl.4} parent=0 // pred_fallthru
    _
  %p12 = scmp.eq.s32.totalorder 0, 0
  // Predicated region
  $region10: #{_dense_forward_impl.4} parent=0 // pred_check
    %p13 = pneg %p12
  $region11: #{_dense_forward_impl.4} parent=0 // pred_check_branch
    %15 = sbr.rel (%p13) target = $region13
  $region12: #{_dense_forward_impl.4} parent=0 // pred_region
    %16 = vst [vmem:[#allocation2] sm:$0xff] 0.0
    %17 = vst [vmem:[#allocation3] sm:$0xff] 0.0
  $region13: #{_dense_forward_impl.4} parent=0 // pred_fallthru
    _
  %v18 = vld [vmem:[#allocation2] sm:$0xff]
  %v19 = vld [vmem:[%s0] sm:$0xff]
  %v20 = vld [vmem:[%s0 + $0x8] sm:$0xff]
  %v21 = vunpack.c.l.bf16 %v19
  %v22 = vunpack.c.h.bf16 %v19
  %v23 = vunpack.c.l.bf16 %v20
  %v24 = vunpack.c.h.bf16 %v20
  %v25 = vpack.c.bf16 %v18, %v18
  %v26 = vld [vmem:[%s1] sm:$0xff]
  %v27 = vld [vmem:[%s1 + $0x8] sm:$0xff]
  %v28 = vld [vmem:[%s1 + $0x10] sm:$0xff]
  %v29 = vld [vmem:[%s1 + $0x18] sm:$0xff]
  %v30 = vld [vmem:[%s1 + $0x20] sm:$0xff]
  %v31 = vld [vmem:[%s1 + $0x28] sm:$0xff]
  %v32 = vld [vmem:[%s1 + $0x30] sm:$0xff]
  %v33 = vld [vmem:[%s1 + $0x38] sm:$0xff]
  %v34 = vld [vmem:[%s1 + $0x40] sm:$0xff]
  %v35 = vld [vmem:[%s1 + $0x48] sm:$0xff]
  %v36 = vld [vmem:[%s1 + $0x50] sm:$0xff]
  %v37 = vld [vmem:[%s1 + $0x58] sm:$0xff]
  %v38 = vld [vmem:[%s1 + $0x60] sm:$0xff]
  %v39 = vld [vmem:[%s1 + $0x68] sm:$0xff]
  %v40 = vld [vmem:[%s1 + $0x70] sm:$0xff]
  %v41 = vld [vmem:[%s1 + $0x78] sm:$0xff]
  %v42 = vld [vmem:[%s1 + $0x80] sm:$0xff]
  %v43 = vld [vmem:[%s1 + $0x88] sm:$0xff]
  %v44 = vld [vmem:[%s1 + $0x90] sm:$0xff]
  %v45 = vld [vmem:[%s1 + $0x98] sm:$0xff]
  %v46 = vld [vmem:[%s1 + $0xa0] sm:$0xff]
  %v47 = vld [vmem:[%s1 + $0xa8] sm:$0xff]
  %v48 = vld [vmem:[%s1 + $0xb0] sm:$0xff]
  %v49 = vld [vmem:[%s1 + $0xb8] sm:$0xff]
  %v50 = vld [vmem:[%s1 + $0xc0] sm:$0xff]
  %v51 = vld [vmem:[%s1 + $0xc8] sm:$0xff]
  %v52 = vld [vmem:[%s1 + $0xd0] sm:$0xff]
  %v53 = vld [vmem:[%s1 + $0xd8] sm:$0xff]
  %v54 = vld [vmem:[%s1 + $0xe0] sm:$0xff]
  %v55 = vld [vmem:[%s1 + $0xe8] sm:$0xff]
  %v56 = vld [vmem:[%s1 + $0xf0] sm:$0xff]
  %v57 = vld [vmem:[%s1 + $0xf8] sm:$0xff]
  %v90 = vunpack.c.l.b16 %v26
  %v91 = vunpack.c.h.b16 %v26
  %v92 = vunpack.c.l.b16 %v27
  %v93 = vunpack.c.h.b16 %v27
  %v94 = vunpack.c.l.b16 %v28
  %v95 = vunpack.c.h.b16 %v28
  %v96 = vunpack.c.l.b16 %v29
  %v97 = vunpack.c.h.b16 %v29
  %v98 = vunpack.c.l.b16 %v30
  %v99 = vunpack.c.h.b16 %v30
  %v100 = vunpack.c.l.b16 %v31
  %v101 = vunpack.c.h.b16 %v31
  %v102 = vunpack.c.l.b16 %v32
  %v103 = vunpack.c.h.b16 %v32
  %v104 = vunpack.c.l.b16 %v33
  %v105 = vunpack.c.h.b16 %v33
  %v106 = vunpack.c.l.b16 %v34
  %v107 = vunpack.c.h.b16 %v34
  %v108 = vunpack.c.l.b16 %v35
  %v109 = vunpack.c.h.b16 %v35
  %v110 = vunpack.c.l.b16 %v36
  %v111 = vunpack.c.h.b16 %v36
  %v112 = vunpack.c.l.b16 %v37
  %v113 = vunpack.c.h.b16 %v37
  %v114 = vunpack.c.l.b16 %v38
  %v115 = vunpack.c.h.b16 %v38
  %v116 = vunpack.c.l.b16 %v39
  %v117 = vunpack.c.h.b16 %v39
  %v118 = vunpack.c.l.b16 %v40
  %v119 = vunpack.c.h.b16 %v40
  %v120 = vunpack.c.l.b16 %v41
  %v121 = vunpack.c.h.b16 %v41
  %v122 = vunpack.c.l.b16 %v42
  %v123 = vunpack.c.h.b16 %v42
  %v124 = vunpack.c.l.b16 %v43
  %v125 = vunpack.c.h.b16 %v43
  %v126 = vunpack.c.l.b16 %v44
  %v127 = vunpack.c.h.b16 %v44
  %v128 = vunpack.c.l.b16 %v45
  %v129 = vunpack.c.h.b16 %v45
  %v130 = vunpack.c.l.b16 %v46
  %v131 = vunpack.c.h.b16 %v46
  %v132 = vunpack.c.l.b16 %v47
  %v133 = vunpack.c.h.b16 %v47
  %v134 = vunpack.c.l.b16 %v48
  %v135 = vunpack.c.h.b16 %v48
  %v136 = vunpack.c.l.b16 %v49
  %v137 = vunpack.c.h.b16 %v49
  %v138 = vunpack.c.l.b16 %v50
  %v139 = vunpack.c.h.b16 %v50
  %v140 = vunpack.c.l.b16 %v51
  %v141 = vunpack.c.h.b16 %v51
  %v142 = vunpack.c.l.b16 %v52
  %v143 = vunpack.c.h.b16 %v52
  %v144 = vunpack.c.l.b16 %v53
  %v145 = vunpack.c.h.b16 %v53
  %v146 = vunpack.c.l.b16 %v54
  %v147 = vunpack.c.h.b16 %v54
  %v148 = vunpack.c.l.b16 %v55
  %v149 = vunpack.c.h.b16 %v55
  %v150 = vunpack.c.l.b16 %v56
  %v151 = vunpack.c.h.b16 %v56
  %v152 = vunpack.c.l.b16 %v57
  %v153 = vunpack.c.h.b16 %v57
  %v154 = vpack.c.b16 %v94, %v90
  %v155 = vpack.c.b16 %v95, %v91
  %v156 = vpack.c.b16 %v96, %v92
  %v157 = vpack.c.b16 %v97, %v93
  %v158 = vpack.c.b16 %v102, %v98
  %v159 = vpack.c.b16 %v103, %v99
  %v160 = vpack.c.b16 %v104, %v100
  %v161 = vpack.c.b16 %v105, %v101
  %v162 = vpack.c.b16 %v110, %v106
  %v163 = vpack.c.b16 %v111, %v107
  %v164 = vpack.c.b16 %v112, %v108
  %v165 = vpack.c.b16 %v113, %v109
  %v166 = vpack.c.b16 %v118, %v114
  %v167 = vpack.c.b16 %v119, %v115
  %v168 = vpack.c.b16 %v120, %v116
  %v169 = vpack.c.b16 %v121, %v117
  %v170 = vpack.c.b16 %v126, %v122
  %v171 = vpack.c.b16 %v127, %v123
  %v172 = vpack.c.b16 %v128, %v124
  %v173 = vpack.c.b16 %v129, %v125
  %v174 = vpack.c.b16 %v134, %v130
  %v175 = vpack.c.b16 %v135, %v131
  %v176 = vpack.c.b16 %v136, %v132
  %v177 = vpack.c.b16 %v137, %v133
  %v178 = vpack.c.b16 %v142, %v138
  %v179 = vpack.c.b16 %v143, %v139
  %v180 = vpack.c.b16 %v144, %v140
  %v181 = vpack.c.b16 %v145, %v141
  %v182 = vpack.c.b16 %v150, %v146
  %v183 = vpack.c.b16 %v151, %v147
  %v184 = vpack.c.b16 %v152, %v148
  %v185 = vpack.c.b16 %v153, %v149
  %218 = vmatprep.subr.bf16.mxu0 %v155
  %219 = vmatpush1.bf16.msra.mxu0 %v154
  %220 = vmatprep.subr.bf16.mxu0 %v159
  %221 = vmatpush1.bf16.msra.mxu0 %v158
  %222 = vmatprep.subr.bf16.mxu0 %v163
  %223 = vmatpush1.bf16.msra.mxu0 %v162
  %224 = vmatprep.subr.bf16.mxu0 %v167
  %225 = vmatpush1.bf16.msra.mxu0 %v166
  %226 = vmatprep.subr.bf16.mxu0 %v171
  %227 = vmatpush1.bf16.msra.mxu0 %v170
  %228 = vmatprep.subr.bf16.mxu0 %v175
  %229 = vmatpush1.bf16.msra.mxu0 %v174
  %230 = vmatprep.subr.bf16.mxu0 %v179
  %231 = vmatpush1.bf16.msra.mxu0 %v178
  %232 = vmatprep.subr.bf16.mxu0 %v183
  %233 = vmatpush1.bf16.msra.mxu0 %v182
  %234 = vmatprep.subr.bf16.mxu0 0
  %235 = vmatpush1.bf16.msra.mxu0 0
  %236 = vmatprep.subr.bf16.mxu0 0
  %237 = vmatpush1.bf16.msra.mxu0 0
  %238 = vmatprep.subr.bf16.mxu0 0
  %239 = vmatpush1.bf16.msra.mxu0 0
  %240 = vmatprep.subr.bf16.mxu0 0
  %241 = vmatpush1.bf16.msra.mxu0 0
  %242 = vmatprep.subr.bf16.mxu0 0
  %243 = vmatpush1.bf16.msra.mxu0 0
  %244 = vmatprep.subr.bf16.mxu0 0
  %245 = vmatpush1.bf16.msra.mxu0 0
  %246 = vmatprep.subr.bf16.mxu0 0
  %247 = vmatpush1.bf16.msra.mxu0 0
  %248 = vmatprep.subr.bf16.mxu0 0
  %249 = vmatpush1.bf16.msra.mxu0 0
  %250 = vmatprep.mubr.bf16.mxu0 0
  %251 = vmatmul.mubr.bf16.gmra.mrb[0].mxu0 %v25
  %v252 = vpop.f32.mrb[0].mxu0
  %v253 = vadd.f32 0.0, %v252
  %v254 = vpop.f32.mrb[0].mxu0
  %v255 = vadd.f32 0.0, %v254
  %v256 = vpop.f32.mrb[0].mxu0
  %v257 = vpop.f32.mrb[0].mxu0
  %258 = vdwg.mxu0
  %259 = vmatprep.subr.bf16.mxu0 %v157
  %260 = vmatpush1.bf16.msra.mxu0 %v156
  %261 = vmatprep.subr.bf16.mxu0 %v161
  %262 = vmatpush1.bf16.msra.mxu0 %v160
  %263 = vmatprep.subr.bf16.mxu0 %v165
  %264 = vmatpush1.bf16.msra.mxu0 %v164
  %265 = vmatprep.subr.bf16.mxu0 %v169
  %266 = vmatpush1.bf16.msra.mxu0 %v168
  %267 = vmatprep.subr.bf16.mxu0 %v173
  %268 = vmatpush1.bf16.msra.mxu0 %v172
  %269 = vmatprep.subr.bf16.mxu0 %v177
  %270 = vmatpush1.bf16.msra.mxu0 %v176
  %271 = vmatprep.subr.bf16.mxu0 %v181
  %272 = vmatpush1.bf16.msra.mxu0 %v180
  %273 = vmatprep.subr.bf16.mxu0 %v185
  %274 = vmatpush1.bf16.msra.mxu0 %v184
  %275 = vmatprep.subr.bf16.mxu0 0
  %276 = vmatpush1.bf16.msra.mxu0 0
  %277 = vmatprep.subr.bf16.mxu0 0
  %278 = vmatpush1.bf16.msra.mxu0 0
  %279 = vmatprep.subr.bf16.mxu0 0
  %280 = vmatpush1.bf16.msra.mxu0 0
  %281 = vmatprep.subr.bf16.mxu0 0
  %282 = vmatpush1.bf16.msra.mxu0 0
  %283 = vmatprep.subr.bf16.mxu0 0
  %284 = vmatpush1.bf16.msra.mxu0 0
  %285 = vmatprep.subr.bf16.mxu0 0
  %286 = vmatpush1.bf16.msra.mxu0 0
  %287 = vmatprep.subr.bf16.mxu0 0
  %288 = vmatpush1.bf16.msra.mxu0 0
  %289 = vmatprep.subr.bf16.mxu0 0
  %290 = vmatpush1.bf16.msra.mxu0 0
  %291 = vmatprep.mubr.bf16.mxu0 0
  %292 = vmatmul.mubr.bf16.gmra.mrb[0].mxu0 %v25
  %v293 = vpop.f32.mrb[0].mxu0
  %v294 = vadd.f32 0.0, %v293
  %v295 = vpop.f32.mrb[0].mxu0
  %v296 = vadd.f32 0.0, %v295
  %v297 = vpop.f32.mrb[0].mxu0
  %v298 = vpop.f32.mrb[0].mxu0
  %299 = vdwg.mxu0
  %v300 = vadd.f32 %v21, %v253
  %v301 = vadd.f32 %v22, %v255
  %v302 = vadd.f32 %v23, %v294
  %v303 = vadd.f32 %v24, %v296
  %v304 = vxor.u32 %v300, 2147483648
  %v305 = vmul.f32 %v304, 1.442695
  %v306 = vpow.pop %v305
  %v307 = vadd.f32 %v306, 1.0
  %v308 = vrcp.pop %v307
  %v309 = vmul.f32 1.0, %v308
  %v310 = vxor.u32 %v301, 2147483648
  %v311 = vmul.f32 %v310, 1.442695
  %v312 = vpow.pop %v311
  %v313 = vadd.f32 %v312, 1.0
  %v314 = vrcp.pop %v313
  %v315 = vmul.f32 1.0, %v314
  %v316 = vtanh.pop %v302
  %v317 = vxor.u32 %v303, 2147483648
  %v318 = vmul.f32 %v317, 1.442695
  %v319 = vpow.pop %v318
  %v320 = vadd.f32 %v319, 1.0
  %v321 = vrcp.pop %v320
  %v322 = vmul.f32 1.0, %v321
  %v323 = vld [vmem:[#allocation3] sm:$0xff]
  %v324 = vmul.f32 %v315, %v323
  %v325 = vmul.f32 %v309, %v316
  %v326 = vadd.f32 %v324, %v325
  %v327 = vtanh.pop %v326
  %v328 = vmul.f32 %v322, %v327
  %329 = vst [vmem:[#allocation3] sm:$0xff] %v326
  %330 = vst [vmem:[#allocation2] sm:$0xff] %v328
  %v331 = vpack.c.bf16 %v328, %v328
  %332 = vst [vmem:[%s2] sm:$0xf] %v331
  %v333 = vld [vmem:[#allocation2] sm:$0xff]
  %s334 = scalar_lea.vmem %s0, 16
  %v335 = vld [vmem:[%s334] sm:$0xff]
  %v336 = vld [vmem:[%s334 + $0x8] sm:$0xff]
  %v337 = vunpack.c.l.bf16 %v335
  %v338 = vunpack.c.h.bf16 %v335
  %v339 = vunpack.c.l.bf16 %v336
  %v340 = vunpack.c.h.bf16 %v336
  %v341 = vpack.c.bf16 %v333, %v333
  %v342 = vld [vmem:[%s1] sm:$0xff]
  %v343 = vld [vmem:[%s1 + $0x8] sm:$0xff]
  %v344 = vld [vmem:[%s1 + $0x10] sm:$0xff]
  %v345 = vld [vmem:[%s1 + $0x18] sm:$0xff]
  %v346 = vld [vmem:[%s1 + $0x20] sm:$0xff]
  %v347 = vld [vmem:[%s1 + $0x28] sm:$0xff]
  %v348 = vld [vmem:[%s1 + $0x30] sm:$0xff]
  %v349 = vld [vmem:[%s1 + $0x38] sm:$0xff]
  %v350 = vld [vmem:[%s1 + $0x40] sm:$0xff]
  %v351 = vld [vmem:[%s1 + $0x48] sm:$0xff]
  %v352 = vld [vmem:[%s1 + $0x50] sm:$0xff]
  %v353 = vld [vmem:[%s1 + $0x58] sm:$0xff]
  %v354 = vld [vmem:[%s1 + $0x60] sm:$0xff]
  %v355 = vld [vmem:[%s1 + $0x68] sm:$0xff]
  %v356 = vld [vmem:[%s1 + $0x70] sm:$0xff]
  %v357 = vld [vmem:[%s1 + $0x78] sm:$0xff]
  %v358 = vld [vmem:[%s1 + $0x80] sm:$0xff]
  %v359 = vld [vmem:[%s1 + $0x88] sm:$0xff]
  %v360 = vld [vmem:[%s1 + $0x90] sm:$0xff]
  %v361 = vld [vmem:[%s1 + $0x98] sm:$0xff]
  %v362 = vld [vmem:[%s1 + $0xa0] sm:$0xff]
  %v363 = vld [vmem:[%s1 + $0xa8] sm:$0xff]
  %v364 = vld [vmem:[%s1 + $0xb0] sm:$0xff]
  %v365 = vld [vmem:[%s1 + $0xb8] sm:$0xff]
  %v366 = vld [vmem:[%s1 + $0xc0] sm:$0xff]
  %v367 = vld [vmem:[%s1 + $0xc8] sm:$0xff]
  %v368 = vld [vmem:[%s1 + $0xd0] sm:$0xff]
  %v369 = vld [vmem:[%s1 + $0xd8] sm:$0xff]
  %v370 = vld [vmem:[%s1 + $0xe0] sm:$0xff]
  %v371 = vld [vmem:[%s1 + $0xe8] sm:$0xff]
  %v372 = vld [vmem:[%s1 + $0xf0] sm:$0xff]
  %v373 = vld [vmem:[%s1 + $0xf8] sm:$0xff]
  %v406 = vunpack.c.l.b16 %v342
  %v407 = vunpack.c.h.b16 %v342
  %v408 = vunpack.c.l.b16 %v343
  %v409 = vunpack.c.h.b16 %v343
  %v410 = vunpack.c.l.b16 %v344
  %v411 = vunpack.c.h.b16 %v344
  %v412 = vunpack.c.l.b16 %v345
  %v413 = vunpack.c.h.b16 %v345
  %v414 = vunpack.c.l.b16 %v346
  %v415 = vunpack.c.h.b16 %v346
  %v416 = vunpack.c.l.b16 %v347
  %v417 = vunpack.c.h.b16 %v347
  %v418 = vunpack.c.l.b16 %v348
  %v419 = vunpack.c.h.b16 %v348
  %v420 = vunpack.c.l.b16 %v349
  %v421 = vunpack.c.h.b16 %v349
  %v422 = vunpack.c.l.b16 %v350
  %v423 = vunpack.c.h.b16 %v350
  %v424 = vunpack.c.l.b16 %v351
  %v425 = vunpack.c.h.b16 %v351
  %v426 = vunpack.c.l.b16 %v352
  %v427 = vunpack.c.h.b16 %v352
  %v428 = vunpack.c.l.b16 %v353
  %v429 = vunpack.c.h.b16 %v353
  %v430 = vunpack.c.l.b16 %v354
  %v431 = vunpack.c.h.b16 %v354
  %v432 = vunpack.c.l.b16 %v355
  %v433 = vunpack.c.h.b16 %v355
  %v434 = vunpack.c.l.b16 %v356
  %v435 = vunpack.c.h.b16 %v356
  %v436 = vunpack.c.l.b16 %v357
  %v437 = vunpack.c.h.b16 %v357
  %v438 = vunpack.c.l.b16 %v358
  %v439 = vunpack.c.h.b16 %v358
  %v440 = vunpack.c.l.b16 %v359
  %v441 = vunpack.c.h.b16 %v359
  %v442 = vunpack.c.l.b16 %v360
  %v443 = vunpack.c.h.b16 %v360
  %v444 = vunpack.c.l.b16 %v361
  %v445 = vunpack.c.h.b16 %v361
  %v446 = vunpack.c.l.b16 %v362
  %v447 = vunpack.c.h.b16 %v362
  %v448 = vunpack.c.l.b16 %v363
  %v449 = vunpack.c.h.b16 %v363
  %v450 = vunpack.c.l.b16 %v364
  %v451 = vunpack.c.h.b16 %v364
  %v452 = vunpack.c.l.b16 %v365
  %v453 = vunpack.c.h.b16 %v365
  %v454 = vunpack.c.l.b16 %v366
  %v455 = vunpack.c.h.b16 %v366
  %v456 = vunpack.c.l.b16 %v367
  %v457 = vunpack.c.h.b16 %v367
  %v458 = vunpack.c.l.b16 %v368
  %v459 = vunpack.c.h.b16 %v368
  %v460 = vunpack.c.l.b16 %v369
  %v461 = vunpack.c.h.b16 %v369
  %v462 = vunpack.c.l.b16 %v370
  %v463 = vunpack.c.h.b16 %v370
  %v464 = vunpack.c.l.b16 %v371
  %v465 = vunpack.c.h.b16 %v371
  %v466 = vunpack.c.l.b16 %v372
  %v467 = vunpack.c.h.b16 %v372
  %v468 = vunpack.c.l.b16 %v373
  %v469 = vunpack.c.h.b16 %v373
  %v470 = vpack.c.b16 %v410, %v406
  %v471 = vpack.c.b16 %v411, %v407
  %v472 = vpack.c.b16 %v412, %v408
  %v473 = vpack.c.b16 %v413, %v409
  %v474 = vpack.c.b16 %v418, %v414
  %v475 = vpack.c.b16 %v419, %v415
  %v476 = vpack.c.b16 %v420, %v416
  %v477 = vpack.c.b16 %v421, %v417
  %v478 = vpack.c.b16 %v426, %v422
  %v479 = vpack.c.b16 %v427, %v423
  %v480 = vpack.c.b16 %v428, %v424
  %v481 = vpack.c.b16 %v429, %v425
  %v482 = vpack.c.b16 %v434, %v430
  %v483 = vpack.c.b16 %v435, %v431
  %v484 = vpack.c.b16 %v436, %v432
  %v485 = vpack.c.b16 %v437, %v433
  %v486 = vpack.c.b16 %v442, %v438
  %v487 = vpack.c.b16 %v443, %v439
  %v488 = vpack.c.b16 %v444, %v440
  %v489 = vpack.c.b16 %v445, %v441
  %v490 = vpack.c.b16 %v450, %v446
  %v491 = vpack.c.b16 %v451, %v447
  %v492 = vpack.c.b16 %v452, %v448
  %v493 = vpack.c.b16 %v453, %v449
  %v494 = vpack.c.b16 %v458, %v454
  %v495 = vpack.c.b16 %v459, %v455
  %v496 = vpack.c.b16 %v460, %v456
  %v497 = vpack.c.b16 %v461, %v457
  %v498 = vpack.c.b16 %v466, %v462
  %v499 = vpack.c.b16 %v467, %v463
  %v500 = vpack.c.b16 %v468, %v464
  %v501 = vpack.c.b16 %v469, %v465
  %534 = vmatprep.subr.bf16.mxu0 %v471
  %535 = vmatpush1.bf16.msra.mxu0 %v470
  %536 = vmatprep.subr.bf16.mxu0 %v475
  %537 = vmatpush1.bf16.msra.mxu0 %v474
  %538 = vmatprep.subr.bf16.mxu0 %v479
  %539 = vmatpush1.bf16.msra.mxu0 %v478
  %540 = vmatprep.subr.bf16.mxu0 %v483
  %541 = vmatpush1.bf16.msra.mxu0 %v482
  %542 = vmatprep.subr.bf16.mxu0 %v487
  %543 = vmatpush1.bf16.msra.mxu0 %v486
  %544 = vmatprep.subr.bf16.mxu0 %v491
  %545 = vmatpush1.bf16.msra.mxu0 %v490
  %546 = vmatprep.subr.bf16.mxu0 %v495
  %547 = vmatpush1.bf16.msra.mxu0 %v494
  %548 = vmatprep.subr.bf16.mxu0 %v499
  %549 = vmatpush1.bf16.msra.mxu0 %v498
  %550 = vmatprep.subr.bf16.mxu0 0
  %551 = vmatpush1.bf16.msra.mxu0 0
  %552 = vmatprep.subr.bf16.mxu0 0
  %553 = vmatpush1.bf16.msra.mxu0 0
  %554 = vmatprep.subr.bf16.mxu0 0
  %555 = vmatpush1.bf16.msra.mxu0 0
  %556 = vmatprep.subr.bf16.mxu0 0
  %557 = vmatpush1.bf16.msra.mxu0 0
  %558 = vmatprep.subr.bf16.mxu0 0
  %559 = vmatpush1.bf16.msra.mxu0 0
  %560 = vmatprep.subr.bf16.mxu0 0
  %561 = vmatpush1.bf16.msra.mxu0 0
  %562 = vmatprep.subr.bf16.mxu0 0
  %563 = vmatpush1.bf16.msra.mxu0 0
  %564 = vmatprep.subr.bf16.mxu0 0
  %565 = vmatpush1.bf16.msra.mxu0 0
  %566 = vmatprep.mubr.bf16.mxu0 0
  %567 = vmatmul.mubr.bf16.gmra.mrb[0].mxu0 %v341
  %v568 = vpop.f32.mrb[0].mxu0
  %v569 = vadd.f32 0.0, %v568
  %v570 = vpop.f32.mrb[0].mxu0
  %v571 = vadd.f32 0.0, %v570
  %v572 = vpop.f32.mrb[0].mxu0
  %v573 = vpop.f32.mrb[0].mxu0
  %574 = vdwg.mxu0
  %575 = vmatprep.subr.bf16.mxu0 %v473
  %576 = vmatpush1.bf16.msra.mxu0 %v472
  %577 = vmatprep.subr.bf16.mxu0 %v477
  %578 = vmatpush1.bf16.msra.mxu0 %v476
  %579 = vmatprep.subr.bf16.mxu0 %v481
  %580 = vmatpush1.bf16.msra.mxu0 %v480
  %581 = vmatprep.subr.bf16.mxu0 %v485
  %582 = vmatpush1.bf16.msra.mxu0 %v484
  %583 = vmatprep.subr.bf16.mxu0 %v489
  %584 = vmatpush1.bf16.msra.mxu0 %v488
  %585 = vmatprep.subr.bf16.mxu0 %v493
  %586 = vmatpush1.bf16.msra.mxu0 %v492
  %587 = vmatprep.subr.bf16.mxu0 %v497
  %588 = vmatpush1.bf16.msra.mxu0 %v496
  %589 = vmatprep.subr.bf16.mxu0 %v501
  %590 = vmatpush1.bf16.msra.mxu0 %v500
  %591 = vmatprep.subr.bf16.mxu0 0
  %592 = vmatpush1.bf16.msra.mxu0 0
  %593 = vmatprep.subr.bf16.mxu0 0
  %594 = vmatpush1.bf16.msra.mxu0 0
  %595 = vmatprep.subr.bf16.mxu0 0
  %596 = vmatpush1.bf16.msra.mxu0 0
  %597 = vmatprep.subr.bf16.mxu0 0
  %598 = vmatpush1.bf16.msra.mxu0 0
  %599 = vmatprep.subr.bf16.mxu0 0
  %600 = vmatpush1.bf16.msra.mxu0 0
  %601 = vmatprep.subr.bf16.mxu0 0
  %602 = vmatpush1.bf16.msra.mxu0 0
  %603 = vmatprep.subr.bf16.mxu0 0
  %604 = vmatpush1.bf16.msra.mxu0 0
  %605 = vmatprep.subr.bf16.mxu0 0
  %606 = vmatpush1.bf16.msra.mxu0 0
  %607 = vmatprep.mubr.bf16.mxu0 0
  %608 = vmatmul.mubr.bf16.gmra.mrb[0].mxu0 %v341
  %v609 = vpop.f32.mrb[0].mxu0
  %v610 = vadd.f32 0.0, %v609
  %v611 = vpop.f32.mrb[0].mxu0
  %v612 = vadd.f32 0.0, %v611
  %v613 = vpop.f32.mrb[0].mxu0
  %v614 = vpop.f32.mrb[0].mxu0
  %615 = vdwg.mxu0
  %v616 = vadd.f32 %v337, %v569
  %v617 = vadd.f32 %v338, %v571
  %v618 = vadd.f32 %v339, %v610
  %v619 = vadd.f32 %v340, %v612
  %v620 = vxor.u32 %v616, 2147483648
  %v621 = vmul.f32 %v620, 1.442695
  %v622 = vpow.pop %v621
  %v623 = vadd.f32 %v622, 1.0
  %v624 = vrcp.pop %v623
  %v625 = vmul.f32 1.0, %v624
  %v626 = vxor.u32 %v617, 2147483648
  %v627 = vmul.f32 %v626, 1.442695
  %v628 = vpow.pop %v627
  %v629 = vadd.f32 %v628, 1.0
  %v630 = vrcp.pop %v629
  %v631 = vmul.f32 1.0, %v630
  %v632 = vtanh.pop %v618
  %v633 = vxor.u32 %v619, 2147483648
  %v634 = vmul.f32 %v633, 1.442695
  %v635 = vpow.pop %v634
  %v636 = vadd.f32 %v635, 1.0
  %v637 = vrcp.pop %v636
  %v638 = vmul.f32 1.0, %v637
  %v639 = vld [vmem:[#allocation3] sm:$0xff]
  %v640 = vmul.f32 %v631, %v639
  %v641 = vmul.f32 %v625, %v632
  %v642 = vadd.f32 %v640, %v641
  %v643 = vtanh.pop %v642
  %v644 = vmul.f32 %v638, %v643
  %645 = vst [vmem:[#allocation3] sm:$0xff] %v642
  %646 = vst [vmem:[#allocation2] sm:$0xff] %v644
  %v647 = vpack.c.bf16 %v644, %v644
  %s648 = scalar_lea.vmem %s2, 4
  %649 = vst [vmem:[%s648] sm:$0xf] %v647
  %v650 = vld [vmem:[#allocation2] sm:$0xff]
  %s651 = scalar_lea.vmem %s0, 32
  %v652 = vld [vmem:[%s651] sm:$0xff]
  %v653 = vld [vmem:[%s651 + $0x8] sm:$0xff]
  %v654 = vunpack.c.l.bf16 %v652
  %v655 = vunpack.c.h.bf16 %v652
  %v656 = vunpack.c.l.bf16 %v653
  %v657 = vunpack.c.h.bf16 %v653
  %v658 = vpack.c.bf16 %v650, %v650
  %v659 = vld [vmem:[%s1] sm:$0xff]
  %v660 = vld [vmem:[%s1 + $0x8] sm:$0xff]
  %v661 = vld [vmem:[%s1 + $0x10] sm:$0xff]
  %v662 = vld [vmem:[%s1 + $0x18] sm:$0xff]
  %v663 = vld [vmem:[%s1 + $0x20] sm:$0xff]
  %v664 = vld [vmem:[%s1 + $0x28] sm:$0xff]
  %v665 = vld [vmem:[%s1 + $0x30] sm:$0xff]
  %v666 = vld [vmem:[%s1 + $0x38] sm:$0xff]
  %v667 = vld [vmem:[%s1 + $0x40] sm:$0xff]
  %v668 = vld [vmem:[%s1 + $0x48] sm:$0xff]
  %v669 = vld [vmem:[%s1 + $0x50] sm:$0xff]
  %v670 = vld [vmem:[%s1 + $0x58] sm:$0xff]
  %v671 = vld [vmem:[%s1 + $0x60] sm:$0xff]
  %v672 = vld [vmem:[%s1 + $0x68] sm:$0xff]
  %v673 = vld [vmem:[%s1 + $0x70] sm:$0xff]
  %v674 = vld [vmem:[%s1 + $0x78] sm:$0xff]
  %v675 = vld [vmem:[%s1 + $0x80] sm:$0xff]
  %v676 = vld [vmem:[%s1 + $0x88] sm:$0xff]
  %v677 = vld [vmem:[%s1 + $0x90] sm:$0xff]
  %v678 = vld [vmem:[%s1 + $0x98] sm:$0xff]
  %v679 = vld [vmem:[%s1 + $0xa0] sm:$0xff]
  %v680 = vld [vmem:[%s1 + $0xa8] sm:$0xff]
  %v681 = vld [vmem:[%s1 + $0xb0] sm:$0xff]
  %v682 = vld [vmem:[%s1 + $0xb8] sm:$0xff]
  %v683 = vld [vmem:[%s1 + $0xc0] sm:$0xff]
  %v684 = vld [vmem:[%s1 + $0xc8] sm:$0xff]
  %v685 = vld [vmem:[%s1 + $0xd0] sm:$0xff]
  %v686 = vld [vmem:[%s1 + $0xd8] sm:$0xff]
  %v687 = vld [vmem:[%s1 + $0xe0] sm:$0xff]
  %v688 = vld [vmem:[%s1 + $0xe8] sm:$0xff]
  %v689 = vld [vmem:[%s1 + $0xf0] sm:$0xff]
  %v690 = vld [vmem:[%s1 + $0xf8] sm:$0xff]
  %v723 = vunpack.c.l.b16 %v659
  %v724 = vunpack.c.h.b16 %v659
  %v725 = vunpack.c.l.b16 %v660
  %v726 = vunpack.c.h.b16 %v660
  %v727 = vunpack.c.l.b16 %v661
  %v728 = vunpack.c.h.b16 %v661
  %v729 = vunpack.c.l.b16 %v662
  %v730 = vunpack.c.h.b16 %v662
  %v731 = vunpack.c.l.b16 %v663
  %v732 = vunpack.c.h.b16 %v663
  %v733 = vunpack.c.l.b16 %v664
  %v734 = vunpack.c.h.b16 %v664
  %v735 = vunpack.c.l.b16 %v665
  %v736 = vunpack.c.h.b16 %v665
  %v737 = vunpack.c.l.b16 %v666
  %v738 = vunpack.c.h.b16 %v666
  %v739 = vunpack.c.l.b16 %v667
  %v740 = vunpack.c.h.b16 %v667
  %v741 = vunpack.c.l.b16 %v668
  %v742 = vunpack.c.h.b16 %v668
  %v743 = vunpack.c.l.b16 %v669
  %v744 = vunpack.c.h.b16 %v669
  %v745 = vunpack.c.l.b16 %v670
  %v746 = vunpack.c.h.b16 %v670
  %v747 = vunpack.c.l.b16 %v671
  %v748 = vunpack.c.h.b16 %v671
  %v749 = vunpack.c.l.b16 %v672
  %v750 = vunpack.c.h.b16 %v672
  %v751 = vunpack.c.l.b16 %v673
  %v752 = vunpack.c.h.b16 %v673
  %v753 = vunpack.c.l.b16 %v674
  %v754 = vunpack.c.h.b16 %v674
  %v755 = vunpack.c.l.b16 %v675
  %v756 = vunpack.c.h.b16 %v675
  %v757 = vunpack.c.l.b16 %v676
  %v758 = vunpack.c.h.b16 %v676
  %v759 = vunpack.c.l.b16 %v677
  %v760 = vunpack.c.h.b16 %v677
  %v761 = vunpack.c.l.b16 %v678
  %v762 = vunpack.c.h.b16 %v678
  %v763 = vunpack.c.l.b16 %v679
  %v764 = vunpack.c.h.b16 %v679
  %v765 = vunpack.c.l.b16 %v680
  %v766 = vunpack.c.h.b16 %v680
  %v767 = vunpack.c.l.b16 %v681
  %v768 = vunpack.c.h.b16 %v681
  %v769 = vunpack.c.l.b16 %v682
  %v770 = vunpack.c.h.b16 %v682
  %v771 = vunpack.c.l.b16 %v683
  %v772 = vunpack.c.h.b16 %v683
  %v773 = vunpack.c.l.b16 %v684
  %v774 = vunpack.c.h.b16 %v684
  %v775 = vunpack.c.l.b16 %v685
  %v776 = vunpack.c.h.b16 %v685
  %v777 = vunpack.c.l.b16 %v686
  %v778 = vunpack.c.h.b16 %v686
  %v779 = vunpack.c.l.b16 %v687
  %v780 = vunpack.c.h.b16 %v687
  %v781 = vunpack.c.l.b16 %v688
  %v782 = vunpack.c.h.b16 %v688
  %v783 = vunpack.c.l.b16 %v689
  %v784 = vunpack.c.h.b16 %v689
  %v785 = vunpack.c.l.b16 %v690
  %v786 = vunpack.c.h.b16 %v690
  %v787 = vpack.c.b16 %v727, %v723
  %v788 = vpack.c.b16 %v728, %v724
  %v789 = vpack.c.b16 %v729, %v725
  %v790 = vpack.c.b16 %v730, %v726
  %v791 = vpack.c.b16 %v735, %v731
  %v792 = vpack.c.b16 %v736, %v732
  %v793 = vpack.c.b16 %v737, %v733
  %v794 = vpack.c.b16 %v738, %v734
  %v795 = vpack.c.b16 %v743, %v739
  %v796 = vpack.c.b16 %v744, %v740
  %v797 = vpack.c.b16 %v745, %v741
  %v798 = vpack.c.b16 %v746, %v742
  %v799 = vpack.c.b16 %v751, %v747
  %v800 = vpack.c.b16 %v752, %v748
  %v801 = vpack.c.b16 %v753, %v749
  %v802 = vpack.c.b16 %v754, %v750
  %v803 = vpack.c.b16 %v759, %v755
  %v804 = vpack.c.b16 %v760, %v756
  %v805 = vpack.c.b16 %v761, %v757
  %v806 = vpack.c.b16 %v762, %v758
  %v807 = vpack.c.b16 %v767, %v763
  %v808 = vpack.c.b16 %v768, %v764
  %v809 = vpack.c.b16 %v769, %v765
  %v810 = vpack.c.b16 %v770, %v766
  %v811 = vpack.c.b16 %v775, %v771
  %v812 = vpack.c.b16 %v776, %v772
  %v813 = vpack.c.b16 %v777, %v773
  %v814 = vpack.c.b16 %v778, %v774
  %v815 = vpack.c.b16 %v783, %v779
  %v816 = vpack.c.b16 %v784, %v780
  %v817 = vpack.c.b16 %v785, %v781
  %v818 = vpack.c.b16 %v786, %v782
  %851 = vmatprep.subr.bf16.mxu0 %v788
  %852 = vmatpush1.bf16.msra.mxu0 %v787
  %853 = vmatprep.subr.bf16.mxu0 %v792
  %854 = vmatpush1.bf16.msra.mxu0 %v791
  %855 = vmatprep.subr.bf16.mxu0 %v796
  %856 = vmatpush1.bf16.msra.mxu0 %v795
  %857 = vmatprep.subr.bf16.mxu0 %v800
  %858 = vmatpush1.bf16.msra.mxu0 %v799
  %859 = vmatprep.subr.bf16.mxu0 %v804
  %860 = vmatpush1.bf16.msra.mxu0 %v803
  %861 = vmatprep.subr.bf16.mxu0 %v808
  %862 = vmatpush1.bf16.msra.mxu0 %v807
  %863 = vmatprep.subr.bf16.mxu0 %v812
  %864 = vmatpush1.bf16.msra.mxu0 %v811
  %865 = vmatprep.subr.bf16.mxu0 %v816
  %866 = vmatpush1.bf16.msra.mxu0 %v815
  %867 = vmatprep.subr.bf16.mxu0 0
  %868 = vmatpush1.bf16.msra.mxu0 0
  %869 = vmatprep.subr.bf16.mxu0 0
  %870 = vmatpush1.bf16.msra.mxu0 0
  %871 = vmatprep.subr.bf16.mxu0 0
  %872 = vmatpush1.bf16.msra.mxu0 0
  %873 = vmatprep.subr.bf16.mxu0 0
  %874 = vmatpush1.bf16.msra.mxu0 0
  %875 = vmatprep.subr.bf16.mxu0 0
  %876 = vmatpush1.bf16.msra.mxu0 0
  %877 = vmatprep.subr.bf16.mxu0 0
  %878 = vmatpush1.bf16.msra.mxu0 0
  %879 = vmatprep.subr.bf16.mxu0 0
  %880 = vmatpush1.bf16.msra.mxu0 0
  %881 = vmatprep.subr.bf16.mxu0 0
  %882 = vmatpush1.bf16.msra.mxu0 0
  %883 = vmatprep.mubr.bf16.mxu0 0
  %884 = vmatmul.mubr.bf16.gmra.mrb[0].mxu0 %v658
  %v885 = vpop.f32.mrb[0].mxu0
  %v886 = vadd.f32 0.0, %v885
  %v887 = vpop.f32.mrb[0].mxu0
  %v888 = vadd.f32 0.0, %v887
  %v889 = vpop.f32.mrb[0].mxu0
  %v890 = vpop.f32.mrb[0].mxu0
  %891 = vdwg.mxu0
  %892 = vmatprep.subr.bf16.mxu0 %v790
  %893 = vmatpush1.bf16.msra.mxu0 %v789
  %894 = vmatprep.subr.bf16.mxu0 %v794
  %895 = vmatpush1.bf16.msra.mxu0 %v793
  %896 = vmatprep.subr.bf16.mxu0 %v798
  %897 = vmatpush1.bf16.msra.mxu0 %v797
  %898 = vmatprep.subr.bf16.mxu0 %v802
  %899 = vmatpush1.bf16.msra.mxu0 %v801
  %900 = vmatprep.subr.bf16.mxu0 %v806
  %901 = vmatpush1.bf16.msra.mxu0 %v805
  %902 = vmatprep.subr.bf16.mxu0 %v810
  %903 = vmatpush1.bf16.msra.mxu0 %v809
  %904 = vmatprep.subr.bf16.mxu0 %v814
  %905 = vmatpush1.bf16.msra.mxu0 %v813
  %906 = vmatprep.subr.bf16.mxu0 %v818
  %907 = vmatpush1.bf16.msra.mxu0 %v817
  %908 = vmatprep.subr.bf16.mxu0 0
  %909 = vmatpush1.bf16.msra.mxu0 0
  %910 = vmatprep.subr.bf16.mxu0 0
  %911 = vmatpush1.bf16.msra.mxu0 0
  %912 = vmatprep.subr.bf16.mxu0 0
  %913 = vmatpush1.bf16.msra.mxu0 0
  %914 = vmatprep.subr.bf16.mxu0 0
  %915 = vmatpush1.bf16.msra.mxu0 0
  %916 = vmatprep.subr.bf16.mxu0 0
  %917 = vmatpush1.bf16.msra.mxu0 0
  %918 = vmatprep.subr.bf16.mxu0 0
  %919 = vmatpush1.bf16.msra.mxu0 0
  %920 = vmatprep.subr.bf16.mxu0 0
  %921 = vmatpush1.bf16.msra.mxu0 0
  %922 = vmatprep.subr.bf16.mxu0 0
  %923 = vmatpush1.bf16.msra.mxu0 0
  %924 = vmatprep.mubr.bf16.mxu0 0
  %925 = vmatmul.mubr.bf16.gmra.mrb[0].mxu0 %v658
  %v926 = vpop.f32.mrb[0].mxu0
  %v927 = vadd.f32 0.0, %v926
  %v928 = vpop.f32.mrb[0].mxu0
  %v929 = vadd.f32 0.0, %v928
  %v930 = vpop.f32.mrb[0].mxu0
  %v931 = vpop.f32.mrb[0].mxu0
  %932 = vdwg.mxu0
  %v933 = vadd.f32 %v654, %v886
  %v934 = vadd.f32 %v655, %v888
  %v935 = vadd.f32 %v656, %v927
  %v936 = vadd.f32 %v657, %v929
  %v937 = vxor.u32 %v933, 2147483648
  %v938 = vmul.f32 %v937, 1.442695
  %v939 = vpow.pop %v938
  %v940 = vadd.f32 %v939, 1.0
  %v941 = vrcp.pop %v940
  %v942 = vmul.f32 1.0, %v941
  %v943 = vxor.u32 %v934, 2147483648
  %v944 = vmul.f32 %v943, 1.442695
  %v945 = vpow.pop %v944
  %v946 = vadd.f32 %v945, 1.0
  %v947 = vrcp.pop %v946
  %v948 = vmul.f32 1.0, %v947
  %v949 = vtanh.pop %v935
  %v950 = vxor.u32 %v936, 2147483648
  %v951 = vmul.f32 %v950, 1.442695
  %v952 = vpow.pop %v951
  %v953 = vadd.f32 %v952, 1.0
  %v954 = vrcp.pop %v953
  %v955 = vmul.f32 1.0, %v954
  %v956 = vld [vmem:[#allocation3] sm:$0xff]
  %v957 = vmul.f32 %v948, %v956
  %v958 = vmul.f32 %v942, %v949
  %v959 = vadd.f32 %v957, %v958
  %v960 = vtanh.pop %v959
  %v961 = vmul.f32 %v955, %v960
  %962 = vst [vmem:[#allocation3] sm:$0xff] %v959
  %963 = vst [vmem:[#allocation2] sm:$0xff] %v961
  %v964 = vpack.c.bf16 %v961, %v961
  %s965 = scalar_lea.vmem %s2, 8
  %966 = vst [vmem:[%s965] sm:$0xf] %v964
  %v967 = vld [vmem:[#allocation2] sm:$0xff]
  %s968 = scalar_lea.vmem %s0, 48
  %v969 = vld [vmem:[%s968] sm:$0xff]
  %v970 = vld [vmem:[%s968 + $0x8] sm:$0xff]
  %v971 = vunpack.c.l.bf16 %v969
  %v972 = vunpack.c.h.bf16 %v969
  %v973 = vunpack.c.l.bf16 %v970
  %v974 = vunpack.c.h.bf16 %v970
  %v975 = vpack.c.bf16 %v967, %v967
  %v976 = vld [vmem:[%s1] sm:$0xff]
  %v977 = vld [vmem:[%s1 + $0x8] sm:$0xff]
  %v978 = vld [vmem:[%s1 + $0x10] sm:$0xff]
  %v979 = vld [vmem:[%s1 + $0x18] sm:$0xff]
  %v980 = vld [vmem:[%s1 + $0x20] sm:$0xff]
  %v981 = vld [vmem:[%s1 + $0x28] sm:$0xff]
  %v982 = vld [vmem:[%s1 + $0x30] sm:$0xff]
  %v983 = vld [vmem:[%s1 + $0x38] sm:$0xff]
  %v984 = vld [vmem:[%s1 + $0x40] sm:$0xff]
  %v985 = vld [vmem:[%s1 + $0x48] sm:$0xff]
  %v986 = vld [vmem:[%s1 + $0x50] sm:$0xff]
  %v987 = vld [vmem:[%s1 + $0x58] sm:$0xff]
  %v988 = vld [vmem:[%s1 + $0x60] sm:$0xff]
  %v989 = vld [vmem:[%s1 + $0x68] sm:$0xff]
  %v990 = vld [vmem:[%s1 + $0x70] sm:$0xff]
  %v991 = vld [vmem:[%s1 + $0x78] sm:$0xff]
  %v992 = vld [vmem:[%s1 + $0x80] sm:$0xff]
  %v993 = vld [vmem:[%s1 + $0x88] sm:$0xff]
  %v994 = vld [vmem:[%s1 + $0x90] sm:$0xff]
  %v995 = vld [vmem:[%s1 + $0x98] sm:$0xff]
  %v996 = vld [vmem:[%s1 + $0xa0] sm:$0xff]
  %v997 = vld [vmem:[%s1 + $0xa8] sm:$0xff]
  %v998 = vld [vmem:[%s1 + $0xb0] sm:$0xff]
  %v999 = vld [vmem:[%s1 + $0xb8] sm:$0xff]
  %v1000 = vld [vmem:[%s1 + $0xc0] sm:$0xff]
  %v1001 = vld [vmem:[%s1 + $0xc8] sm:$0xff]
  %v1002 = vld [vmem:[%s1 + $0xd0] sm:$0xff]
  %v1003 = vld [vmem:[%s1 + $0xd8] sm:$0xff]
  %v1004 = vld [vmem:[%s1 + $0xe0] sm:$0xff]
  %v1005 = vld [vmem:[%s1 + $0xe8] sm:$0xff]
  %v1006 = vld [vmem:[%s1 + $0xf0] sm:$0xff]
  %v1007 = vld [vmem:[%s1 + $0xf8] sm:$0xff]
  %v1040 = vunpack.c.l.b16 %v976
  %v1041 = vunpack.c.h.b16 %v976
  %v1042 = vunpack.c.l.b16 %v977
  %v1043 = vunpack.c.h.b16 %v977
  %v1044 = vunpack.c.l.b16 %v978
  %v1045 = vunpack.c.h.b16 %v978
  %v1046 = vunpack.c.l.b16 %v979
  %v1047 = vunpack.c.h.b16 %v979
  %v1048 = vunpack.c.l.b16 %v980
  %v1049 = vunpack.c.h.b16 %v980
  %v1050 = vunpack.c.l.b16 %v981
  %v1051 = vunpack.c.h.b16 %v981
  %v1052 = vunpack.c.l.b16 %v982
  %v1053 = vunpack.c.h.b16 %v982
  %v1054 = vunpack.c.l.b16 %v983
  %v1055 = vunpack.c.h.b16 %v983
  %v1056 = vunpack.c.l.b16 %v984
  %v1057 = vunpack.c.h.b16 %v984
  %v1058 = vunpack.c.l.b16 %v985
  %v1059 = vunpack.c.h.b16 %v985
  %v1060 = vunpack.c.l.b16 %v986
  %v1061 = vunpack.c.h.b16 %v986
  %v1062 = vunpack.c.l.b16 %v987
  %v1063 = vunpack.c.h.b16 %v987
  %v1064 = vunpack.c.l.b16 %v988
  %v1065 = vunpack.c.h.b16 %v988
  %v1066 = vunpack.c.l.b16 %v989
  %v1067 = vunpack.c.h.b16 %v989
  %v1068 = vunpack.c.l.b16 %v990
  %v1069 = vunpack.c.h.b16 %v990
  %v1070 = vunpack.c.l.b16 %v991
  %v1071 = vunpack.c.h.b16 %v991
  %v1072 = vunpack.c.l.b16 %v992
  %v1073 = vunpack.c.h.b16 %v992
  %v1074 = vunpack.c.l.b16 %v993
  %v1075 = vunpack.c.h.b16 %v993
  %v1076 = vunpack.c.l.b16 %v994
  %v1077 = vunpack.c.h.b16 %v994
  %v1078 = vunpack.c.l.b16 %v995
  %v1079 = vunpack.c.h.b16 %v995
  %v1080 = vunpack.c.l.b16 %v996
  %v1081 = vunpack.c.h.b16 %v996
  %v1082 = vunpack.c.l.b16 %v997
  %v1083 = vunpack.c.h.b16 %v997
  %v1084 = vunpack.c.l.b16 %v998
  %v1085 = vunpack.c.h.b16 %v998
  %v1086 = vunpack.c.l.b16 %v999
  %v1087 = vunpack.c.h.b16 %v999
  %v1088 = vunpack.c.l.b16 %v1000
  %v1089 = vunpack.c.h.b16 %v1000
  %v1090 = vunpack.c.l.b16 %v1001
  %v1091 = vunpack.c.h.b16 %v1001
  %v1092 = vunpack.c.l.b16 %v1002
  %v1093 = vunpack.c.h.b16 %v1002
  %v1094 = vunpack.c.l.b16 %v1003
  %v1095 = vunpack.c.h.b16 %v1003
  %v1096 = vunpack.c.l.b16 %v1004
  %v1097 = vunpack.c.h.b16 %v1004
  %v1098 = vunpack.c.l.b16 %v1005
  %v1099 = vunpack.c.h.b16 %v1005
  %v1100 = vunpack.c.l.b16 %v1006
  %v1101 = vunpack.c.h.b16 %v1006
  %v1102 = vunpack.c.l.b16 %v1007
  %v1103 = vunpack.c.h.b16 %v1007
  %v1104 = vpack.c.b16 %v1044, %v1040
  %v1105 = vpack.c.b16 %v1045, %v1041
  %v1106 = vpack.c.b16 %v1046, %v1042
  %v1107 = vpack.c.b16 %v1047, %v1043
  %v1108 = vpack.c.b16 %v1052, %v1048
  %v1109 = vpack.c.b16 %v1053, %v1049
  %v1110 = vpack.c.b16 %v1054, %v1050
  %v1111 = vpack.c.b16 %v1055, %v1051
  %v1112 = vpack.c.b16 %v1060, %v1056
  %v1113 = vpack.c.b16 %v1061, %v1057
  %v1114 = vpack.c.b16 %v1062, %v1058
  %v1115 = vpack.c.b16 %v1063, %v1059
  %v1116 = vpack.c.b16 %v1068, %v1064
  %v1117 = vpack.c.b16 %v1069, %v1065
  %v1118 = vpack.c.b16 %v1070, %v1066
  %v1119 = vpack.c.b16 %v1071, %v1067
  %v1120 = vpack.c.b16 %v1076, %v1072
  %v1121 = vpack.c.b16 %v1077, %v1073
  %v1122 = vpack.c.b16 %v1078, %v1074
  %v1123 = vpack.c.b16 %v1079, %v1075
  %v1124 = vpack.c.b16 %v1084, %v1080
  %v1125 = vpack.c.b16 %v1085, %v1081
  %v1126 = vpack.c.b16 %v1086, %v1082
  %v1127 = vpack.c.b16 %v1087, %v1083
  %v1128 = vpack.c.b16 %v1092, %v1088
  %v1129 = vpack.c.b16 %v1093, %v1089
  %v1130 = vpack.c.b16 %v1094, %v1090
  %v1131 = vpack.c.b16 %v1095, %v1091
  %v1132 = vpack.c.b16 %v1100, %v1096
  %v1133 = vpack.c.b16 %v1101, %v1097
  %v1134 = vpack.c.b16 %v1102, %v1098
  %v1135 = vpack.c.b16 %v1103, %v1099
  %1168 = vmatprep.subr.bf16.mxu0 %v1105
  %1169 = vmatpush1.bf16.msra.mxu0 %v1104
  %1170 = vmatprep.subr.bf16.mxu0 %v1109
  %1171 = vmatpush1.bf16.msra.mxu0 %v1108
  %1172 = vmatprep.subr.bf16.mxu0 %v1113
  %1173 = vmatpush1.bf16.msra.mxu0 %v1112
  %1174 = vmatprep.subr.bf16.mxu0 %v1117
  %1175 = vmatpush1.bf16.msra.mxu0 %v1116
  %1176 = vmatprep.subr.bf16.mxu0 %v1121
  %1177 = vmatpush1.bf16.msra.mxu0 %v1120
  %1178 = vmatprep.subr.bf16.mxu0 %v1125
  %1179 = vmatpush1.bf16.msra.mxu0 %v1124
  %1180 = vmatprep.subr.bf16.mxu0 %v1129
  %1181 = vmatpush1.bf16.msra.mxu0 %v1128
  %1182 = vmatprep.subr.bf16.mxu0 %v1133
  %1183 = vmatpush1.bf16.msra.mxu0 %v1132
  %1184 = vmatprep.subr.bf16.mxu0 0
  %1185 = vmatpush1.bf16.msra.mxu0 0
  %1186 = vmatprep.subr.bf16.mxu0 0
  %1187 = vmatpush1.bf16.msra.mxu0 0
  %1188 = vmatprep.subr.bf16.mxu0 0
  %1189 = vmatpush1.bf16.msra.mxu0 0
  %1190 = vmatprep.subr.bf16.mxu0 0
  %1191 = vmatpush1.bf16.msra.mxu0 0
  %1192 = vmatprep.subr.bf16.mxu0 0
  %1193 = vmatpush1.bf16.msra.mxu0 0
  %1194 = vmatprep.subr.bf16.mxu0 0
  %1195 = vmatpush1.bf16.msra.mxu0 0
  %1196 = vmatprep.subr.bf16.mxu0 0
  %1197 = vmatpush1.bf16.msra.mxu0 0
  %1198 = vmatprep.subr.bf16.mxu0 0
  %1199 = vmatpush1.bf16.msra.mxu0 0
  %1200 = vmatprep.mubr.bf16.mxu0 0
  %1201 = vmatmul.mubr.bf16.gmra.mrb[0].mxu0 %v975
  %v1202 = vpop.f32.mrb[0].mxu0
  %v1203 = vadd.f32 0.0, %v1202
  %v1204 = vpop.f32.mrb[0].mxu0
  %v1205 = vadd.f32 0.0, %v1204
  %v1206 = vpop.f32.mrb[0].mxu0
  %v1207 = vpop.f32.mrb[0].mxu0
  %1208 = vdwg.mxu0
  %1209 = vmatprep.subr.bf16.mxu0 %v1107
  %1210 = vmatpush1.bf16.msra.mxu0 %v1106
  %1211 = vmatprep.subr.bf16.mxu0 %v1111
  %1212 = vmatpush1.bf16.msra.mxu0 %v1110
  %1213 = vmatprep.subr.bf16.mxu0 %v1115
  %1214 = vmatpush1.bf16.msra.mxu0 %v1114
  %1215 = vmatprep.subr.bf16.mxu0 %v1119
  %1216 = vmatpush1.bf16.msra.mxu0 %v1118
  %1217 = vmatprep.subr.bf16.mxu0 %v1123
  %1218 = vmatpush1.bf16.msra.mxu0 %v1122
  %1219 = vmatprep.subr.bf16.mxu0 %v1127
  %1220 = vmatpush1.bf16.msra.mxu0 %v1126
  %1221 = vmatprep.subr.bf16.mxu0 %v1131
  %1222 = vmatpush1.bf16.msra.mxu0 %v1130
  %1223 = vmatprep.subr.bf16.mxu0 %v1135
  %1224 = vmatpush1.bf16.msra.mxu0 %v1134
  %1225 = vmatprep.subr.bf16.mxu0 0
  %1226 = vmatpush1.bf16.msra.mxu0 0
  %1227 = vmatprep.subr.bf16.mxu0 0
  %1228 = vmatpush1.bf16.msra.mxu0 0
  %1229 = vmatprep.subr.bf16.mxu0 0
  %1230 = vmatpush1.bf16.msra.mxu0 0
  %1231 = vmatprep.subr.bf16.mxu0 0
  %1232 = vmatpush1.bf16.msra.mxu0 0
  %1233 = vmatprep.subr.bf16.mxu0 0
  %1234 = vmatpush1.bf16.msra.mxu0 0
  %1235 = vmatprep.subr.bf16.mxu0 0
  %1236 = vmatpush1.bf16.msra.mxu0 0
  %1237 = vmatprep.subr.bf16.mxu0 0
  %1238 = vmatpush1.bf16.msra.mxu0 0
  %1239 = vmatprep.subr.bf16.mxu0 0
  %1240 = vmatpush1.bf16.msra.mxu0 0
  %1241 = vmatprep.mubr.bf16.mxu0 0
  %1242 = vmatmul.mubr.bf16.gmra.mrb[0].mxu0 %v975
  %v1243 = vpop.f32.mrb[0].mxu0
  %v1244 = vadd.f32 0.0, %v1243
  %v1245 = vpop.f32.mrb[0].mxu0
  %v1246 = vadd.f32 0.0, %v1245
  %v1247 = vpop.f32.mrb[0].mxu0
  %v1248 = vpop.f32.mrb[0].mxu0
  %1249 = vdwg.mxu0
  %v1250 = vadd.f32 %v971, %v1203
  %v1251 = vadd.f32 %v972, %v1205
  %v1252 = vadd.f32 %v973, %v1244
  %v1253 = vadd.f32 %v974, %v1246
  %v1254 = vxor.u32 %v1250, 2147483648
  %v1255 = vmul.f32 %v1254, 1.442695
  %v1256 = vpow.pop %v1255
  %v1257 = vadd.f32 %v1256, 1.0
  %v1258 = vrcp.pop %v1257
  %v1259 = vmul.f32 1.0, %v1258
  %v1260 = vxor.u32 %v1251, 2147483648
  %v1261 = vmul.f32 %v1260, 1.442695
  %v1262 = vpow.pop %v1261
  %v1263 = vadd.f32 %v1262, 1.0
  %v1264 = vrcp.pop %v1263
  %v1265 = vmul.f32 1.0, %v1264
  %v1266 = vtanh.pop %v1252
  %v1267 = vxor.u32 %v1253, 2147483648
  %v1268 = vmul.f32 %v1267, 1.442695
  %v1269 = vpow.pop %v1268
  %v1270 = vadd.f32 %v1269, 1.0
  %v1271 = vrcp.pop %v1270
  %v1272 = vmul.f32 1.0, %v1271
  %v1273 = vld [vmem:[#allocation3] sm:$0xff]
  %v1274 = vmul.f32 %v1265, %v1273
  %v1275 = vmul.f32 %v1259, %v1266
  %v1276 = vadd.f32 %v1274, %v1275
  %v1277 = vtanh.pop %v1276
  %v1278 = vmul.f32 %v1272, %v1277
  %1279 = vst [vmem:[#allocation3] sm:$0xff] %v1276
  %1280 = vst [vmem:[#allocation2] sm:$0xff] %v1278
  %v1281 = vpack.c.bf16 %v1278, %v1278
  %s1282 = scalar_lea.vmem %s2, 12
  %1283 = vst [vmem:[%s1282] sm:$0xf] %v1281
  %v1284 = vld [vmem:[#allocation2] sm:$0xff]
  %s1285 = scalar_lea.vmem %s0, 64
  %v1286 = vld [vmem:[%s1285] sm:$0xff]
  %v1287 = vld [vmem:[%s1285 + $0x8] sm:$0xff]
  %v1288 = vunpack.c.l.bf16 %v1286
  %v1289 = vunpack.c.h.bf16 %v1286
  %v1290 = vunpack.c.l.bf16 %v1287
  %v1291 = vunpack.c.h.bf16 %v1287
  %v1292 = vpack.c.bf16 %v1284, %v1284
  %v1293 = vld [vmem:[%s1] sm:$0xff]
  %v1294 = vld [vmem:[%s1 + $0x8] sm:$0xff]
  %v1295 = vld [vmem:[%s1 + $0x10] sm:$0xff]
  %v1296 = vld [vmem:[%s1 + $0x18] sm:$0xff]
  %v1297 = vld [vmem:[%s1 + $0x20] sm:$0xff]
  %v1298 = vld [vmem:[%s1 + $0x28] sm:$0xff]
  %v1299 = vld [vmem:[%s1 + $0x30] sm:$0xff]
  %v1300 = vld [vmem:[%s1 + $0x38] sm:$0xff]
  %v1301 = vld [vmem:[%s1 + $0x40] sm:$0xff]
  %v1302 = vld [vmem:[%s1 + $0x48] sm:$0xff]
  %v1303 = vld [vmem:[%s1 + $0x50] sm:$0xff]
  %v1304 = vld [vmem:[%s1 + $0x58] sm:$0xff]
  %v1305 = vld [vmem:[%s1 + $0x60] sm:$0xff]
  %v1306 = vld [vmem:[%s1 + $0x68] sm:$0xff]
  %v1307 = vld [vmem:[%s1 + $0x70] sm:$0xff]
  %v1308 = vld [vmem:[%s1 + $0x78] sm:$0xff]
  %v1309 = vld [vmem:[%s1 + $0x80] sm:$0xff]
  %v1310 = vld [vmem:[%s1 + $0x88] sm:$0xff]
  %v1311 = vld [vmem:[%s1 + $0x90] sm:$0xff]
  %v1312 = vld [vmem:[%s1 + $0x98] sm:$0xff]
  %v1313 = vld [vmem:[%s1 + $0xa0] sm:$0xff]
  %v1314 = vld [vmem:[%s1 + $0xa8] sm:$0xff]
  %v1315 = vld [vmem:[%s1 + $0xb0] sm:$0xff]
  %v1316 = vld [vmem:[%s1 + $0xb8] sm:$0xff]
  %v1317 = vld [vmem:[%s1 + $0xc0] sm:$0xff]
  %v1318 = vld [vmem:[%s1 + $0xc8] sm:$0xff]
  %v1319 = vld [vmem:[%s1 + $0xd0] sm:$0xff]
  %v1320 = vld [vmem:[%s1 + $0xd8] sm:$0xff]
  %v1321 = vld [vmem:[%s1 + $0xe0] sm:$0xff]
  %v1322 = vld [vmem:[%s1 + $0xe8] sm:$0xff]
  %v1323 = vld [vmem:[%s1 + $0xf0] sm:$0xff]
  %v1324 = vld [vmem:[%s1 + $0xf8] sm:$0xff]
  %v1357 = vunpack.c.l.b16 %v1293
  %v1358 = vunpack.c.h.b16 %v1293
  %v1359 = vunpack.c.l.b16 %v1294
  %v1360 = vunpack.c.h.b16 %v1294
  %v1361 = vunpack.c.l.b16 %v1295
  %v1362 = vunpack.c.h.b16 %v1295
  %v1363 = vunpack.c.l.b16 %v1296
  %v1364 = vunpack.c.h.b16 %v1296
  %v1365 = vunpack.c.l.b16 %v1297
  %v1366 = vunpack.c.h.b16 %v1297
  %v1367 = vunpack.c.l.b16 %v1298
  %v1368 = vunpack.c.h.b16 %v1298
  %v1369 = vunpack.c.l.b16 %v1299
  %v1370 = vunpack.c.h.b16 %v1299
  %v1371 = vunpack.c.l.b16 %v1300
  %v1372 = vunpack.c.h.b16 %v1300
  %v1373 = vunpack.c.l.b16 %v1301
  %v1374 = vunpack.c.h.b16 %v1301
  %v1375 = vunpack.c.l.b16 %v1302
  %v1376 = vunpack.c.h.b16 %v1302
  %v1377 = vunpack.c.l.b16 %v1303
  %v1378 = vunpack.c.h.b16 %v1303
  %v1379 = vunpack.c.l.b16 %v1304
  %v1380 = vunpack.c.h.b16 %v1304
  %v1381 = vunpack.c.l.b16 %v1305
  %v1382 = vunpack.c.h.b16 %v1305
  %v1383 = vunpack.c.l.b16 %v1306
  %v1384 = vunpack.c.h.b16 %v1306
  %v1385 = vunpack.c.l.b16 %v1307
  %v1386 = vunpack.c.h.b16 %v1307
  %v1387 = vunpack.c.l.b16 %v1308
  %v1388 = vunpack.c.h.b16 %v1308
  %v1389 = vunpack.c.l.b16 %v1309
  %v1390 = vunpack.c.h.b16 %v1309
  %v1391 = vunpack.c.l.b16 %v1310
  %v1392 = vunpack.c.h.b16 %v1310
  %v1393 = vunpack.c.l.b16 %v1311
  %v1394 = vunpack.c.h.b16 %v1311
  %v1395 = vunpack.c.l.b16 %v1312
  %v1396 = vunpack.c.h.b16 %v1312
  %v1397 = vunpack.c.l.b16 %v1313
  %v1398 = vunpack.c.h.b16 %v1313
  %v1399 = vunpack.c.l.b16 %v1314
  %v1400 = vunpack.c.h.b16 %v1314
  %v1401 = vunpack.c.l.b16 %v1315
  %v1402 = vunpack.c.h.b16 %v1315
  %v1403 = vunpack.c.l.b16 %v1316
  %v1404 = vunpack.c.h.b16 %v1316
  %v1405 = vunpack.c.l.b16 %v1317
  %v1406 = vunpack.c.h.b16 %v1317
  %v1407 = vunpack.c.l.b16 %v1318
  %v1408 = vunpack.c.h.b16 %v1318
  %v1409 = vunpack.c.l.b16 %v1319
  %v1410 = vunpack.c.h.b16 %v1319
  %v1411 = vunpack.c.l.b16 %v1320
  %v1412 = vunpack.c.h.b16 %v1320
  %v1413 = vunpack.c.l.b16 %v1321
  %v1414 = vunpack.c.h.b16 %v1321
  %v1415 = vunpack.c.l.b16 %v1322
  %v1416 = vunpack.c.h.b16 %v1322
  %v1417 = vunpack.c.l.b16 %v1323
  %v1418 = vunpack.c.h.b16 %v1323
  %v1419 = vunpack.c.l.b16 %v1324
  %v1420 = vunpack.c.h.b16 %v1324
  %v1421 = vpack.c.b16 %v1361, %v1357
  %v1422 = vpack.c.b16 %v1362, %v1358
  %v1423 = vpack.c.b16 %v1363, %v1359
  %v1424 = vpack.c.b16 %v1364, %v1360
  %v1425 = vpack.c.b16 %v1369, %v1365
  %v1426 = vpack.c.b16 %v1370, %v1366
  %v1427 = vpack.c.b16 %v1371, %v1367
  %v1428 = vpack.c.b16 %v1372, %v1368
  %v1429 = vpack.c.b16 %v1377, %v1373
  %v1430 = vpack.c.b16 %v1378, %v1374
  %v1431 = vpack.c.b16 %v1379, %v1375
  %v1432 = vpack.c.b16 %v1380, %v1376
  %v1433 = vpack.c.b16 %v1385, %v1381
  %v1434 = vpack.c.b16 %v1386, %v1382
  %v1435 = vpack.c.b16 %v1387, %v1383
  %v1436 = vpack.c.b16 %v1388, %v1384
  %v1437 = vpack.c.b16 %v1393, %v1389
  %v1438 = vpack.c.b16 %v1394, %v1390
  %v1439 = vpack.c.b16 %v1395, %v1391
  %v1440 = vpack.c.b16 %v1396, %v1392
  %v1441 = vpack.c.b16 %v1401, %v1397
  %v1442 = vpack.c.b16 %v1402, %v1398
  %v1443 = vpack.c.b16 %v1403, %v1399
  %v1444 = vpack.c.b16 %v1404, %v1400
  %v1445 = vpack.c.b16 %v1409, %v1405
  %v1446 = vpack.c.b16 %v1410, %v1406
  %v1447 = vpack.c.b16 %v1411, %v1407
  %v1448 = vpack.c.b16 %v1412, %v1408
  %v1449 = vpack.c.b16 %v1417, %v1413
  %v1450 = vpack.c.b16 %v1418, %v1414
  %v1451 = vpack.c.b16 %v1419, %v1415
  %v1452 = vpack.c.b16 %v1420, %v1416
  %1485 = vmatprep.subr.bf16.mxu0 %v1422
  %1486 = vmatpush1.bf16.msra.mxu0 %v1421
  %1487 = vmatprep.subr.bf16.mxu0 %v1426
  %1488 = vmatpush1.bf16.msra.mxu0 %v1425
  %1489 = vmatprep.subr.bf16.mxu0 %v1430
  %1490 = vmatpush1.bf16.msra.mxu0 %v1429
  %1491 = vmatprep.subr.bf16.mxu0 %v1434
  %1492 = vmatpush1.bf16.msra.mxu0 %v1433
  %1493 = vmatprep.subr.bf16.mxu0 %v1438
  %1494 = vmatpush1.bf16.msra.mxu0 %v1437
  %1495 = vmatprep.subr.bf16.mxu0 %v1442
  %1496 = vmatpush1.bf16.msra.mxu0 %v1441
  %1497 = vmatprep.subr.bf16.mxu0 %v1446
  %1498 = vmatpush1.bf16.msra.mxu0 %v1445
  %1499 = vmatprep.subr.bf16.mxu0 %v1450
  %1500 = vmatpush1.bf16.msra.mxu0 %v1449
  %1501 = vmatprep.subr.bf16.mxu0 0
  %1502 = vmatpush1.bf16.msra.mxu0 0
  %1503 = vmatprep.subr.bf16.mxu0 0
  %1504 = vmatpush1.bf16.msra.mxu0 0
  %1505 = vmatprep.subr.bf16.mxu0 0
  %1506 = vmatpush1.bf16.msra.mxu0 0
  %1507 = vmatprep.subr.bf16.mxu0 0
  %1508 = vmatpush1.bf16.msra.mxu0 0
  %1509 = vmatprep.subr.bf16.mxu0 0
  %1510 = vmatpush1.bf16.msra.mxu0 0
  %1511 = vmatprep.subr.bf16.mxu0 0
  %1512 = vmatpush1.bf16.msra.mxu0 0
  %1513 = vmatprep.subr.bf16.mxu0 0
  %1514 = vmatpush1.bf16.msra.mxu0 0
  %1515 = vmatprep.subr.bf16.mxu0 0
  %1516 = vmatpush1.bf16.msra.mxu0 0
  %1517 = vmatprep.mubr.bf16.mxu0 0
  %1518 = vmatmul.mubr.bf16.gmra.mrb[0].mxu0 %v1292
  %v1519 = vpop.f32.mrb[0].mxu0
  %v1520 = vadd.f32 0.0, %v1519
  %v1521 = vpop.f32.mrb[0].mxu0
  %v1522 = vadd.f32 0.0, %v1521
  %v1523 = vpop.f32.mrb[0].mxu0
  %v1524 = vpop.f32.mrb[0].mxu0
  %1525 = vdwg.mxu0
  %1526 = vmatprep.subr.bf16.mxu0 %v1424
  %1527 = vmatpush1.bf16.msra.mxu0 %v1423
  %1528 = vmatprep.subr.bf16.mxu0 %v1428
  %1529 = vmatpush1.bf16.msra.mxu0 %v1427
  %1530 = vmatprep.subr.bf16.mxu0 %v1432
  %1531 = vmatpush1.bf16.msra.mxu0 %v1431
  %1532 = vmatprep.subr.bf16.mxu0 %v1436
  %1533 = vmatpush1.bf16.msra.mxu0 %v1435
  %1534 = vmatprep.subr.bf16.mxu0 %v1440
  %1535 = vmatpush1.bf16.msra.mxu0 %v1439
  %1536 = vmatprep.subr.bf16.mxu0 %v1444
  %1537 = vmatpush1.bf16.msra.mxu0 %v1443
  %1538 = vmatprep.subr.bf16.mxu0 %v1448
  %1539 = vmatpush1.bf16.msra.mxu0 %v1447
  %1540 = vmatprep.subr.bf16.mxu0 %v1452
  %1541 = vmatpush1.bf16.msra.mxu0 %v1451
  %1542 = vmatprep.subr.bf16.mxu0 0
  %1543 = vmatpush1.bf16.msra.mxu0 0
  %1544 = vmatprep.subr.bf16.mxu0 0
  %1545 = vmatpush1.bf16.msra.mxu0 0
  %1546 = vmatprep.subr.bf16.mxu0 0
  %1547 = vmatpush1.bf16.msra.mxu0 0
  %1548 = vmatprep.subr.bf16.mxu0 0
  %1549 = vmatpush1.bf16.msra.mxu0 0
  %1550 = vmatprep.subr.bf16.mxu0 0
  %1551 = vmatpush1.bf16.msra.mxu0 0
  %1552 = vmatprep.subr.bf16.mxu0 0
  %1553 = vmatpush1.bf16.msra.mxu0 0
  %1554 = vmatprep.subr.bf16.mxu0 0
  %1555 = vmatpush1.bf16.msra.mxu0 0
  %1556 = vmatprep.subr.bf16.mxu0 0
  %1557 = vmatpush1.bf16.msra.mxu0 0
  %1558 = vmatprep.mubr.bf16.mxu0 0
  %1559 = vmatmul.mubr.bf16.gmra.mrb[0].mxu0 %v1292
  %v1560 = vpop.f32.mrb[0].mxu0
  %v1561 = vadd.f32 0.0, %v1560
  %v1562 = vpop.f32.mrb[0].mxu0
  %v1563 = vadd.f32 0.0, %v1562
  %v1564 = vpop.f32.mrb[0].mxu0
  %v1565 = vpop.f32.mrb[0].mxu0
  %1566 = vdwg.mxu0
  %v1567 = vadd.f32 %v1288, %v1520
  %v1568 = vadd.f32 %v1289, %v1522
  %v1569 = vadd.f32 %v1290, %v1561
  %v1570 = vadd.f32 %v1291, %v1563
  %v1571 = vxor.u32 %v1567, 2147483648
  %v1572 = vmul.f32 %v1571, 1.442695
  %v1573 = vpow.pop %v1572
  %v1574 = vadd.f32 %v1573, 1.0
  %v1575 = vrcp.pop %v1574
  %v1576 = vmul.f32 1.0, %v1575
  %v1577 = vxor.u32 %v1568, 2147483648
  %v1578 = vmul.f32 %v1577, 1.442695
  %v1579 = vpow.pop %v1578
  %v1580 = vadd.f32 %v1579, 1.0
  %v1581 = vrcp.pop %v1580
  %v1582 = vmul.f32 1.0, %v1581
  %v1583 = vtanh.pop %v1569
  %v1584 = vxor.u32 %v1570, 2147483648
  %v1585 = vmul.f32 %v1584, 1.442695
  %v1586 = vpow.pop %v1585
  %v1587 = vadd.f32 %v1586, 1.0
  %v1588 = vrcp.pop %v1587
  %v1589 = vmul.f32 1.0, %v1588
  %v1590 = vld [vmem:[#allocation3] sm:$0xff]
  %v1591 = vmul.f32 %v1582, %v1590
  %v1592 = vmul.f32 %v1576, %v1583
  %v1593 = vadd.f32 %v1591, %v1592
  %v1594 = vtanh.pop %v1593
  %v1595 = vmul.f32 %v1589, %v1594
  %1596 = vst [vmem:[#allocation3] sm:$0xff] %v1593
  %1597 = vst [vmem:[#allocation2] sm:$0xff] %v1595
  %v1598 = vpack.c.bf16 %v1595, %v1595
  %s1599 = scalar_lea.vmem %s2, 16
  %1600 = vst [vmem:[%s1599] sm:$0xf] %v1598
  %v1601 = vld [vmem:[#allocation2] sm:$0xff]
  %s1602 = scalar_lea.vmem %s0, 80
  %v1603 = vld [vmem:[%s1602] sm:$0xff]
  %v1604 = vld [vmem:[%s1602 + $0x8] sm:$0xff]
  %v1605 = vunpack.c.l.bf16 %v1603
  %v1606 = vunpack.c.h.bf16 %v1603
  %v1607 = vunpack.c.l.bf16 %v1604
  %v1608 = vunpack.c.h.bf16 %v1604
  %v1609 = vpack.c.bf16 %v1601, %v1601
  %v1610 = vld [vmem:[%s1] sm:$0xff]
  %v1611 = vld [vmem:[%s1 + $0x8] sm:$0xff]
  %v1612 = vld [vmem:[%s1 + $0x10] sm:$0xff]
  %v1613 = vld [vmem:[%s1 + $0x18] sm:$0xff]
  %v1614 = vld [vmem:[%s1 + $0x20] sm:$0xff]
  %v1615 = vld [vmem:[%s1 + $0x28] sm:$0xff]
  %v1616 = vld [vmem:[%s1 + $0x30] sm:$0xff]
  %v1617 = vld [vmem:[%s1 + $0x38] sm:$0xff]
  %v1618 = vld [vmem:[%s1 + $0x40] sm:$0xff]
  %v1619 = vld [vmem:[%s1 + $0x48] sm:$0xff]
  %v1620 = vld [vmem:[%s1 + $0x50] sm:$0xff]
  %v1621 = vld [vmem:[%s1 + $0x58] sm:$0xff]
  %v1622 = vld [vmem:[%s1 + $0x60] sm:$0xff]
  %v1623 = vld [vmem:[%s1 + $0x68] sm:$0xff]
  %v1624 = vld [vmem:[%s1 + $0x70] sm:$0xff]
  %v1625 = vld [vmem:[%s1 + $0x78] sm:$0xff]
  %v1626 = vld [vmem:[%s1 + $0x80] sm:$0xff]
  %v1627 = vld [vmem:[%s1 + $0x88] sm:$0xff]
  %v1628 = vld [vmem:[%s1 + $0x90] sm:$0xff]
  %v1629 = vld [vmem:[%s1 + $0x98] sm:$0xff]
  %v1630 = vld [vmem:[%s1 + $0xa0] sm:$0xff]
  %v1631 = vld [vmem:[%s1 + $0xa8] sm:$0xff]
  %v1632 = vld [vmem:[%s1 + $0xb0] sm:$0xff]
  %v1633 = vld [vmem:[%s1 + $0xb8] sm:$0xff]
  %v1634 = vld [vmem:[%s1 + $0xc0] sm:$0xff]
  %v1635 = vld [vmem:[%s1 + $0xc8] sm:$0xff]
  %v1636 = vld [vmem:[%s1 + $0xd0] sm:$0xff]
  %v1637 = vld [vmem:[%s1 + $0xd8] sm:$0xff]
  %v1638 = vld [vmem:[%s1 + $0xe0] sm:$0xff]
  %v1639 = vld [vmem:[%s1 + $0xe8] sm:$0xff]
  %v1640 = vld [vmem:[%s1 + $0xf0] sm:$0xff]
  %v1641 = vld [vmem:[%s1 + $0xf8] sm:$0xff]
  %v1674 = vunpack.c.l.b16 %v1610
  %v1675 = vunpack.c.h.b16 %v1610
  %v1676 = vunpack.c.l.b16 %v1611
  %v1677 = vunpack.c.h.b16 %v1611
  %v1678 = vunpack.c.l.b16 %v1612
  %v1679 = vunpack.c.h.b16 %v1612
  %v1680 = vunpack.c.l.b16 %v1613
  %v1681 = vunpack.c.h.b16 %v1613
  %v1682 = vunpack.c.l.b16 %v1614
  %v1683 = vunpack.c.h.b16 %v1614
  %v1684 = vunpack.c.l.b16 %v1615
  %v1685 = vunpack.c.h.b16 %v1615
  %v1686 = vunpack.c.l.b16 %v1616
  %v1687 = vunpack.c.h.b16 %v1616
  %v1688 = vunpack.c.l.b16 %v1617
  %v1689 = vunpack.c.h.b16 %v1617
  %v1690 = vunpack.c.l.b16 %v1618
  %v1691 = vunpack.c.h.b16 %v1618
  %v1692 = vunpack.c.l.b16 %v1619
  %v1693 = vunpack.c.h.b16 %v1619
  %v1694 = vunpack.c.l.b16 %v1620
  %v1695 = vunpack.c.h.b16 %v1620
  %v1696 = vunpack.c.l.b16 %v1621
  %v1697 = vunpack.c.h.b16 %v1621
  %v1698 = vunpack.c.l.b16 %v1622
  %v1699 = vunpack.c.h.b16 %v1622
  %v1700 = vunpack.c.l.b16 %v1623
  %v1701 = vunpack.c.h.b16 %v1623
  %v1702 = vunpack.c.l.b16 %v1624
  %v1703 = vunpack.c.h.b16 %v1624
  %v1704 = vunpack.c.l.b16 %v1625
  %v1705 = vunpack.c.h.b16 %v1625
  %v1706 = vunpack.c.l.b16 %v1626
  %v1707 = vunpack.c.h.b16 %v1626
  %v1708 = vunpack.c.l.b16 %v1627
  %v1709 = vunpack.c.h.b16 %v1627
  %v1710 = vunpack.c.l.b16 %v1628
  %v1711 = vunpack.c.h.b16 %v1628
  %v1712 = vunpack.c.l.b16 %v1629
  %v1713 = vunpack.c.h.b16 %v1629
  %v1714 = vunpack.c.l.b16 %v1630
  %v1715 = vunpack.c.h.b16 %v1630
  %v1716 = vunpack.c.l.b16 %v1631
  %v1717 = vunpack.c.h.b16 %v1631
  %v1718 = vunpack.c.l.b16 %v1632
  %v1719 = vunpack.c.h.b16 %v1632
  %v1720 = vunpack.c.l.b16 %v1633
  %v1721 = vunpack.c.h.b16 %v1633
  %v1722 = vunpack.c.l.b16 %v1634
  %v1723 = vunpack.c.h.b16 %v1634
  %v1724 = vunpack.c.l.b16 %v1635
  %v1725 = vunpack.c.h.b16 %v1635
  %v1726 = vunpack.c.l.b16 %v1636
  %v1727 = vunpack.c.h.b16 %v1636
  %v1728 = vunpack.c.l.b16 %v1637
  %v1729 = vunpack.c.h.b16 %v1637
  %v1730 = vunpack.c.l.b16 %v1638
  %v1731 = vunpack.c.h.b16 %v1638
  %v1732 = vunpack.c.l.b16 %v1639
  %v1733 = vunpack.c.h.b16 %v1639
  %v1734 = vunpack.c.l.b16 %v1640
  %v1735 = vunpack.c.h.b16 %v1640
  %v1736 = vunpack.c.l.b16 %v1641
  %v1737 = vunpack.c.h.b16 %v1641
  %v1738 = vpack.c.b16 %v1678, %v1674
  %v1739 = vpack.c.b16 %v1679, %v1675
  %v1740 = vpack.c.b16 %v1680, %v1676
  %v1741 = vpack.c.b16 %v1681, %v1677
  %v1742 = vpack.c.b16 %v1686, %v1682
  %v1743 = vpack.c.b16 %v1687, %v1683
  %v1744 = vpack.c.b16 %v1688, %v1684
  %v1745 = vpack.c.b16 %v1689, %v1685
  %v1746 = vpack.c.b16 %v1694, %v1690
  %v1747 = vpack.c.b16 %v1695, %v1691
  %v1748 = vpack.c.b16 %v1696, %v1692
  %v1749 = vpack.c.b16 %v1697, %v1693
  %v1750 = vpack.c.b16 %v1702, %v1698
  %v1751 = vpack.c.b16 %v1703, %v1699
  %v1752 = vpack.c.b16 %v1704, %v1700
  %v1753 = vpack.c.b16 %v1705, %v1701
  %v1754 = vpack.c.b16 %v1710, %v1706
  %v1755 = vpack.c.b16 %v1711, %v1707
  %v1756 = vpack.c.b16 %v1712, %v1708
  %v1757 = vpack.c.b16 %v1713, %v1709
  %v1758 = vpack.c.b16 %v1718, %v1714
  %v1759 = vpack.c.b16 %v1719, %v1715
  %v1760 = vpack.c.b16 %v1720, %v1716
  %v1761 = vpack.c.b16 %v1721, %v1717
  %v1762 = vpack.c.b16 %v1726, %v1722
  %v1763 = vpack.c.b16 %v1727, %v1723
  %v1764 = vpack.c.b16 %v1728, %v1724
  %v1765 = vpack.c.b16 %v1729, %v1725
  %v1766 = vpack.c.b16 %v1734, %v1730
  %v1767 = vpack.c.b16 %v1735, %v1731
  %v1768 = vpack.c.b16 %v1736, %v1732
  %v1769 = vpack.c.b16 %v1737, %v1733
  %1802 = vmatprep.subr.bf16.mxu0 %v1739
  %1803 = vmatpush1.bf16.msra.mxu0 %v1738
  %1804 = vmatprep.subr.bf16.mxu0 %v1743
  %1805 = vmatpush1.bf16.msra.mxu0 %v1742
  %1806 = vmatprep.subr.bf16.mxu0 %v1747
  %1807 = vmatpush1.bf16.msra.mxu0 %v1746
  %1808 = vmatprep.subr.bf16.mxu0 %v1751
  %1809 = vmatpush1.bf16.msra.mxu0 %v1750
  %1810 = vmatprep.subr.bf16.mxu0 %v1755
  %1811 = vmatpush1.bf16.msra.mxu0 %v1754
  %1812 = vmatprep.subr.bf16.mxu0 %v1759
  %1813 = vmatpush1.bf16.msra.mxu0 %v1758
  %1814 = vmatprep.subr.bf16.mxu0 %v1763
  %1815 = vmatpush1.bf16.msra.mxu0 %v1762
  %1816 = vmatprep.subr.bf16.mxu0 %v1767
  %1817 = vmatpush1.bf16.msra.mxu0 %v1766
  %1818 = vmatprep.subr.bf16.mxu0 0
  %1819 = vmatpush1.bf16.msra.mxu0 0
  %1820 = vmatprep.subr.bf16.mxu0 0
  %1821 = vmatpush1.bf16.msra.mxu0 0
  %1822 = vmatprep.subr.bf16.mxu0 0
  %1823 = vmatpush1.bf16.msra.mxu0 0
  %1824 = vmatprep.subr.bf16.mxu0 0
  %1825 = vmatpush1.bf16.msra.mxu0 0
  %1826 = vmatprep.subr.bf16.mxu0 0
  %1827 = vmatpush1.bf16.msra.mxu0 0
  %1828 = vmatprep.subr.bf16.mxu0 0
  %1829 = vmatpush1.bf16.msra.mxu0 0
  %1830 = vmatprep.subr.bf16.mxu0 0
  %1831 = vmatpush1.bf16.msra.mxu0 0
  %1832 = vmatprep.subr.bf16.mxu0 0
  %1833 = vmatpush1.bf16.msra.mxu0 0
  %1834 = vmatprep.mubr.bf16.mxu0 0
  %1835 = vmatmul.mubr.bf16.gmra.mrb[0].mxu0 %v1609
  %v1836 = vpop.f32.mrb[0].mxu0
  %v1837 = vadd.f32 0.0, %v1836
  %v1838 = vpop.f32.mrb[0].mxu0
  %v1839 = vadd.f32 0.0, %v1838
  %v1840 = vpop.f32.mrb[0].mxu0
  %v1841 = vpop.f32.mrb[0].mxu0
  %1842 = vdwg.mxu0
  %1843 = vmatprep.subr.bf16.mxu0 %v1741
  %1844 = vmatpush1.bf16.msra.mxu0 %v1740
  %1845 = vmatprep.subr.bf16.mxu0 %v1745
  %1846 = vmatpush1.bf16.msra.mxu0 %v1744
  %1847 = vmatprep.subr.bf16.mxu0 %v1749
  %1848 = vmatpush1.bf16.msra.mxu0 %v1748
  %1849 = vmatprep.subr.bf16.mxu0 %v1753
  %1850 = vmatpush1.bf16.msra.mxu0 %v1752
  %1851 = vmatprep.subr.bf16.mxu0 %v1757
  %1852 = vmatpush1.bf16.msra.mxu0 %v1756
  %1853 = vmatprep.subr.bf16.mxu0 %v1761
  %1854 = vmatpush1.bf16.msra.mxu0 %v1760
  %1855 = vmatprep.subr.bf16.mxu0 %v1765
  %1856 = vmatpush1.bf16.msra.mxu0 %v1764
  %1857 = vmatprep.subr.bf16.mxu0 %v1769
  %1858 = vmatpush1.bf16.msra.mxu0 %v1768
  %1859 = vmatprep.subr.bf16.mxu0 0
  %1860 = vmatpush1.bf16.msra.mxu0 0
  %1861 = vmatprep.subr.bf16.mxu0 0
  %1862 = vmatpush1.bf16.msra.mxu0 0
  %1863 = vmatprep.subr.bf16.mxu0 0
  %1864 = vmatpush1.bf16.msra.mxu0 0
  %1865 = vmatprep.subr.bf16.mxu0 0
  %1866 = vmatpush1.bf16.msra.mxu0 0
  %1867 = vmatprep.subr.bf16.mxu0 0
  %1868 = vmatpush1.bf16.msra.mxu0 0
  %1869 = vmatprep.subr.bf16.mxu0 0
  %1870 = vmatpush1.bf16.msra.mxu0 0
  %1871 = vmatprep.subr.bf16.mxu0 0
  %1872 = vmatpush1.bf16.msra.mxu0 0
  %1873 = vmatprep.subr.bf16.mxu0 0
  %1874 = vmatpush1.bf16.msra.mxu0 0
  %1875 = vmatprep.mubr.bf16.mxu0 0
  %1876 = vmatmul.mubr.bf16.gmra.mrb[0].mxu0 %v1609
  %v1877 = vpop.f32.mrb[0].mxu0
  %v1878 = vadd.f32 0.0, %v1877
  %v1879 = vpop.f32.mrb[0].mxu0
  %v1880 = vadd.f32 0.0, %v1879
  %v1881 = vpop.f32.mrb[0].mxu0
  %v1882 = vpop.f32.mrb[0].mxu0
  %1883 = vdwg.mxu0
  %v1884 = vadd.f32 %v1605, %v1837
  %v1885 = vadd.f32 %v1606, %v1839
  %v1886 = vadd.f32 %v1607, %v1878
  %v1887 = vadd.f32 %v1608, %v1880
  %v1888 = vxor.u32 %v1884, 2147483648
  %v1889 = vmul.f32 %v1888, 1.442695
  %v1890 = vpow.pop %v1889
  %v1891 = vadd.f32 %v1890, 1.0
  %v1892 = vrcp.pop %v1891
  %v1893 = vmul.f32 1.0, %v1892
  %v1894 = vxor.u32 %v1885, 2147483648
  %v1895 = vmul.f32 %v1894, 1.442695
  %v1896 = vpow.pop %v1895
  %v1897 = vadd.f32 %v1896, 1.0
  %v1898 = vrcp.pop %v1897
  %v1899 = vmul.f32 1.0, %v1898
  %v1900 = vtanh.pop %v1886
  %v1901 = vxor.u32 %v1887, 2147483648
  %v1902 = vmul.f32 %v1901, 1.442695
  %v1903 = vpow.pop %v1902
  %v1904 = vadd.f32 %v1903, 1.0
  %v1905 = vrcp.pop %v1904
  %v1906 = vmul.f32 1.0, %v1905
  %v1907 = vld [vmem:[#allocation3] sm:$0xff]
  %v1908 = vmul.f32 %v1899, %v1907
  %v1909 = vmul.f32 %v1893, %v1900
  %v1910 = vadd.f32 %v1908, %v1909
  %v1911 = vtanh.pop %v1910
  %v1912 = vmul.f32 %v1906, %v1911
  %1913 = vst [vmem:[#allocation3] sm:$0xff] %v1910
  %1914 = vst [vmem:[#allocation2] sm:$0xff] %v1912
  %v1915 = vpack.c.bf16 %v1912, %v1912
  %s1916 = scalar_lea.vmem %s2, 20
  %1917 = vst [vmem:[%s1916] sm:$0xf] %v1915
  %v1918 = vld [vmem:[#allocation2] sm:$0xff]
  %s1919 = scalar_lea.vmem %s0, 96
  %v1920 = vld [vmem:[%s1919] sm:$0xff]
  %v1921 = vld [vmem:[%s1919 + $0x8] sm:$0xff]
  %v1922 = vunpack.c.l.bf16 %v1920
  %v1923 = vunpack.c.h.bf16 %v1920
  %v1924 = vunpack.c.l.bf16 %v1921
  %v1925 = vunpack.c.h.bf16 %v1921
  %v1926 = vpack.c.bf16 %v1918, %v1918
  %v1927 = vld [vmem:[%s1] sm:$0xff]
  %v1928 = vld [vmem:[%s1 + $0x8] sm:$0xff]
  %v1929 = vld [vmem:[%s1 + $0x10] sm:$0xff]
  %v1930 = vld [vmem:[%s1 + $0x18] sm:$0xff]
  %v1931 = vld [vmem:[%s1 + $0x20] sm:$0xff]
  %v1932 = vld [vmem:[%s1 + $0x28] sm:$0xff]
  %v1933 = vld [vmem:[%s1 + $0x30] sm:$0xff]
  %v1934 = vld [vmem:[%s1 + $0x38] sm:$0xff]
  %v1935 = vld [vmem:[%s1 + $0x40] sm:$0xff]
  %v1936 = vld [vmem:[%s1 + $0x48] sm:$0xff]
  %v1937 = vld [vmem:[%s1 + $0x50] sm:$0xff]
  %v1938 = vld [vmem:[%s1 + $0x58] sm:$0xff]
  %v1939 = vld [vmem:[%s1 + $0x60] sm:$0xff]
  %v1940 = vld [vmem:[%s1 + $0x68] sm:$0xff]
  %v1941 = vld [vmem:[%s1 + $0x70] sm:$0xff]
  %v1942 = vld [vmem:[%s1 + $0x78] sm:$0xff]
  %v1943 = vld [vmem:[%s1 + $0x80] sm:$0xff]
  %v1944 = vld [vmem:[%s1 + $0x88] sm:$0xff]
  %v1945 = vld [vmem:[%s1 + $0x90] sm:$0xff]
  %v1946 = vld [vmem:[%s1 + $0x98] sm:$0xff]
  %v1947 = vld [vmem:[%s1 + $0xa0] sm:$0xff]
  %v1948 = vld [vmem:[%s1 + $0xa8] sm:$0xff]
  %v1949 = vld [vmem:[%s1 + $0xb0] sm:$0xff]
  %v1950 = vld [vmem:[%s1 + $0xb8] sm:$0xff]
  %v1951 = vld [vmem:[%s1 + $0xc0] sm:$0xff]
  %v1952 = vld [vmem:[%s1 + $0xc8] sm:$0xff]
  %v1953 = vld [vmem:[%s1 + $0xd0] sm:$0xff]
  %v1954 = vld [vmem:[%s1 + $0xd8] sm:$0xff]
  %v1955 = vld [vmem:[%s1 + $0xe0] sm:$0xff]
  %v1956 = vld [vmem:[%s1 + $0xe8] sm:$0xff]
  %v1957 = vld [vmem:[%s1 + $0xf0] sm:$0xff]
  %v1958 = vld [vmem:[%s1 + $0xf8] sm:$0xff]
  %v1991 = vunpack.c.l.b16 %v1927
  %v1992 = vunpack.c.h.b16 %v1927
  %v1993 = vunpack.c.l.b16 %v1928
  %v1994 = vunpack.c.h.b16 %v1928
  %v1995 = vunpack.c.l.b16 %v1929
  %v1996 = vunpack.c.h.b16 %v1929
  %v1997 = vunpack.c.l.b16 %v1930
  %v1998 = vunpack.c.h.b16 %v1930
  %v1999 = vunpack.c.l.b16 %v1931
  %v2000 = vunpack.c.h.b16 %v1931
  %v2001 = vunpack.c.l.b16 %v1932
  %v2002 = vunpack.c.h.b16 %v1932
  %v2003 = vunpack.c.l.b16 %v1933
  %v2004 = vunpack.c.h.b16 %v1933
  %v2005 = vunpack.c.l.b16 %v1934
  %v2006 = vunpack.c.h.b16 %v1934
  %v2007 = vunpack.c.l.b16 %v1935
  %v2008 = vunpack.c.h.b16 %v1935
  %v2009 = vunpack.c.l.b16 %v1936
  %v2010 = vunpack.c.h.b16 %v1936
  %v2011 = vunpack.c.l.b16 %v1937
  %v2012 = vunpack.c.h.b16 %v1937
  %v2013 = vunpack.c.l.b16 %v1938
  %v2014 = vunpack.c.h.b16 %v1938
  %v2015 = vunpack.c.l.b16 %v1939
  %v2016 = vunpack.c.h.b16 %v1939
  %v2017 = vunpack.c.l.b16 %v1940
  %v2018 = vunpack.c.h.b16 %v1940
  %v2019 = vunpack.c.l.b16 %v1941
  %v2020 = vunpack.c.h.b16 %v1941
  %v2021 = vunpack.c.l.b16 %v1942
  %v2022 = vunpack.c.h.b16 %v1942
  %v2023 = vunpack.c.l.b16 %v1943
  %v2024 = vunpack.c.h.b16 %v1943
  %v2025 = vunpack.c.l.b16 %v1944
  %v2026 = vunpack.c.h.b16 %v1944
  %v2027 = vunpack.c.l.b16 %v1945
  %v2028 = vunpack.c.h.b16 %v1945
  %v2029 = vunpack.c.l.b16 %v1946
  %v2030 = vunpack.c.h.b16 %v1946
  %v2031 = vunpack.c.l.b16 %v1947
  %v2032 = vunpack.c.h.b16 %v1947
  %v2033 = vunpack.c.l.b16 %v1948
  %v2034 = vunpack.c.h.b16 %v1948
  %v2035 = vunpack.c.l.b16 %v1949
  %v2036 = vunpack.c.h.b16 %v1949
  %v2037 = vunpack.c.l.b16 %v1950
  %v2038 = vunpack.c.h.b16 %v1950
  %v2039 = vunpack.c.l.b16 %v1951
  %v2040 = vunpack.c.h.b16 %v1951
  %v2041 = vunpack.c.l.b16 %v1952
  %v2042 = vunpack.c.h.b16 %v1952
  %v2043 = vunpack.c.l.b16 %v1953
  %v2044 = vunpack.c.h.b16 %v1953
  %v2045 = vunpack.c.l.b16 %v1954
  %v2046 = vunpack.c.h.b16 %v1954
  %v2047 = vunpack.c.l.b16 %v1955
  %v2048 = vunpack.c.h.b16 %v1955
  %v2049 = vunpack.c.l.b16 %v1956
  %v2050 = vunpack.c.h.b16 %v1956
  %v2051 = vunpack.c.l.b16 %v1957
  %v2052 = vunpack.c.h.b16 %v1957
  %v2053 = vunpack.c.l.b16 %v1958
  %v2054 = vunpack.c.h.b16 %v1958
  %v2055 = vpack.c.b16 %v1995, %v1991
  %v2056 = vpack.c.b16 %v1996, %v1992
  %v2057 = vpack.c.b16 %v1997, %v1993
  %v2058 = vpack.c.b16 %v1998, %v1994
  %v2059 = vpack.c.b16 %v2003, %v1999
  %v2060 = vpack.c.b16 %v2004, %v2000
  %v2061 = vpack.c.b16 %v2005, %v2001
  %v2062 = vpack.c.b16 %v2006, %v2002
  %v2063 = vpack.c.b16 %v2011, %v2007
  %v2064 = vpack.c.b16 %v2012, %v2008
  %v2065 = vpack.c.b16 %v2013, %v2009
  %v2066 = vpack.c.b16 %v2014, %v2010
  %v2067 = vpack.c.b16 %v2019, %v2015
  %v2068 = vpack.c.b16 %v2020, %v2016
  %v2069 = vpack.c.b16 %v2021, %v2017
  %v2070 = vpack.c.b16 %v2022, %v2018
  %v2071 = vpack.c.b16 %v2027, %v2023
  %v2072 = vpack.c.b16 %v2028, %v2024
  %v2073 = vpack.c.b16 %v2029, %v2025
  %v2074 = vpack.c.b16 %v2030, %v2026
  %v2075 = vpack.c.b16 %v2035, %v2031
  %v2076 = vpack.c.b16 %v2036, %v2032
  %v2077 = vpack.c.b16 %v2037, %v2033
  %v2078 = vpack.c.b16 %v2038, %v2034
  %v2079 = vpack.c.b16 %v2043, %v2039
  %v2080 = vpack.c.b16 %v2044, %v2040
  %v2081 = vpack.c.b16 %v2045, %v2041
  %v2082 = vpack.c.b16 %v2046, %v2042
  %v2083 = vpack.c.b16 %v2051, %v2047
  %v2084 = vpack.c.b16 %v2052, %v2048
  %v2085 = vpack.c.b16 %v2053, %v2049
  %v2086 = vpack.c.b16 %v2054, %v2050
  %2119 = vmatprep.subr.bf16.mxu0 %v2056
  %2120 = vmatpush1.bf16.msra.mxu0 %v2055
  %2121 = vmatprep.subr.bf16.mxu0 %v2060
  %2122 = vmatpush1.bf16.msra.mxu0 %v2059
  %2123 = vmatprep.subr.bf16.mxu0 %v2064
  %2124 = vmatpush1.bf16.msra.mxu0 %v2063
  %2125 = vmatprep.subr.bf16.mxu0 %v2068
  %2126 = vmatpush1.bf16.msra.mxu0 %v2067
  %2127 = vmatprep.subr.bf16.mxu0 %v2072
  %2128 = vmatpush1.bf16.msra.mxu0 %v2071
  %2129 = vmatprep.subr.bf16.mxu0 %v2076
  %2130 = vmatpush1.bf16.msra.mxu0 %v2075
  %2131 = vmatprep.subr.bf16.mxu0 %v2080
  %2132 = vmatpush1.bf16.msra.mxu0 %v2079
  %2133 = vmatprep.subr.bf16.mxu0 %v2084
  %2134 = vmatpush1.bf16.msra.mxu0 %v2083
  %2135 = vmatprep.subr.bf16.mxu0 0
  %2136 = vmatpush1.bf16.msra.mxu0 0
  %2137 = vmatprep.subr.bf16.mxu0 0
  %2138 = vmatpush1.bf16.msra.mxu0 0
  %2139 = vmatprep.subr.bf16.mxu0 0
  %2140 = vmatpush1.bf16.msra.mxu0 0
  %2141 = vmatprep.subr.bf16.mxu0 0
  %2142 = vmatpush1.bf16.msra.mxu0 0
  %2143 = vmatprep.subr.bf16.mxu0 0
  %2144 = vmatpush1.bf16.msra.mxu0 0
  %2145 = vmatprep.subr.bf16.mxu0 0
  %2146 = vmatpush1.bf16.msra.mxu0 0
  %2147 = vmatprep.subr.bf16.mxu0 0
  %2148 = vmatpush1.bf16.msra.mxu0 0
  %2149 = vmatprep.subr.bf16.mxu0 0
  %2150 = vmatpush1.bf16.msra.mxu0 0
  %2151 = vmatprep.mubr.bf16.mxu0 0
  %2152 = vmatmul.mubr.bf16.gmra.mrb[0].mxu0 %v1926
  %v2153 = vpop.f32.mrb[0].mxu0
  %v2154 = vadd.f32 0.0, %v2153
  %v2155 = vpop.f32.mrb[0].mxu0
  %v2156 = vadd.f32 0.0, %v2155
  %v2157 = vpop.f32.mrb[0].mxu0
  %v2158 = vpop.f32.mrb[0].mxu0
  %2159 = vdwg.mxu0
  %2160 = vmatprep.subr.bf16.mxu0 %v2058
  %2161 = vmatpush1.bf16.msra.mxu0 %v2057
  %2162 = vmatprep.subr.bf16.mxu0 %v2062
  %2163 = vmatpush1.bf16.msra.mxu0 %v2061
  %2164 = vmatprep.subr.bf16.mxu0 %v2066
  %2165 = vmatpush1.bf16.msra.mxu0 %v2065
  %2166 = vmatprep.subr.bf16.mxu0 %v2070
  %2167 = vmatpush1.bf16.msra.mxu0 %v2069
  %2168 = vmatprep.subr.bf16.mxu0 %v2074
  %2169 = vmatpush1.bf16.msra.mxu0 %v2073
  %2170 = vmatprep.subr.bf16.mxu0 %v2078
  %2171 = vmatpush1.bf16.msra.mxu0 %v2077
  %2172 = vmatprep.subr.bf16.mxu0 %v2082
  %2173 = vmatpush1.bf16.msra.mxu0 %v2081
  %2174 = vmatprep.subr.bf16.mxu0 %v2086
  %2175 = vmatpush1.bf16.msra.mxu0 %v2085
  %2176 = vmatprep.subr.bf16.mxu0 0
  %2177 = vmatpush1.bf16.msra.mxu0 0
  %2178 = vmatprep.subr.bf16.mxu0 0
  %2179 = vmatpush1.bf16.msra.mxu0 0
  %2180 = vmatprep.subr.bf16.mxu0 0
  %2181 = vmatpush1.bf16.msra.mxu0 0
  %2182 = vmatprep.subr.bf16.mxu0 0
  %2183 = vmatpush1.bf16.msra.mxu0 0
  %2184 = vmatprep.subr.bf16.mxu0 0
  %2185 = vmatpush1.bf16.msra.mxu0 0
  %2186 = vmatprep.subr.bf16.mxu0 0
  %2187 = vmatpush1.bf16.msra.mxu0 0
  %2188 = vmatprep.subr.bf16.mxu0 0
  %2189 = vmatpush1.bf16.msra.mxu0 0
  %2190 = vmatprep.subr.bf16.mxu0 0
  %2191 = vmatpush1.bf16.msra.mxu0 0
  %2192 = vmatprep.mubr.bf16.mxu0 0
  %2193 = vmatmul.mubr.bf16.gmra.mrb[0].mxu0 %v1926
  %v2194 = vpop.f32.mrb[0].mxu0
  %v2195 = vadd.f32 0.0, %v2194
  %v2196 = vpop.f32.mrb[0].mxu0
  %v2197 = vadd.f32 0.0, %v2196
  %v2198 = vpop.f32.mrb[0].mxu0
  %v2199 = vpop.f32.mrb[0].mxu0
  %2200 = vdwg.mxu0
  %v2201 = vadd.f32 %v1922, %v2154
  %v2202 = vadd.f32 %v1923, %v2156
  %v2203 = vadd.f32 %v1924, %v2195
  %v2204 = vadd.f32 %v1925, %v2197
  %v2205 = vxor.u32 %v2201, 2147483648
  %v2206 = vmul.f32 %v2205, 1.442695
  %v2207 = vpow.pop %v2206
  %v2208 = vadd.f32 %v2207, 1.0
  %v2209 = vrcp.pop %v2208
  %v2210 = vmul.f32 1.0, %v2209
  %v2211 = vxor.u32 %v2202, 2147483648
  %v2212 = vmul.f32 %v2211, 1.442695
  %v2213 = vpow.pop %v2212
  %v2214 = vadd.f32 %v2213, 1.0
  %v2215 = vrcp.pop %v2214
  %v2216 = vmul.f32 1.0, %v2215
  %v2217 = vtanh.pop %v2203
  %v2218 = vxor.u32 %v2204, 2147483648
  %v2219 = vmul.f32 %v2218, 1.442695
  %v2220 = vpow.pop %v2219
  %v2221 = vadd.f32 %v2220, 1.0
  %v2222 = vrcp.pop %v2221
  %v2223 = vmul.f32 1.0, %v2222
  %v2224 = vld [vmem:[#allocation3] sm:$0xff]
  %v2225 = vmul.f32 %v2216, %v2224
  %v2226 = vmul.f32 %v2210, %v2217
  %v2227 = vadd.f32 %v2225, %v2226
  %v2228 = vtanh.pop %v2227
  %v2229 = vmul.f32 %v2223, %v2228
  %2230 = vst [vmem:[#allocation3] sm:$0xff] %v2227
  %2231 = vst [vmem:[#allocation2] sm:$0xff] %v2229
  %v2232 = vpack.c.bf16 %v2229, %v2229
  %s2233 = scalar_lea.vmem %s2, 24
  %2234 = vst [vmem:[%s2233] sm:$0xf] %v2232
  %v2235 = vld [vmem:[#allocation2] sm:$0xff]
  %s2236 = scalar_lea.vmem %s0, 112
  %v2237 = vld [vmem:[%s2236] sm:$0xff]
  %v2238 = vld [vmem:[%s2236 + $0x8] sm:$0xff]
  %v2239 = vunpack.c.l.bf16 %v2237
  %v2240 = vunpack.c.h.bf16 %v2237
  %v2241 = vunpack.c.l.bf16 %v2238
  %v2242 = vunpack.c.h.bf16 %v2238
  %v2243 = vpack.c.bf16 %v2235, %v2235
  %v2244 = vld [vmem:[%s1] sm:$0xff]
  %v2245 = vld [vmem:[%s1 + $0x8] sm:$0xff]
  %v2246 = vld [vmem:[%s1 + $0x10] sm:$0xff]
  %v2247 = vld [vmem:[%s1 + $0x18] sm:$0xff]
  %v2248 = vld [vmem:[%s1 + $0x20] sm:$0xff]
  %v2249 = vld [vmem:[%s1 + $0x28] sm:$0xff]
  %v2250 = vld [vmem:[%s1 + $0x30] sm:$0xff]
  %v2251 = vld [vmem:[%s1 + $0x38] sm:$0xff]
  %v2252 = vld [vmem:[%s1 + $0x40] sm:$0xff]
  %v2253 = vld [vmem:[%s1 + $0x48] sm:$0xff]
  %v2254 = vld [vmem:[%s1 + $0x50] sm:$0xff]
  %v2255 = vld [vmem:[%s1 + $0x58] sm:$0xff]
  %v2256 = vld [vmem:[%s1 + $0x60] sm:$0xff]
  %v2257 = vld [vmem:[%s1 + $0x68] sm:$0xff]
  %v2258 = vld [vmem:[%s1 + $0x70] sm:$0xff]
  %v2259 = vld [vmem:[%s1 + $0x78] sm:$0xff]
  %v2260 = vld [vmem:[%s1 + $0x80] sm:$0xff]
  %v2261 = vld [vmem:[%s1 + $0x88] sm:$0xff]
  %v2262 = vld [vmem:[%s1 + $0x90] sm:$0xff]
  %v2263 = vld [vmem:[%s1 + $0x98] sm:$0xff]
  %v2264 = vld [vmem:[%s1 + $0xa0] sm:$0xff]
  %v2265 = vld [vmem:[%s1 + $0xa8] sm:$0xff]
  %v2266 = vld [vmem:[%s1 + $0xb0] sm:$0xff]
  %v2267 = vld [vmem:[%s1 + $0xb8] sm:$0xff]
  %v2268 = vld [vmem:[%s1 + $0xc0] sm:$0xff]
  %v2269 = vld [vmem:[%s1 + $0xc8] sm:$0xff]
  %v2270 = vld [vmem:[%s1 + $0xd0] sm:$0xff]
  %v2271 = vld [vmem:[%s1 + $0xd8] sm:$0xff]
  %v2272 = vld [vmem:[%s1 + $0xe0] sm:$0xff]
  %v2273 = vld [vmem:[%s1 + $0xe8] sm:$0xff]
  %v2274 = vld [vmem:[%s1 + $0xf0] sm:$0xff]
  %v2275 = vld [vmem:[%s1 + $0xf8] sm:$0xff]
  %v2308 = vunpack.c.l.b16 %v2244
  %v2309 = vunpack.c.h.b16 %v2244
  %v2310 = vunpack.c.l.b16 %v2245
  %v2311 = vunpack.c.h.b16 %v2245
  %v2312 = vunpack.c.l.b16 %v2246
  %v2313 = vunpack.c.h.b16 %v2246
  %v2314 = vunpack.c.l.b16 %v2247
  %v2315 = vunpack.c.h.b16 %v2247
  %v2316 = vunpack.c.l.b16 %v2248
  %v2317 = vunpack.c.h.b16 %v2248
  %v2318 = vunpack.c.l.b16 %v2249
  %v2319 = vunpack.c.h.b16 %v2249
  %v2320 = vunpack.c.l.b16 %v2250
  %v2321 = vunpack.c.h.b16 %v2250
  %v2322 = vunpack.c.l.b16 %v2251
  %v2323 = vunpack.c.h.b16 %v2251
  %v2324 = vunpack.c.l.b16 %v2252
  %v2325 = vunpack.c.h.b16 %v2252
  %v2326 = vunpack.c.l.b16 %v2253
  %v2327 = vunpack.c.h.b16 %v2253
  %v2328 = vunpack.c.l.b16 %v2254
  %v2329 = vunpack.c.h.b16 %v2254
  %v2330 = vunpack.c.l.b16 %v2255
  %v2331 = vunpack.c.h.b16 %v2255
  %v2332 = vunpack.c.l.b16 %v2256
  %v2333 = vunpack.c.h.b16 %v2256
  %v2334 = vunpack.c.l.b16 %v2257
  %v2335 = vunpack.c.h.b16 %v2257
  %v2336 = vunpack.c.l.b16 %v2258
  %v2337 = vunpack.c.h.b16 %v2258
  %v2338 = vunpack.c.l.b16 %v2259
  %v2339 = vunpack.c.h.b16 %v2259
  %v2340 = vunpack.c.l.b16 %v2260
  %v2341 = vunpack.c.h.b16 %v2260
  %v2342 = vunpack.c.l.b16 %v2261
  %v2343 = vunpack.c.h.b16 %v2261
  %v2344 = vunpack.c.l.b16 %v2262
  %v2345 = vunpack.c.h.b16 %v2262
  %v2346 = vunpack.c.l.b16 %v2263
  %v2347 = vunpack.c.h.b16 %v2263
  %v2348 = vunpack.c.l.b16 %v2264
  %v2349 = vunpack.c.h.b16 %v2264
  %v2350 = vunpack.c.l.b16 %v2265
  %v2351 = vunpack.c.h.b16 %v2265
  %v2352 = vunpack.c.l.b16 %v2266
  %v2353 = vunpack.c.h.b16 %v2266
  %v2354 = vunpack.c.l.b16 %v2267
  %v2355 = vunpack.c.h.b16 %v2267
  %v2356 = vunpack.c.l.b16 %v2268
  %v2357 = vunpack.c.h.b16 %v2268
  %v2358 = vunpack.c.l.b16 %v2269
  %v2359 = vunpack.c.h.b16 %v2269
  %v2360 = vunpack.c.l.b16 %v2270
  %v2361 = vunpack.c.h.b16 %v2270
  %v2362 = vunpack.c.l.b16 %v2271
  %v2363 = vunpack.c.h.b16 %v2271
  %v2364 = vunpack.c.l.b16 %v2272
  %v2365 = vunpack.c.h.b16 %v2272
  %v2366 = vunpack.c.l.b16 %v2273
  %v2367 = vunpack.c.h.b16 %v2273
  %v2368 = vunpack.c.l.b16 %v2274
  %v2369 = vunpack.c.h.b16 %v2274
  %v2370 = vunpack.c.l.b16 %v2275
  %v2371 = vunpack.c.h.b16 %v2275
  %v2372 = vpack.c.b16 %v2312, %v2308
  %v2373 = vpack.c.b16 %v2313, %v2309
  %v2374 = vpack.c.b16 %v2314, %v2310
  %v2375 = vpack.c.b16 %v2315, %v2311
  %v2376 = vpack.c.b16 %v2320, %v2316
  %v2377 = vpack.c.b16 %v2321, %v2317
  %v2378 = vpack.c.b16 %v2322, %v2318
  %v2379 = vpack.c.b16 %v2323, %v2319
  %v2380 = vpack.c.b16 %v2328, %v2324
  %v2381 = vpack.c.b16 %v2329, %v2325
  %v2382 = vpack.c.b16 %v2330, %v2326
  %v2383 = vpack.c.b16 %v2331, %v2327
  %v2384 = vpack.c.b16 %v2336, %v2332
  %v2385 = vpack.c.b16 %v2337, %v2333
  %v2386 = vpack.c.b16 %v2338, %v2334
  %v2387 = vpack.c.b16 %v2339, %v2335
  %v2388 = vpack.c.b16 %v2344, %v2340
  %v2389 = vpack.c.b16 %v2345, %v2341
  %v2390 = vpack.c.b16 %v2346, %v2342
  %v2391 = vpack.c.b16 %v2347, %v2343
  %v2392 = vpack.c.b16 %v2352, %v2348
  %v2393 = vpack.c.b16 %v2353, %v2349
  %v2394 = vpack.c.b16 %v2354, %v2350
  %v2395 = vpack.c.b16 %v2355, %v2351
  %v2396 = vpack.c.b16 %v2360, %v2356
  %v2397 = vpack.c.b16 %v2361, %v2357
  %v2398 = vpack.c.b16 %v2362, %v2358
  %v2399 = vpack.c.b16 %v2363, %v2359
  %v2400 = vpack.c.b16 %v2368, %v2364
  %v2401 = vpack.c.b16 %v2369, %v2365
  %v2402 = vpack.c.b16 %v2370, %v2366
  %v2403 = vpack.c.b16 %v2371, %v2367
  %2436 = vmatprep.subr.bf16.mxu0 %v2373
  %2437 = vmatpush1.bf16.msra.mxu0 %v2372
  %2438 = vmatprep.subr.bf16.mxu0 %v2377
  %2439 = vmatpush1.bf16.msra.mxu0 %v2376
  %2440 = vmatprep.subr.bf16.mxu0 %v2381
  %2441 = vmatpush1.bf16.msra.mxu0 %v2380
  %2442 = vmatprep.subr.bf16.mxu0 %v2385
  %2443 = vmatpush1.bf16.msra.mxu0 %v2384
  %2444 = vmatprep.subr.bf16.mxu0 %v2389
  %2445 = vmatpush1.bf16.msra.mxu0 %v2388
  %2446 = vmatprep.subr.bf16.mxu0 %v2393
  %2447 = vmatpush1.bf16.msra.mxu0 %v2392
  %2448 = vmatprep.subr.bf16.mxu0 %v2397
  %2449 = vmatpush1.bf16.msra.mxu0 %v2396
  %2450 = vmatprep.subr.bf16.mxu0 %v2401
  %2451 = vmatpush1.bf16.msra.mxu0 %v2400
  %2452 = vmatprep.subr.bf16.mxu0 0
  %2453 = vmatpush1.bf16.msra.mxu0 0
  %2454 = vmatprep.subr.bf16.mxu0 0
  %2455 = vmatpush1.bf16.msra.mxu0 0
  %2456 = vmatprep.subr.bf16.mxu0 0
  %2457 = vmatpush1.bf16.msra.mxu0 0
  %2458 = vmatprep.subr.bf16.mxu0 0
  %2459 = vmatpush1.bf16.msra.mxu0 0
  %2460 = vmatprep.subr.bf16.mxu0 0
  %2461 = vmatpush1.bf16.msra.mxu0 0
  %2462 = vmatprep.subr.bf16.mxu0 0
  %2463 = vmatpush1.bf16.msra.mxu0 0
  %2464 = vmatprep.subr.bf16.mxu0 0
  %2465 = vmatpush1.bf16.msra.mxu0 0
  %2466 = vmatprep.subr.bf16.mxu0 0
  %2467 = vmatpush1.bf16.msra.mxu0 0
  %2468 = vmatprep.mubr.bf16.mxu0 0
  %2469 = vmatmul.mubr.bf16.gmra.mrb[0].mxu0 %v2243
  %v2470 = vpop.f32.mrb[0].mxu0
  %v2471 = vadd.f32 0.0, %v2470
  %v2472 = vpop.f32.mrb[0].mxu0
  %v2473 = vadd.f32 0.0, %v2472
  %v2474 = vpop.f32.mrb[0].mxu0
  %v2475 = vpop.f32.mrb[0].mxu0
  %2476 = vdwg.mxu0
  %2477 = vmatprep.subr.bf16.mxu0 %v2375
  %2478 = vmatpush1.bf16.msra.mxu0 %v2374
  %2479 = vmatprep.subr.bf16.mxu0 %v2379
  %2480 = vmatpush1.bf16.msra.mxu0 %v2378
  %2481 = vmatprep.subr.bf16.mxu0 %v2383
  %2482 = vmatpush1.bf16.msra.mxu0 %v2382
  %2483 = vmatprep.subr.bf16.mxu0 %v2387
  %2484 = vmatpush1.bf16.msra.mxu0 %v2386
  %2485 = vmatprep.subr.bf16.mxu0 %v2391
  %2486 = vmatpush1.bf16.msra.mxu0 %v2390
  %2487 = vmatprep.subr.bf16.mxu0 %v2395
  %2488 = vmatpush1.bf16.msra.mxu0 %v2394
  %2489 = vmatprep.subr.bf16.mxu0 %v2399
  %2490 = vmatpush1.bf16.msra.mxu0 %v2398
  %2491 = vmatprep.subr.bf16.mxu0 %v2403
  %2492 = vmatpush1.bf16.msra.mxu0 %v2402
  %2493 = vmatprep.subr.bf16.mxu0 0
  %2494 = vmatpush1.bf16.msra.mxu0 0
  %2495 = vmatprep.subr.bf16.mxu0 0
  %2496 = vmatpush1.bf16.msra.mxu0 0
  %2497 = vmatprep.subr.bf16.mxu0 0
  %2498 = vmatpush1.bf16.msra.mxu0 0
  %2499 = vmatprep.subr.bf16.mxu0 0
  %2500 = vmatpush1.bf16.msra.mxu0 0
  %2501 = vmatprep.subr.bf16.mxu0 0
  %2502 = vmatpush1.bf16.msra.mxu0 0
  %2503 = vmatprep.subr.bf16.mxu0 0
  %2504 = vmatpush1.bf16.msra.mxu0 0
  %2505 = vmatprep.subr.bf16.mxu0 0
  %2506 = vmatpush1.bf16.msra.mxu0 0
  %2507 = vmatprep.subr.bf16.mxu0 0
  %2508 = vmatpush1.bf16.msra.mxu0 0
  %2509 = vmatprep.mubr.bf16.mxu0 0
  %2510 = vmatmul.mubr.bf16.gmra.mrb[0].mxu0 %v2243
  %v2511 = vpop.f32.mrb[0].mxu0
  %v2512 = vadd.f32 0.0, %v2511
  %v2513 = vpop.f32.mrb[0].mxu0
  %v2514 = vadd.f32 0.0, %v2513
  %v2515 = vpop.f32.mrb[0].mxu0
  %v2516 = vpop.f32.mrb[0].mxu0
  %2517 = vdwg.mxu0
  %v2518 = vadd.f32 %v2239, %v2471
  %v2519 = vadd.f32 %v2240, %v2473
  %v2520 = vadd.f32 %v2241, %v2512
  %v2521 = vadd.f32 %v2242, %v2514
  %v2522 = vxor.u32 %v2518, 2147483648
  %v2523 = vmul.f32 %v2522, 1.442695
  %v2524 = vpow.pop %v2523
  %v2525 = vadd.f32 %v2524, 1.0
  %v2526 = vrcp.pop %v2525
  %v2527 = vmul.f32 1.0, %v2526
  %v2528 = vxor.u32 %v2519, 2147483648
  %v2529 = vmul.f32 %v2528, 1.442695
  %v2530 = vpow.pop %v2529
  %v2531 = vadd.f32 %v2530, 1.0
  %v2532 = vrcp.pop %v2531
  %v2533 = vmul.f32 1.0, %v2532
  %v2534 = vtanh.pop %v2520
  %v2535 = vxor.u32 %v2521, 2147483648
  %v2536 = vmul.f32 %v2535, 1.442695
  %v2537 = vpow.pop %v2536
  %v2538 = vadd.f32 %v2537, 1.0
  %v2539 = vrcp.pop %v2538
  %v2540 = vmul.f32 1.0, %v2539
  %v2541 = vld [vmem:[#allocation3] sm:$0xff]
  %v2542 = vmul.f32 %v2533, %v2541
  %v2543 = vmul.f32 %v2527, %v2534
  %v2544 = vadd.f32 %v2542, %v2543
  %v2545 = vtanh.pop %v2544
  %v2546 = vmul.f32 %v2540, %v2545
  %2547 = vst [vmem:[#allocation3] sm:$0xff] %v2544
  %2548 = vst [vmem:[#allocation2] sm:$0xff] %v2546
  %v2549 = vpack.c.bf16 %v2546, %v2546
  %s2550 = scalar_lea.vmem %s2, 28
  %2551 = vst [vmem:[%s2550] sm:$0xf] %v2549
  // Predicated region
  $region14: #{_dense_forward_impl.4} parent=0 // pred_check
    _
  $region15: #{_dense_forward_impl.4} parent=0 // pred_check_branch
    %2553 = sbr.rel (0) target = $region17
  $region16: #{_dense_forward_impl.4} parent=0 // pred_region
    _
  $region17: #{_dense_forward_impl.4} parent=0 // pred_fallthru
    _
  // Predicated region
  $region18: #{_dense_forward_impl.4} parent=0 // pred_check
    _
  $region19: #{_dense_forward_impl.4} parent=0 // pred_check_branch
    %2555 = sbr.rel (0) target = $region21
  $region20: #{_dense_forward_impl.4} parent=0 // pred_region
    _
  $region21: #{_dense_forward_impl.4} parent=0 // pred_fallthru
    _

</llo_original>
